<compile_context>
chip_gen: v6e
topology: v6e:2x2x1
jax: 0.10.0
libtpu: 0.0.40
codegen_flags: <defaults>
</compile_context>

<pallas_src>
import functools
import math

import jax
import jax.numpy as jnp
from jax.experimental import pallas as pl
from jax.experimental.pallas import tpu as pltpu


# ------------------------------- fused kernel ------------------------------- #

def _fused_esa_kernel(x_ref, rw_ref, qw_ref, pw_ref, pb_ref, o_ref, attn_ref, *,
                      num_heads, seg):
    """One row-block: reduce -> qkv -> block-local attention -> proj, all in VMEM."""
    f32 = jnp.float32
    x = x_ref[...]                                   # (R, dim)  bf16
    rw = rw_ref[...]                                 # (dim, C)  bf16
    qw = qw_ref[...]                                 # (C, 3C)   bf16, q cols pre-scaled
    w_dtype = rw.dtype

    # reduce (bias=False) and W_qkv (bias=False): bf16 MXU, f32 accumulation.
    xr = jnp.dot(x, rw, preferred_element_type=f32)                     # (R, C)
    qkv = jnp.dot(xr.astype(w_dtype), qw, preferred_element_type=f32)   # (R, 3C)

    R = x.shape[0]
    C = rw.shape[1]
    d = C // num_heads
    nseg = R // seg

    # qkv column layout (PyTorch reshape(B,N,3,H,d)):
    #   [ q_h0 .. q_h{H-1} | k_h0 .. k_h{H-1} | v_h0 .. v_h{H-1} ], each d wide.
    # TODO(synk): batch heads into one two-batch-dim einsum once Mosaic dot_general
    # supports it; until then the head loop is a static unroll.
    for h in range(num_heads):
        qh = qkv[:, h * d:(h + 1) * d].reshape(nseg, seg, d).astype(w_dtype)
        kh = qkv[:, C + h * d:C + (h + 1) * d].reshape(nseg, seg, d).astype(w_dtype)
        vh = qkv[:, 2 * C + h * d:2 * C + (h + 1) * d].reshape(nseg, seg, d).astype(w_dtype)
        # Block-local scores; qk scale already folded into the q columns of W_qkv.
        s = jnp.einsum("bqd,bkd->bqk", qh, kh,
                       preferred_element_type=f32)          # (nseg, seg, seg) f32
        m = jnp.max(s, axis=-1, keepdims=True)
        p = jnp.exp(s - m)                                  # un-normalised probs
        denom = jnp.sum(p, axis=-1, keepdims=True)          # (nseg, seg, 1)
        oh = jnp.einsum("bqk,bkd->bqd", p.astype(w_dtype), vh,
                        preferred_element_type=f32)         # (nseg, seg, d)
        # Normalise AFTER the PV matmul (d-wide, not seg-wide); reciprocal on EUP.
        oh = oh * pl.reciprocal(denom, approx=True)
        # Head-major lane slot h*d:(h+1)*d == the module's transpose+cat layout.
        attn_ref[:, h * d:(h + 1) * d] = oh.reshape(R, d).astype(w_dtype)

    # proj (bias=True); bias added in f32 after accumulation.
    out = jnp.dot(attn_ref[...], pw_ref[...], preferred_element_type=f32) + pb_ref[...]
    # TODO(synk): for dim < 128 (as in the demo) this is a masked (vst.msk) store;
    # production dims should be multiples of 128 for a lane-dense writeback.
    o_ref[...] = out.astype(o_ref.dtype)


# ------------------------------ module forward ------------------------------ #

def efficient_self_attention(x, params, *, num_heads, split_segment,
                             max_block_rows=1024, mxu_dtype=jnp.bfloat16,
                             vmem_budget_bytes=48 * 2**20):
    B, N, dim = x.shape
    assert dim % 2 == 0
    C = dim // 2
    assert C % num_heads == 0
    scale = (dim // num_heads) ** (-0.5)     # PyTorch uses the pre-reduce head dim

    # Faithful to the module: math.ceil(N // s) == N // s for ints.
    seg = math.ceil(N // split_segment)
    # TODO(synk): ragged last segment (N % seg != 0) needs masking; not needed here.
    assert N % seg == 0, "N must split into equal segments"
    assert seg % 8 == 0 or seg == N, "segment rows should be sublane aligned"

    rows = B * N
    sublane = 16 if mxu_dtype == jnp.bfloat16 else 8
    bpe = jnp.dtype(mxu_dtype).itemsize

    # Resident weights (implicitly double-buffered by the pipeline) + per-tile set.
    w_bytes = (dim * C + C * 3 * C + C * dim) * bpe + dim * 4

    def tile_bytes(R):
        nseg = R // seg
        return (2 * R * dim * bpe            # x tile, double buffered
                + 2 * R * dim * 4            # out tile (f32), double buffered
                + R * C * bpe                # attn scratch
                + R * C * 4 + R * 3 * C * 4  # xr / qkv intermediates (f32)
                + 2 * nseg * seg * seg * 4)  # score / prob block (f32)

    # Largest R = k*seg that divides rows, respects the cap, keeps block sublane
    # alignment, and fits the VMEM budget next to the (double-buffered) weights.
    # R | rows and seg | N guarantee tiles hold whole segments within one batch.
    R = seg
    n_segs_total = rows // seg
    for k in range(n_segs_total, 0, -1):
        if n_segs_total % k:
            continue
        cand = k * seg
        if cand > max(max_block_rows, seg):
            continue
        if cand != rows and cand % sublane:
            continue
        if cand > seg and 2 * w_bytes + tile_bytes(cand) > vmem_budget_bytes:
            continue
        R = cand
        break
    assert R == rows or R % sublane == 0, "row tile must be sublane aligned"
    grid = (rows // R,)

    vmem_limit = int(min(64 * 2**20,
                         max(32 * 2**20, 2 * w_bytes + tile_bytes(R) + (8 << 20))))

    # Fold the qk scale into the q columns of W_qkv (free at runtime), then cast
    # the whole MXU path to bf16. Bias stays f32 (added post-accumulation).
    qkv_w = params["qkv_w"]
    qkv_w = jnp.concatenate([qkv_w[:, :C] * scale, qkv_w[:, C:]], axis=1)
    x_rows = x.reshape(rows, dim).astype(mxu_dtype)
    reduce_w = params["reduce_w"].astype(mxu_dtype)
    qkv_w = qkv_w.astype(mxu_dtype)
    proj_w = params["proj_w"].astype(mxu_dtype)
    proj_b = params["proj_b"].reshape(1, dim).astype(jnp.float32)

    mm_flops = 2 * rows * (dim * C + C * 3 * C + C * dim)
    attn_flops = 4 * rows * seg * C
    cost = pl.CostEstimate(
        flops=int(mm_flops + attn_flops),
        transcendentals=int(rows * seg * num_heads),
        bytes_accessed=int(rows * dim * (bpe + 4) + grid[0] * w_bytes),
    )

    kernel = functools.partial(_fused_esa_kernel, num_heads=num_heads, seg=seg)

    out = pl.pallas_call(
        kernel,
        out_shape=jax.ShapeDtypeStruct((rows, dim), x.dtype),
        grid=grid,
        in_specs=[
            pl.BlockSpec((R, dim), lambda r: (r, 0)),       # x row block
            pl.BlockSpec((dim, C), lambda r: (0, 0)),       # reduce W (resident)
            pl.BlockSpec((C, 3 * C), lambda r: (0, 0)),     # qkv W   (resident, pre-scaled)
            pl.BlockSpec((C, dim), lambda r: (0, 0)),       # proj W  (resident)
            pl.BlockSpec((1, dim), lambda r: (0, 0)),       # proj bias (f32)
        ],
        out_specs=pl.BlockSpec((R, dim), lambda r: (r, 0)),
        scratch_shapes=[pltpu.VMEM((R, C), mxu_dtype)],     # head-output staging
        compiler_params=pltpu.CompilerParams(
            dimension_semantics=("parallel",),
            vmem_limit_bytes=vmem_limit),
        cost_estimate=cost,
    )(x_rows, reduce_w, qkv_w, proj_w, proj_b)

    return out.reshape(B, N, dim)


# ------------------------------ pure-JAX reference -------------------------- #

def reference(x, params, *, num_heads, split_segment):
    B, N, dim = x.shape
    C = dim // 2
    d = C // num_heads
    scale = (dim // num_heads) ** (-0.5)
    xr = x @ params["reduce_w"]
    qkv = (xr @ params["qkv_w"]).reshape(B, N, 3, num_heads, d).transpose(2, 0, 3, 1, 4)
    q, k, v = qkv[0], qkv[1], qkv[2]
    seg = math.ceil(N // split_segment)
    outs = []
    for i in range(N // seg):
        qs = q[:, :, i * seg:(i + 1) * seg]
        ks = k[:, :, i * seg:(i + 1) * seg]
        vs = v[:, :, i * seg:(i + 1) * seg]
        a = jnp.einsum("bhqd,bhkd->bhqk", qs, ks) * scale
        a = jax.nn.softmax(a, axis=-1)
        o = jnp.einsum("bhqk,bhkd->bhqd", a, vs)
        outs.append(o.transpose(0, 2, 1, 3))
    out = jnp.concatenate(outs, axis=1).reshape(B, N, C)
    return out @ params["proj_w"] + params["proj_b"]


# ----------------------------------- main ----------------------------------- #

if __name__ == "__main__":
    B, N, dim = 2, 32, 64
    num_heads = 4
    split_segment = 4
    C = dim // 2

    key = jax.random.PRNGKey(0)
    kx, kr, kq, kp, kb = jax.random.split(key, 5)

    x = jax.random.normal(kx, (B, N, dim), dtype=jnp.float32)

    params = {
        # reduce: Linear(dim, dim//2, bias=False)
        "reduce_w": 0.05 * jax.random.normal(kr, (dim, C), dtype=jnp.float32),
        # W_qkv: Linear(dim//2, 3*dim//2, bias=False)
        "qkv_w": 0.05 * jax.random.normal(kq, (C, 3 * C), dtype=jnp.float32),
        # proj: Linear(dim//2, dim)  (bias=True, nn.Linear default)
        "proj_w": 0.05 * jax.random.normal(kp, (C, dim), dtype=jnp.float32),
        "proj_b": 0.05 * jax.random.normal(kb, (dim,), dtype=jnp.float32),
    }

    out = jax.block_until_ready(
        efficient_self_attention(x, params, num_heads=num_heads,
                                 split_segment=split_segment))
    ref = jax.block_until_ready(
        reference(x, params, num_heads=num_heads, split_segment=split_segment))

    assert out.shape == (B, N, dim)
    assert bool(jnp.all(jnp.isfinite(out)))
    max_err = float(jnp.max(jnp.abs(out - ref)))
    # bf16 MXU inputs + approx EUP reciprocal => slightly looser tolerance than f32.
    assert jnp.allclose(out, ref, atol=1e-2, rtol=5e-2), max_err
    print("KERNEL_OK")
</pallas_src>

<mosaic_0001>
module attributes {stable_mosaic.version = 11 : i64} {
  func.func @_fused_esa_kernel(%arg0: i32, %arg1: memref<64x64xbf16, #tpu.memory_space<vmem>>, %arg2: memref<64x32xbf16, #tpu.memory_space<vmem>>, %arg3: memref<32x96xbf16, #tpu.memory_space<vmem>>, %arg4: memref<32x64xbf16, #tpu.memory_space<vmem>>, %arg5: memref<1x64xf32, #tpu.memory_space<vmem>>, %arg6: memref<64x64xf32, #tpu.memory_space<vmem>>, %arg7: memref<64x32xbf16, #tpu.memory_space<vmem>>) attributes {dimension_semantics = [#tpu.dimension_semantics<parallel>], iteration_bounds = array<i64: 1>, scalar_prefetch = 0 : i64, scratch_operands = 1 : i64, tpu.core_type = #tpu.core_type<tc>, window_params = [{transform_indices = @transform_0, window_bounds = array<i64: 64, 64>}, {pipeline_mode = #tpu.pipeline_mode<synchronous>, transform_indices = @transform_1, window_bounds = array<i64: 64, 32>}, {pipeline_mode = #tpu.pipeline_mode<synchronous>, transform_indices = @transform_2, window_bounds = array<i64: 32, 96>}, {pipeline_mode = #tpu.pipeline_mode<synchronous>, transform_indices = @transform_3, window_bounds = array<i64: 32, 64>}, {pipeline_mode = #tpu.pipeline_mode<synchronous>, transform_indices = @transform_4, window_bounds = array<i64: 1, 64>}, {transform_indices = @transform_5, window_bounds = array<i64: 64, 64>}]} {
    %c0 = arith.constant 0 : index
    %c0_0 = arith.constant 0 : index
    %0 = vector.load %arg1[%c0, %c0_0] : memref<64x64xbf16, #tpu.memory_space<vmem>>, vector<64x64xbf16>
    %c0_1 = arith.constant 0 : index
    %c0_2 = arith.constant 0 : index
    %1 = vector.load %arg2[%c0_1, %c0_2] : memref<64x32xbf16, #tpu.memory_space<vmem>>, vector<64x32xbf16>
    %c0_3 = arith.constant 0 : index
    %c0_4 = arith.constant 0 : index
    %2 = vector.load %arg3[%c0_3, %c0_4] : memref<32x96xbf16, #tpu.memory_space<vmem>>, vector<32x96xbf16>
    %cst = arith.constant dense<0.000000e+00> : vector<64x32xf32>
    %3 = tpu.matmul %0, %1, %cst {dimension_numbers = #tpu.dot_dimension_numbers<[1], [0], [0], [1], [0, 0, 1, 1], [], []>} : vector<64x64xbf16>, vector<64x32xbf16>, vector<64x32xf32> -> vector<64x32xf32>
    %4 = arith.truncf %3 : vector<64x32xf32> to vector<64x32xbf16>
    %cst_5 = arith.constant dense<0.000000e+00> : vector<64x96xf32>
    %5 = tpu.matmul %4, %2, %cst_5 {dimension_numbers = #tpu.dot_dimension_numbers<[1], [0], [0], [1], [0, 0, 1, 1], [], []>} : vector<64x32xbf16>, vector<32x96xbf16>, vector<64x96xf32> -> vector<64x96xf32>
    %6 = vector.extract_strided_slice %5 {offsets = [0, 0], sizes = [64, 8], strides = [1, 1]} : vector<64x96xf32> to vector<64x8xf32>
    %7 = vector.shape_cast %6 : vector<64x8xf32> to vector<8x8x8xf32>
    %8 = arith.truncf %7 : vector<8x8x8xf32> to vector<8x8x8xbf16>
    %9 = vector.extract_strided_slice %5 {offsets = [0, 32], sizes = [64, 8], strides = [1, 1]} : vector<64x96xf32> to vector<64x8xf32>
    %10 = vector.shape_cast %9 : vector<64x8xf32> to vector<8x8x8xf32>
    %11 = arith.truncf %10 : vector<8x8x8xf32> to vector<8x8x8xbf16>
    %12 = vector.extract_strided_slice %5 {offsets = [0, 64], sizes = [64, 8], strides = [1, 1]} : vector<64x96xf32> to vector<64x8xf32>
    %13 = vector.shape_cast %12 : vector<64x8xf32> to vector<8x8x8xf32>
    %14 = arith.truncf %13 : vector<8x8x8xf32> to vector<8x8x8xbf16>
    "tpu.trace_start"() <{level = 10 : i32, message = "bqd,bkd->bqk"}> : () -> ()
    %cst_6 = arith.constant dense<0.000000e+00> : vector<8x8x8xf32>
    %15 = tpu.matmul %8, %11, %cst_6 {dimension_numbers = #tpu.dot_dimension_numbers<[2], [2], [1], [1], [0, 0, 0, 1, 1, 1], [0], [0]>} : vector<8x8x8xbf16>, vector<8x8x8xbf16>, vector<8x8x8xf32> -> vector<8x8x8xf32>
    "tpu.trace_stop"() : () -> ()
    %cst_7 = arith.constant dense<0xFF800000> : vector<8x8xf32>
    %16 = vector.multi_reduction <maximumf>, %15, %cst_7 [2] : vector<8x8x8xf32> to vector<8x8xf32>
    %17 = vector.shape_cast %16 : vector<8x8xf32> to vector<8x8x1xf32>
    %18 = vector.broadcast %17 : vector<8x8x1xf32> to vector<8x8x8xf32>
    %19 = arith.subf %15, %18 : vector<8x8x8xf32>
    %20 = math.exp %19 : vector<8x8x8xf32>
    %cst_8 = arith.constant dense<0.000000e+00> : vector<8x8xf32>
    %21 = vector.multi_reduction <add>, %20, %cst_8 [2] : vector<8x8x8xf32> to vector<8x8xf32>
    %22 = vector.shape_cast %21 : vector<8x8xf32> to vector<8x8x1xf32>
    %23 = arith.truncf %20 : vector<8x8x8xf32> to vector<8x8x8xbf16>
    "tpu.trace_start"() <{level = 10 : i32, message = "bqk,bkd->bqd"}> : () -> ()
    %cst_9 = arith.constant dense<0.000000e+00> : vector<8x8x8xf32>
    %24 = tpu.matmul %23, %14, %cst_9 {dimension_numbers = #tpu.dot_dimension_numbers<[2], [1], [1], [2], [0, 0, 0, 1, 1, 2], [0], [0]>} : vector<8x8x8xbf16>, vector<8x8x8xbf16>, vector<8x8x8xf32> -> vector<8x8x8xf32>
    "tpu.trace_stop"() : () -> ()
    %25 = tpu.reciprocal %22 {approx = true} : vector<8x8x1xf32> -> vector<8x8x1xf32>
    %26 = vector.broadcast %25 : vector<8x8x1xf32> to vector<8x8x8xf32>
    %27 = arith.mulf %24, %26 : vector<8x8x8xf32>
    %28 = vector.shape_cast %27 : vector<8x8x8xf32> to vector<64x8xf32>
    %29 = arith.truncf %28 : vector<64x8xf32> to vector<64x8xbf16>
    %c0_10 = arith.constant 0 : index
    %c0_11 = arith.constant 0 : index
    %30 = vector.load %arg7[%c0_10, %c0_11] : memref<64x32xbf16, #tpu.memory_space<vmem>>, vector<64x8xbf16>
    tpu.vector_store %arg7[%c0_10, %c0_11], %29 {strides = array<i32>} : memref<64x32xbf16, #tpu.memory_space<vmem>>, vector<64x8xbf16>,
    %31 = vector.extract_strided_slice %5 {offsets = [0, 8], sizes = [64, 8], strides = [1, 1]} : vector<64x96xf32> to vector<64x8xf32>
    %32 = vector.shape_cast %31 : vector<64x8xf32> to vector<8x8x8xf32>
    %33 = arith.truncf %32 : vector<8x8x8xf32> to vector<8x8x8xbf16>
    %34 = vector.extract_strided_slice %5 {offsets = [0, 40], sizes = [64, 8], strides = [1, 1]} : vector<64x96xf32> to vector<64x8xf32>
    %35 = vector.shape_cast %34 : vector<64x8xf32> to vector<8x8x8xf32>
    %36 = arith.truncf %35 : vector<8x8x8xf32> to vector<8x8x8xbf16>
    %37 = vector.extract_strided_slice %5 {offsets = [0, 72], sizes = [64, 8], strides = [1, 1]} : vector<64x96xf32> to vector<64x8xf32>
    %38 = vector.shape_cast %37 : vector<64x8xf32> to vector<8x8x8xf32>
    %39 = arith.truncf %38 : vector<8x8x8xf32> to vector<8x8x8xbf16>
    "tpu.trace_start"() <{level = 10 : i32, message = "bqd,bkd->bqk"}> : () -> ()
    %cst_12 = arith.constant dense<0.000000e+00> : vector<8x8x8xf32>
    %40 = tpu.matmul %33, %36, %cst_12 {dimension_numbers = #tpu.dot_dimension_numbers<[2], [2], [1], [1], [0, 0, 0, 1, 1, 1], [0], [0]>} : vector<8x8x8xbf16>, vector<8x8x8xbf16>, vector<8x8x8xf32> -> vector<8x8x8xf32>
    "tpu.trace_stop"() : () -> ()
    %cst_13 = arith.constant dense<0xFF800000> : vector<8x8xf32>
    %41 = vector.multi_reduction <maximumf>, %40, %cst_13 [2] : vector<8x8x8xf32> to vector<8x8xf32>
    %42 = vector.shape_cast %41 : vector<8x8xf32> to vector<8x8x1xf32>
    %43 = vector.broadcast %42 : vector<8x8x1xf32> to vector<8x8x8xf32>
    %44 = arith.subf %40, %43 : vector<8x8x8xf32>
    %45 = math.exp %44 : vector<8x8x8xf32>
    %cst_14 = arith.constant dense<0.000000e+00> : vector<8x8xf32>
    %46 = vector.multi_reduction <add>, %45, %cst_14 [2] : vector<8x8x8xf32> to vector<8x8xf32>
    %47 = vector.shape_cast %46 : vector<8x8xf32> to vector<8x8x1xf32>
    %48 = arith.truncf %45 : vector<8x8x8xf32> to vector<8x8x8xbf16>
    "tpu.trace_start"() <{level = 10 : i32, message = "bqk,bkd->bqd"}> : () -> ()
    %cst_15 = arith.constant dense<0.000000e+00> : vector<8x8x8xf32>
    %49 = tpu.matmul %48, %39, %cst_15 {dimension_numbers = #tpu.dot_dimension_numbers<[2], [1], [1], [2], [0, 0, 0, 1, 1, 2], [0], [0]>} : vector<8x8x8xbf16>, vector<8x8x8xbf16>, vector<8x8x8xf32> -> vector<8x8x8xf32>
    "tpu.trace_stop"() : () -> ()
    %50 = tpu.reciprocal %47 {approx = true} : vector<8x8x1xf32> -> vector<8x8x1xf32>
    %51 = vector.broadcast %50 : vector<8x8x1xf32> to vector<8x8x8xf32>
    %52 = arith.mulf %49, %51 : vector<8x8x8xf32>
    %53 = vector.shape_cast %52 : vector<8x8x8xf32> to vector<64x8xf32>
    %54 = arith.truncf %53 : vector<64x8xf32> to vector<64x8xbf16>
    %c0_16 = arith.constant 0 : index
    %c8 = arith.constant 8 : index
    %55 = vector.load %arg7[%c0_16, %c8] : memref<64x32xbf16, #tpu.memory_space<vmem>>, vector<64x8xbf16>
    tpu.vector_store %arg7[%c0_16, %c8], %54 {strides = array<i32>} : memref<64x32xbf16, #tpu.memory_space<vmem>>, vector<64x8xbf16>,
    %56 = vector.extract_strided_slice %5 {offsets = [0, 16], sizes = [64, 8], strides = [1, 1]} : vector<64x96xf32> to vector<64x8xf32>
    %57 = vector.shape_cast %56 : vector<64x8xf32> to vector<8x8x8xf32>
    %58 = arith.truncf %57 : vector<8x8x8xf32> to vector<8x8x8xbf16>
    %59 = vector.extract_strided_slice %5 {offsets = [0, 48], sizes = [64, 8], strides = [1, 1]} : vector<64x96xf32> to vector<64x8xf32>
    %60 = vector.shape_cast %59 : vector<64x8xf32> to vector<8x8x8xf32>
    %61 = arith.truncf %60 : vector<8x8x8xf32> to vector<8x8x8xbf16>
    %62 = vector.extract_strided_slice %5 {offsets = [0, 80], sizes = [64, 8], strides = [1, 1]} : vector<64x96xf32> to vector<64x8xf32>
    %63 = vector.shape_cast %62 : vector<64x8xf32> to vector<8x8x8xf32>
    %64 = arith.truncf %63 : vector<8x8x8xf32> to vector<8x8x8xbf16>
    "tpu.trace_start"() <{level = 10 : i32, message = "bqd,bkd->bqk"}> : () -> ()
    %cst_17 = arith.constant dense<0.000000e+00> : vector<8x8x8xf32>
    %65 = tpu.matmul %58, %61, %cst_17 {dimension_numbers = #tpu.dot_dimension_numbers<[2], [2], [1], [1], [0, 0, 0, 1, 1, 1], [0], [0]>} : vector<8x8x8xbf16>, vector<8x8x8xbf16>, vector<8x8x8xf32> -> vector<8x8x8xf32>
    "tpu.trace_stop"() : () -> ()
    %cst_18 = arith.constant dense<0xFF800000> : vector<8x8xf32>
    %66 = vector.multi_reduction <maximumf>, %65, %cst_18 [2] : vector<8x8x8xf32> to vector<8x8xf32>
    %67 = vector.shape_cast %66 : vector<8x8xf32> to vector<8x8x1xf32>
    %68 = vector.broadcast %67 : vector<8x8x1xf32> to vector<8x8x8xf32>
    %69 = arith.subf %65, %68 : vector<8x8x8xf32>
    %70 = math.exp %69 : vector<8x8x8xf32>
    %cst_19 = arith.constant dense<0.000000e+00> : vector<8x8xf32>
    %71 = vector.multi_reduction <add>, %70, %cst_19 [2] : vector<8x8x8xf32> to vector<8x8xf32>
    %72 = vector.shape_cast %71 : vector<8x8xf32> to vector<8x8x1xf32>
    %73 = arith.truncf %70 : vector<8x8x8xf32> to vector<8x8x8xbf16>
    "tpu.trace_start"() <{level = 10 : i32, message = "bqk,bkd->bqd"}> : () -> ()
    %cst_20 = arith.constant dense<0.000000e+00> : vector<8x8x8xf32>
    %74 = tpu.matmul %73, %64, %cst_20 {dimension_numbers = #tpu.dot_dimension_numbers<[2], [1], [1], [2], [0, 0, 0, 1, 1, 2], [0], [0]>} : vector<8x8x8xbf16>, vector<8x8x8xbf16>, vector<8x8x8xf32> -> vector<8x8x8xf32>
    "tpu.trace_stop"() : () -> ()
    %75 = tpu.reciprocal %72 {approx = true} : vector<8x8x1xf32> -> vector<8x8x1xf32>
    %76 = vector.broadcast %75 : vector<8x8x1xf32> to vector<8x8x8xf32>
    %77 = arith.mulf %74, %76 : vector<8x8x8xf32>
    %78 = vector.shape_cast %77 : vector<8x8x8xf32> to vector<64x8xf32>
    %79 = arith.truncf %78 : vector<64x8xf32> to vector<64x8xbf16>
    %c0_21 = arith.constant 0 : index
    %c16 = arith.constant 16 : index
    %80 = vector.load %arg7[%c0_21, %c16] : memref<64x32xbf16, #tpu.memory_space<vmem>>, vector<64x8xbf16>
    tpu.vector_store %arg7[%c0_21, %c16], %79 {strides = array<i32>} : memref<64x32xbf16, #tpu.memory_space<vmem>>, vector<64x8xbf16>,
    %81 = vector.extract_strided_slice %5 {offsets = [0, 24], sizes = [64, 8], strides = [1, 1]} : vector<64x96xf32> to vector<64x8xf32>
    %82 = vector.shape_cast %81 : vector<64x8xf32> to vector<8x8x8xf32>
    %83 = arith.truncf %82 : vector<8x8x8xf32> to vector<8x8x8xbf16>
    %84 = vector.extract_strided_slice %5 {offsets = [0, 56], sizes = [64, 8], strides = [1, 1]} : vector<64x96xf32> to vector<64x8xf32>
    %85 = vector.shape_cast %84 : vector<64x8xf32> to vector<8x8x8xf32>
    %86 = arith.truncf %85 : vector<8x8x8xf32> to vector<8x8x8xbf16>
    %87 = vector.extract_strided_slice %5 {offsets = [0, 88], sizes = [64, 8], strides = [1, 1]} : vector<64x96xf32> to vector<64x8xf32>
    %88 = vector.shape_cast %87 : vector<64x8xf32> to vector<8x8x8xf32>
    %89 = arith.truncf %88 : vector<8x8x8xf32> to vector<8x8x8xbf16>
    "tpu.trace_start"() <{level = 10 : i32, message = "bqd,bkd->bqk"}> : () -> ()
    %cst_22 = arith.constant dense<0.000000e+00> : vector<8x8x8xf32>
    %90 = tpu.matmul %83, %86, %cst_22 {dimension_numbers = #tpu.dot_dimension_numbers<[2], [2], [1], [1], [0, 0, 0, 1, 1, 1], [0], [0]>} : vector<8x8x8xbf16>, vector<8x8x8xbf16>, vector<8x8x8xf32> -> vector<8x8x8xf32>
    "tpu.trace_stop"() : () -> ()
    %cst_23 = arith.constant dense<0xFF800000> : vector<8x8xf32>
    %91 = vector.multi_reduction <maximumf>, %90, %cst_23 [2] : vector<8x8x8xf32> to vector<8x8xf32>
    %92 = vector.shape_cast %91 : vector<8x8xf32> to vector<8x8x1xf32>
    %93 = vector.broadcast %92 : vector<8x8x1xf32> to vector<8x8x8xf32>
    %94 = arith.subf %90, %93 : vector<8x8x8xf32>
    %95 = math.exp %94 : vector<8x8x8xf32>
    %cst_24 = arith.constant dense<0.000000e+00> : vector<8x8xf32>
    %96 = vector.multi_reduction <add>, %95, %cst_24 [2] : vector<8x8x8xf32> to vector<8x8xf32>
    %97 = vector.shape_cast %96 : vector<8x8xf32> to vector<8x8x1xf32>
    %98 = arith.truncf %95 : vector<8x8x8xf32> to vector<8x8x8xbf16>
    "tpu.trace_start"() <{level = 10 : i32, message = "bqk,bkd->bqd"}> : () -> ()
    %cst_25 = arith.constant dense<0.000000e+00> : vector<8x8x8xf32>
    %99 = tpu.matmul %98, %89, %cst_25 {dimension_numbers = #tpu.dot_dimension_numbers<[2], [1], [1], [2], [0, 0, 0, 1, 1, 2], [0], [0]>} : vector<8x8x8xbf16>, vector<8x8x8xbf16>, vector<8x8x8xf32> -> vector<8x8x8xf32>
    "tpu.trace_stop"() : () -> ()
    %100 = tpu.reciprocal %97 {approx = true} : vector<8x8x1xf32> -> vector<8x8x1xf32>
    %101 = vector.broadcast %100 : vector<8x8x1xf32> to vector<8x8x8xf32>
    %102 = arith.mulf %99, %101 : vector<8x8x8xf32>
    %103 = vector.shape_cast %102 : vector<8x8x8xf32> to vector<64x8xf32>
    %104 = arith.truncf %103 : vector<64x8xf32> to vector<64x8xbf16>
    %c0_26 = arith.constant 0 : index
    %c24 = arith.constant 24 : index
    %105 = vector.load %arg7[%c0_26, %c24] : memref<64x32xbf16, #tpu.memory_space<vmem>>, vector<64x8xbf16>
    tpu.vector_store %arg7[%c0_26, %c24], %104 {strides = array<i32>} : memref<64x32xbf16, #tpu.memory_space<vmem>>, vector<64x8xbf16>,
    %c0_27 = arith.constant 0 : index
    %c0_28 = arith.constant 0 : index
    %106 = vector.load %arg7[%c0_27, %c0_28] : memref<64x32xbf16, #tpu.memory_space<vmem>>, vector<64x32xbf16>
    %c0_29 = arith.constant 0 : index
    %c0_30 = arith.constant 0 : index
    %107 = vector.load %arg4[%c0_29, %c0_30] : memref<32x64xbf16, #tpu.memory_space<vmem>>, vector<32x64xbf16>
    %cst_31 = arith.constant dense<0.000000e+00> : vector<64x64xf32>
    %108 = tpu.matmul %106, %107, %cst_31 {dimension_numbers = #tpu.dot_dimension_numbers<[1], [0], [0], [1], [0, 0, 1, 1], [], []>} : vector<64x32xbf16>, vector<32x64xbf16>, vector<64x64xf32> -> vector<64x64xf32>
    %c0_32 = arith.constant 0 : index
    %c0_33 = arith.constant 0 : index
    %109 = vector.load %arg5[%c0_32, %c0_33] : memref<1x64xf32, #tpu.memory_space<vmem>>, vector<1x64xf32>
    %110 = vector.broadcast %109 : vector<1x64xf32> to vector<64x64xf32>
    %111 = arith.addf %108, %110 : vector<64x64xf32>
    %c0_34 = arith.constant 0 : index
    %c0_35 = arith.constant 0 : index
    %112 = vector.load %arg6[%c0_34, %c0_35] : memref<64x64xf32, #tpu.memory_space<vmem>>, vector<64x64xf32>
    tpu.vector_store %arg6[%c0_34, %c0_35], %111 {strides = array<i32>} : memref<64x64xf32, #tpu.memory_space<vmem>>, vector<64x64xf32>,
    return
  }
  func.func @transform_0(%arg0: i32) -> (i32, i32) {
    %c0_i32 = arith.constant 0 : i32
    %c0_i32_0 = arith.constant 0 : i32
    return %arg0, %c0_i32 : i32, i32
  }
  func.func @transform_1(%arg0: i32) -> (i32, i32) {
    %c0_i32 = arith.constant 0 : i32
    %c0_i32_0 = arith.constant 0 : i32
    %c0_i32_1 = arith.constant 0 : i32
    return %c0_i32, %c0_i32_0 : i32, i32
  }
  func.func @transform_2(%arg0: i32) -> (i32, i32) {
    %c0_i32 = arith.constant 0 : i32
    %c0_i32_0 = arith.constant 0 : i32
    %c0_i32_1 = arith.constant 0 : i32
    return %c0_i32, %c0_i32_0 : i32, i32
  }
  func.func @transform_3(%arg0: i32) -> (i32, i32) {
    %c0_i32 = arith.constant 0 : i32
    %c0_i32_0 = arith.constant 0 : i32
    %c0_i32_1 = arith.constant 0 : i32
    return %c0_i32, %c0_i32_0 : i32, i32
  }
  func.func @transform_4(%arg0: i32) -> (i32, i32) {
    %c0_i32 = arith.constant 0 : i32
    %c0_i32_0 = arith.constant 0 : i32
    %c0_i32_1 = arith.constant 0 : i32
    return %c0_i32, %c0_i32_0 : i32, i32
  }
  func.func @transform_5(%arg0: i32) -> (i32, i32) {
    %c0_i32 = arith.constant 0 : i32
    %c0_i32_0 = arith.constant 0 : i32
    return %arg0, %c0_i32 : i32, i32
  }
}

</mosaic_0001>

<llo_original>
// kernel: tpu_custom_call.1
$region0: #{tpu_custom_call.1}
  #allocation0 [shape = 'u32[]', space=smem, size = 0x4, offset = 0x4, fixed_abs, tag = 'smem constant byte address 0x4 - core index']
  #allocation1 [shape = 'u32[144,128]{1,0:T(1,128)}', space=vmem, size = 0x12000, scoped, tag = 'internal scratch']
  #allocation2 [shape = 'bf16[64,32]{1,0:T(8,128)(2,1)}', space=vmem, size = 0x4000, scoped, tag = 'scratch operand']
  %s0 = inlined_call_operand.vmem [shape: bf16[64,64], index: 0, kind: input, shape index: {}]
  %s1 = inlined_call_operand.vmem [shape: bf16[64,32], index: 1, kind: input, shape index: {}]
  %s2 = inlined_call_operand.vmem [shape: bf16[32,96], index: 2, kind: input, shape index: {}]
  %s3 = inlined_call_operand.hbm [shape: bf16[32,64], index: 3, kind: input, shape index: {}]
  %s4 = inlined_call_operand.vmem [shape: f32[1,64], index: 4, kind: input, shape index: {}]
  %s5 = inlined_call_operand.hbm [shape: f32[64,64], index: 5, kind: output, shape index: {}]
  %s6 = sld [smem:[#allocation0]]
  $region34: #{tpu_custom_call.1} parent=0
    _
  %s8 = ssub.s32 1, %s6
  %s9 = scalar_select 0, %s8, %s6
  $region1: #{tpu_custom_call.1} parent=0
    #allocation3 [shape = 'u8[8192]{0}', space=vmem, size = 0x2000, scoped, tag = 'input window, operand 3, single buffered']
    #allocation4 [shape = 's32[1]{0}', space=sflag, size = 0x4, scoped, tag = 'scoped memory for tpu_custom_call.1']
    #allocation5 [shape = 's32[1]{0}', space=sflag, size = 0x4, scoped, tag = 'scoped memory for tpu_custom_call.1']
    #allocation6 [shape = 'u8[32768]{0}', space=vmem, size = 0x8000, scoped, tag = 'output window, operand 0, single buffered']
    %10 = vsyncpa [#allocation4], 0
    %11 = vsyncpa [#allocation5], 0
    // Predicated region
    $region2: #{tpu_custom_call.1} parent=1 // pred_check
      _
    $region3: #{tpu_custom_call.1} parent=1 // pred_check_branch
      %13 = sbr.rel (0) target = $region5
    $region4: #{tpu_custom_call.1} parent=1 // pred_region
      _
    $region5: #{tpu_custom_call.1} parent=1 // pred_fallthru
      _
    // Predicated region
    $region6: #{tpu_custom_call.1} parent=1 // pred_check
      _
    $region7: #{tpu_custom_call.1} parent=1 // pred_check_branch
      %15 = sbr.rel (0) target = $region9
    $region8: #{tpu_custom_call.1} parent=1 // pred_region
      _
    $region9: #{tpu_custom_call.1} parent=1 // pred_fallthru
      _
    // Predicated region
    $region10: #{tpu_custom_call.1} parent=1 // pred_check
      _
    $region11: #{tpu_custom_call.1} parent=1 // pred_check_branch
      %17 = sbr.rel (0) target = $region13
    $region12: #{tpu_custom_call.1} parent=1 // pred_region
      _
    $region13: #{tpu_custom_call.1} parent=1 // pred_fallthru
      _
    // Predicated region
    $region14: #{tpu_custom_call.1} parent=1 // pred_check
      _
    $region15: #{tpu_custom_call.1} parent=1 // pred_check_branch
      %19 = sbr.rel (0) target = $region17
    $region16: #{tpu_custom_call.1} parent=1 // pred_region
      %s21 = ssub.s32 256, 256
      %22 = vsyncadd [#allocation4], %s21
      %s23 = sshll.u32 [#allocation3], 4
      %s24 = int_to_ptr.vmem [resolvable:$true] %s23
      %29 = dma.hbm_to_vmem [thread:$0]  %s3, 256, %s24, [#allocation4], 64, 64, 4
    $region17: #{tpu_custom_call.1} parent=1 // pred_fallthru
      _
    // Predicated region
    $region18: #{tpu_custom_call.1} parent=1 // pred_check
      _
    $region19: #{tpu_custom_call.1} parent=1 // pred_check_branch
      %31 = sbr.rel (0) target = $region21
    $region20: #{tpu_custom_call.1} parent=1 // pred_region
      _
    $region21: #{tpu_custom_call.1} parent=1 // pred_fallthru
      _
    // Predicated region
    $region22: #{tpu_custom_call.1} parent=1 // pred_check
      _
    $region23: #{tpu_custom_call.1} parent=1 // pred_check_branch
      %33 = sbr.rel (0) target = $region25
    $region24: #{tpu_custom_call.1} parent=1 // pred_region
      %34 = dma.done [#allocation4], 256
    $region25: #{tpu_custom_call.1} parent=1 // pred_fallthru
      _
    %v36 = vld [vmem:[%s0] sm:$0xf]
    %v37 = vld [vmem:[%s0 + $0x4] sm:$0xf]
    %v38 = vld [vmem:[%s0 + $0x8] sm:$0xf]
    %v39 = vld [vmem:[%s0 + $0xc] sm:$0xf]
    %v40 = vld [vmem:[%s0 + $0x10] sm:$0xf]
    %v41 = vld [vmem:[%s0 + $0x14] sm:$0xf]
    %v42 = vld [vmem:[%s0 + $0x18] sm:$0xf]
    %v43 = vld [vmem:[%s0 + $0x1c] sm:$0xf]
    %v44 = vld [vmem:[%s1] sm:$0xf]
    %v45 = vld [vmem:[%s1 + $0x4] sm:$0xf]
    %v46 = vld [vmem:[%s1 + $0x8] sm:$0xf]
    %v47 = vld [vmem:[%s1 + $0xc] sm:$0xf]
    %v48 = vld [vmem:[%s1 + $0x10] sm:$0xf]
    %v49 = vld [vmem:[%s1 + $0x14] sm:$0xf]
    %v50 = vld [vmem:[%s1 + $0x18] sm:$0xf]
    %v51 = vld [vmem:[%s1 + $0x1c] sm:$0xf]
    %v52 = vld [vmem:[%s2] sm:$0xf]
    %v53 = vld [vmem:[%s2 + $0x4] sm:$0xf]
    %v54 = vld [vmem:[%s2 + $0x8] sm:$0xf]
    %v55 = vld [vmem:[%s2 + $0xc] sm:$0xf]
    %v64 = vunpack.c.l.b16 %v36
    %v65 = vunpack.c.l.b16 %v37
    %v66 = vunpack.c.l.b16 %v38
    %v67 = vunpack.c.l.b16 %v39
    %v68 = vunpack.c.l.b16 %v40
    %v69 = vunpack.c.l.b16 %v41
    %v70 = vunpack.c.l.b16 %v42
    %v71 = vunpack.c.l.b16 %v43
    %v72 = vpack.c.b16 %v65, %v64
    %v73 = vpack.c.b16 %v67, %v66
    %v74 = vpack.c.b16 %v69, %v68
    %v75 = vpack.c.b16 %v71, %v70
    %v84 = vunpack.c.l.b16 %v44
    %v85 = vunpack.c.l.b16 %v45
    %v86 = vunpack.c.l.b16 %v46
    %v87 = vunpack.c.l.b16 %v47
    %v88 = vunpack.c.l.b16 %v48
    %v89 = vunpack.c.l.b16 %v49
    %v90 = vunpack.c.l.b16 %v50
    %v91 = vunpack.c.l.b16 %v51
    %v92 = vpack.c.b16 %v85, %v84
    %v93 = vpack.c.b16 %v87, %v86
    %v94 = vpack.c.b16 %v89, %v88
    %v95 = vpack.c.b16 %v91, %v90
    %vm100 = vcmask 523264
    %v102 = vsel %vm100, %v72, 0
    %v105 = vsel %vm100, %v73, 0
    %v108 = vsel %vm100, %v74, 0
    %v111 = vsel %vm100, %v75, 0
    %113 = vmatprep.subr.bf16.mxu0 0
    %114 = vmatpush1.bf16.msra.mxu0 0
    %115 = vmatprep.subr.bf16.mxu0 0
    %116 = vmatpush1.bf16.msra.mxu0 0
    %117 = vmatprep.subr.bf16.mxu0 0
    %118 = vmatpush1.bf16.msra.mxu0 0
    %119 = vmatprep.subr.bf16.mxu0 0
    %120 = vmatpush1.bf16.msra.mxu0 0
    %121 = vmatprep.subr.bf16.mxu0 0
    %122 = vmatpush1.bf16.msra.mxu0 %v95
    %123 = vmatprep.subr.bf16.mxu0 0
    %124 = vmatpush1.bf16.msra.mxu0 %v94
    %125 = vmatprep.subr.bf16.mxu0 0
    %126 = vmatpush1.bf16.msra.mxu0 %v93
    %127 = vmatprep.subr.bf16.mxu0 0
    %128 = vmatpush1.bf16.msra.mxu0 %v92
    %129 = vmatprep.subr.bf16.mxu0 0
    %130 = vmatpush2.bf16.msra.mxu0 0
    %131 = vmatprep.subr.bf16.mxu0 0
    %132 = vmatpush2.bf16.msra.mxu0 0
    %133 = vmatprep.subr.bf16.mxu0 0
    %134 = vmatpush2.bf16.msra.mxu0 0
    %135 = vmatprep.subr.bf16.mxu0 0
    %136 = vmatpush2.bf16.msra.mxu0 0
    %137 = vmatprep.subr.bf16.mxu0 0
    %138 = vmatpush2.bf16.msra.mxu0 0
    %139 = vmatprep.subr.bf16.mxu0 0
    %140 = vmatpush2.bf16.msra.mxu0 0
    %141 = vmatprep.subr.bf16.mxu0 0
    %142 = vmatpush2.bf16.msra.mxu0 0
    %143 = vmatprep.subr.bf16.mxu0 0
    %144 = vmatpush2.bf16.msra.mxu0 0
    %145 = vmatprep.mubr.bf16.mxu0 0
    %146 = vmatmul.mubr.bf16.gmra.mxu0 %v102
    %v147 = vpop.f32.mrf.mxu0
    %v148 = vadd.f32 0.0, %v147
    %v149 = vpop.f32.mrf.mxu0
    %v150 = vpop.f32.mrf.mxu0
    %v151 = vadd.f32 0.0, %v150
    %v152 = vpop.f32.mrf.mxu0
    %153 = vmatprep.mubr.bf16.mxu0 0
    %154 = vmatmul.mubr.bf16.gmra.mxu0 %v105
    %v155 = vpop.f32.mrf.mxu0
    %v156 = vadd.f32 0.0, %v155
    %v157 = vpop.f32.mrf.mxu0
    %v158 = vpop.f32.mrf.mxu0
    %v159 = vadd.f32 0.0, %v158
    %v160 = vpop.f32.mrf.mxu0
    %161 = vmatprep.mubr.bf16.mxu0 0
    %162 = vmatmul.mubr.bf16.gmra.mxu0 %v108
    %v163 = vpop.f32.mrf.mxu0
    %v164 = vadd.f32 0.0, %v163
    %v165 = vpop.f32.mrf.mxu0
    %v166 = vpop.f32.mrf.mxu0
    %v167 = vadd.f32 0.0, %v166
    %v168 = vpop.f32.mrf.mxu0
    %169 = vmatprep.mubr.bf16.mxu0 0
    %170 = vmatmul.mubr.bf16.gmra.mxu0 %v111
    %v171 = vpop.f32.mrf.mxu0
    %v172 = vadd.f32 0.0, %v171
    %v173 = vpop.f32.mrf.mxu0
    %v174 = vpop.f32.mrf.mxu0
    %v175 = vadd.f32 0.0, %v174
    %v176 = vpop.f32.mrf.mxu0
    %177 = vdwg.mxu0
    %v178 = vpack.c.bf16 %v151, %v148
    %v179 = vpack.c.bf16 %v159, %v156
    %v180 = vpack.c.bf16 %v167, %v164
    %v181 = vpack.c.bf16 %v175, %v172
    %v186 = vunpack.c.l.b16 %v52
    %v187 = vunpack.c.l.b16 %v53
    %v188 = vunpack.c.l.b16 %v54
    %v189 = vunpack.c.l.b16 %v55
    %v190 = vpack.c.b16 %v187, %v186
    %v191 = vpack.c.b16 %v189, %v188
    %vm194 = vcmask 261120
    %v196 = vsel %vm194, %v178, 0
    %v199 = vsel %vm194, %v179, 0
    %v202 = vsel %vm194, %v180, 0
    %v205 = vsel %vm194, %v181, 0
    %207 = vmatprep.subr.bf16.mxu0 0
    %208 = vmatpush1.bf16.msra.mxu0 0
    %209 = vmatprep.subr.bf16.mxu0 0
    %210 = vmatpush1.bf16.msra.mxu0 0
    %211 = vmatprep.subr.bf16.mxu0 0
    %212 = vmatpush1.bf16.msra.mxu0 0
    %213 = vmatprep.subr.bf16.mxu0 0
    %214 = vmatpush1.bf16.msra.mxu0 0
    %215 = vmatprep.subr.bf16.mxu0 0
    %216 = vmatpush1.bf16.msra.mxu0 0
    %217 = vmatprep.subr.bf16.mxu0 0
    %218 = vmatpush1.bf16.msra.mxu0 0
    %219 = vmatprep.subr.bf16.mxu0 0
    %220 = vmatpush1.bf16.msra.mxu0 %v191
    %221 = vmatprep.subr.bf16.mxu0 0
    %222 = vmatpush1.bf16.msra.mxu0 %v190
    %223 = vmatprep.subr.bf16.mxu0 0
    %224 = vmatpush2.bf16.msra.mxu0 0
    %225 = vmatprep.subr.bf16.mxu0 0
    %226 = vmatpush2.bf16.msra.mxu0 0
    %227 = vmatprep.subr.bf16.mxu0 0
    %228 = vmatpush2.bf16.msra.mxu0 0
    %229 = vmatprep.subr.bf16.mxu0 0
    %230 = vmatpush2.bf16.msra.mxu0 0
    %231 = vmatprep.subr.bf16.mxu0 0
    %232 = vmatpush2.bf16.msra.mxu0 0
    %233 = vmatprep.subr.bf16.mxu0 0
    %234 = vmatpush2.bf16.msra.mxu0 0
    %235 = vmatprep.subr.bf16.mxu0 0
    %236 = vmatpush2.bf16.msra.mxu0 0
    %237 = vmatprep.subr.bf16.mxu0 0
    %238 = vmatpush2.bf16.msra.mxu0 0
    %239 = vmatprep.mubr.bf16.mxu0 0
    %240 = vmatmul.mubr.bf16.gmra.mxu0 %v196
    %v241 = vpop.f32.mrf.mxu0
    %v242 = vadd.f32 0.0, %v241
    %v243 = vpop.f32.mrf.mxu0
    %v244 = vpop.f32.mrf.mxu0
    %v245 = vadd.f32 0.0, %v244
    %v246 = vpop.f32.mrf.mxu0
    %247 = vmatprep.mubr.bf16.mxu0 0
    %248 = vmatmul.mubr.bf16.gmra.mxu0 %v199
    %v249 = vpop.f32.mrf.mxu0
    %v250 = vadd.f32 0.0, %v249
    %v251 = vpop.f32.mrf.mxu0
    %v252 = vpop.f32.mrf.mxu0
    %v253 = vadd.f32 0.0, %v252
    %v254 = vpop.f32.mrf.mxu0
    %255 = vmatprep.mubr.bf16.mxu0 0
    %256 = vmatmul.mubr.bf16.gmra.mxu0 %v202
    %v257 = vpop.f32.mrf.mxu0
    %v258 = vadd.f32 0.0, %v257
    %v259 = vpop.f32.mrf.mxu0
    %v260 = vpop.f32.mrf.mxu0
    %v261 = vadd.f32 0.0, %v260
    %v262 = vpop.f32.mrf.mxu0
    %263 = vmatprep.mubr.bf16.mxu0 0
    %264 = vmatmul.mubr.bf16.gmra.mxu0 %v205
    %v265 = vpop.f32.mrf.mxu0
    %v266 = vadd.f32 0.0, %v265
    %v267 = vpop.f32.mrf.mxu0
    %v268 = vpop.f32.mrf.mxu0
    %v269 = vadd.f32 0.0, %v268
    %v270 = vpop.f32.mrf.mxu0
    %271 = vdwg.mxu0
    %v272 = vpack.c.bf16 %v242, %v242
    %v273 = vpack.c.bf16 %v245, %v245
    %v274 = vpack.c.bf16 %v250, %v250
    %v275 = vpack.c.bf16 %v253, %v253
    %v276 = vpack.c.bf16 %v258, %v258
    %v277 = vpack.c.bf16 %v261, %v261
    %v278 = vpack.c.bf16 %v266, %v266
    %v279 = vpack.c.bf16 %v269, %v269
    %281 = vrot.lane.b32.xlu0 %v272, 96
    %v282 = vpop.permute.xlu0 %281
    %vm283 = vcmask 64512
    %v285 = vsel %vm283, %v272, 0
    %v288 = vsel %vm283, %v282, 0
    %290 = vmatprep.subr.bf16.mxu0 0
    %291 = vmatpush1.bf16.xpose.msra.mxu0 0
    %292 = vmatprep.subr.bf16.mxu0 0
    %293 = vmatpush1.bf16.xpose.msra.mxu0 0
    %294 = vmatprep.subr.bf16.mxu0 0
    %295 = vmatpush1.bf16.xpose.msra.mxu0 0
    %296 = vmatprep.subr.bf16.mxu0 0
    %297 = vmatpush1.bf16.xpose.msra.mxu0 0
    %298 = vmatprep.subr.bf16.mxu0 0
    %299 = vmatpush1.bf16.xpose.msra.mxu0 0
    %300 = vmatprep.subr.bf16.mxu0 0
    %301 = vmatpush1.bf16.xpose.msra.mxu0 0
    %302 = vmatprep.subr.bf16.mxu0 0
    %303 = vmatpush1.bf16.xpose.msra.mxu0 0
    %304 = vmatprep.subr.bf16.mxu0 0
    %305 = vmatpush1.bf16.xpose.msra.mxu0 %v288
    %306 = vmatprep.subr.bf16.mxu0 0
    %307 = vmatpush2.bf16.xpose.msra.mxu0 0
    %308 = vmatprep.subr.bf16.mxu0 0
    %309 = vmatpush2.bf16.xpose.msra.mxu0 0
    %310 = vmatprep.subr.bf16.mxu0 0
    %311 = vmatpush2.bf16.xpose.msra.mxu0 0
    %312 = vmatprep.subr.bf16.mxu0 0
    %313 = vmatpush2.bf16.xpose.msra.mxu0 0
    %314 = vmatprep.subr.bf16.mxu0 0
    %315 = vmatpush2.bf16.xpose.msra.mxu0 0
    %316 = vmatprep.subr.bf16.mxu0 0
    %317 = vmatpush2.bf16.xpose.msra.mxu0 0
    %318 = vmatprep.subr.bf16.mxu0 0
    %319 = vmatpush2.bf16.xpose.msra.mxu0 0
    %320 = vmatprep.subr.bf16.mxu0 0
    %321 = vmatpush2.bf16.xpose.msra.mxu0 0
    %322 = vmatprep.mubr.bf16.mxu0 0
    %323 = vmatmul.mubr.bf16.gmra.mxu0 %v285
    %v324 = vpop.f32.mrf.mxu0
    %v325 = vadd.f32 0.0, %v324
    %v326 = vpop.f32.mrf.mxu0
    %v327 = vpop.f32.mrf.mxu0
    %v328 = vpop.f32.mrf.mxu0
    %329 = vdwg.mxu0
    %331 = vrot.lane.b32.xlu0 %v273, 96
    %v332 = vpop.permute.xlu0 %331
    %v334 = vsel %vm283, %v273, 0
    %v337 = vsel %vm283, %v332, 0
    %339 = vmatprep.subr.bf16.mxu0 0
    %340 = vmatpush1.bf16.xpose.msra.mxu0 0
    %341 = vmatprep.subr.bf16.mxu0 0
    %342 = vmatpush1.bf16.xpose.msra.mxu0 0
    %343 = vmatprep.subr.bf16.mxu0 0
    %344 = vmatpush1.bf16.xpose.msra.mxu0 0
    %345 = vmatprep.subr.bf16.mxu0 0
    %346 = vmatpush1.bf16.xpose.msra.mxu0 0
    %347 = vmatprep.subr.bf16.mxu0 0
    %348 = vmatpush1.bf16.xpose.msra.mxu0 0
    %349 = vmatprep.subr.bf16.mxu0 0
    %350 = vmatpush1.bf16.xpose.msra.mxu0 0
    %351 = vmatprep.subr.bf16.mxu0 0
    %352 = vmatpush1.bf16.xpose.msra.mxu0 0
    %353 = vmatprep.subr.bf16.mxu0 0
    %354 = vmatpush1.bf16.xpose.msra.mxu0 %v337
    %355 = vmatprep.subr.bf16.mxu0 0
    %356 = vmatpush2.bf16.xpose.msra.mxu0 0
    %357 = vmatprep.subr.bf16.mxu0 0
    %358 = vmatpush2.bf16.xpose.msra.mxu0 0
    %359 = vmatprep.subr.bf16.mxu0 0
    %360 = vmatpush2.bf16.xpose.msra.mxu0 0
    %361 = vmatprep.subr.bf16.mxu0 0
    %362 = vmatpush2.bf16.xpose.msra.mxu0 0
    %363 = vmatprep.subr.bf16.mxu0 0
    %364 = vmatpush2.bf16.xpose.msra.mxu0 0
    %365 = vmatprep.subr.bf16.mxu0 0
    %366 = vmatpush2.bf16.xpose.msra.mxu0 0
    %367 = vmatprep.subr.bf16.mxu0 0
    %368 = vmatpush2.bf16.xpose.msra.mxu0 0
    %369 = vmatprep.subr.bf16.mxu0 0
    %370 = vmatpush2.bf16.xpose.msra.mxu0 0
    %371 = vmatprep.mubr.bf16.mxu0 0
    %372 = vmatmul.mubr.bf16.gmra.mxu0 %v334
    %v373 = vpop.f32.mrf.mxu0
    %v374 = vadd.f32 0.0, %v373
    %v375 = vpop.f32.mrf.mxu0
    %v376 = vpop.f32.mrf.mxu0
    %v377 = vpop.f32.mrf.mxu0
    %378 = vdwg.mxu0
    %380 = vrot.lane.b32.xlu0 %v274, 96
    %v381 = vpop.permute.xlu0 %380
    %v383 = vsel %vm283, %v274, 0
    %v386 = vsel %vm283, %v381, 0
    %388 = vmatprep.subr.bf16.mxu0 0
    %389 = vmatpush1.bf16.xpose.msra.mxu0 0
    %390 = vmatprep.subr.bf16.mxu0 0
    %391 = vmatpush1.bf16.xpose.msra.mxu0 0
    %392 = vmatprep.subr.bf16.mxu0 0
    %393 = vmatpush1.bf16.xpose.msra.mxu0 0
    %394 = vmatprep.subr.bf16.mxu0 0
    %395 = vmatpush1.bf16.xpose.msra.mxu0 0
    %396 = vmatprep.subr.bf16.mxu0 0
    %397 = vmatpush1.bf16.xpose.msra.mxu0 0
    %398 = vmatprep.subr.bf16.mxu0 0
    %399 = vmatpush1.bf16.xpose.msra.mxu0 0
    %400 = vmatprep.subr.bf16.mxu0 0
    %401 = vmatpush1.bf16.xpose.msra.mxu0 0
    %402 = vmatprep.subr.bf16.mxu0 0
    %403 = vmatpush1.bf16.xpose.msra.mxu0 %v386
    %404 = vmatprep.subr.bf16.mxu0 0
    %405 = vmatpush2.bf16.xpose.msra.mxu0 0
    %406 = vmatprep.subr.bf16.mxu0 0
    %407 = vmatpush2.bf16.xpose.msra.mxu0 0
    %408 = vmatprep.subr.bf16.mxu0 0
    %409 = vmatpush2.bf16.xpose.msra.mxu0 0
    %410 = vmatprep.subr.bf16.mxu0 0
    %411 = vmatpush2.bf16.xpose.msra.mxu0 0
    %412 = vmatprep.subr.bf16.mxu0 0
    %413 = vmatpush2.bf16.xpose.msra.mxu0 0
    %414 = vmatprep.subr.bf16.mxu0 0
    %415 = vmatpush2.bf16.xpose.msra.mxu0 0
    %416 = vmatprep.subr.bf16.mxu0 0
    %417 = vmatpush2.bf16.xpose.msra.mxu0 0
    %418 = vmatprep.subr.bf16.mxu0 0
    %419 = vmatpush2.bf16.xpose.msra.mxu0 0
    %420 = vmatprep.mubr.bf16.mxu0 0
    %421 = vmatmul.mubr.bf16.gmra.mxu0 %v383
    %v422 = vpop.f32.mrf.mxu0
    %v423 = vadd.f32 0.0, %v422
    %v424 = vpop.f32.mrf.mxu0
    %v425 = vpop.f32.mrf.mxu0
    %v426 = vpop.f32.mrf.mxu0
    %427 = vdwg.mxu0
    %429 = vrot.lane.b32.xlu0 %v275, 96
    %v430 = vpop.permute.xlu0 %429
    %v432 = vsel %vm283, %v275, 0
    %v435 = vsel %vm283, %v430, 0
    %437 = vmatprep.subr.bf16.mxu0 0
    %438 = vmatpush1.bf16.xpose.msra.mxu0 0
    %439 = vmatprep.subr.bf16.mxu0 0
    %440 = vmatpush1.bf16.xpose.msra.mxu0 0
    %441 = vmatprep.subr.bf16.mxu0 0
    %442 = vmatpush1.bf16.xpose.msra.mxu0 0
    %443 = vmatprep.subr.bf16.mxu0 0
    %444 = vmatpush1.bf16.xpose.msra.mxu0 0
    %445 = vmatprep.subr.bf16.mxu0 0
    %446 = vmatpush1.bf16.xpose.msra.mxu0 0
    %447 = vmatprep.subr.bf16.mxu0 0
    %448 = vmatpush1.bf16.xpose.msra.mxu0 0
    %449 = vmatprep.subr.bf16.mxu0 0
    %450 = vmatpush1.bf16.xpose.msra.mxu0 0
    %451 = vmatprep.subr.bf16.mxu0 0
    %452 = vmatpush1.bf16.xpose.msra.mxu0 %v435
    %453 = vmatprep.subr.bf16.mxu0 0
    %454 = vmatpush2.bf16.xpose.msra.mxu0 0
    %455 = vmatprep.subr.bf16.mxu0 0
    %456 = vmatpush2.bf16.xpose.msra.mxu0 0
    %457 = vmatprep.subr.bf16.mxu0 0
    %458 = vmatpush2.bf16.xpose.msra.mxu0 0
    %459 = vmatprep.subr.bf16.mxu0 0
    %460 = vmatpush2.bf16.xpose.msra.mxu0 0
    %461 = vmatprep.subr.bf16.mxu0 0
    %462 = vmatpush2.bf16.xpose.msra.mxu0 0
    %463 = vmatprep.subr.bf16.mxu0 0
    %464 = vmatpush2.bf16.xpose.msra.mxu0 0
    %465 = vmatprep.subr.bf16.mxu0 0
    %466 = vmatpush2.bf16.xpose.msra.mxu0 0
    %467 = vmatprep.subr.bf16.mxu0 0
    %468 = vmatpush2.bf16.xpose.msra.mxu0 0
    %469 = vmatprep.mubr.bf16.mxu0 0
    %470 = vmatmul.mubr.bf16.gmra.mxu0 %v432
    %v471 = vpop.f32.mrf.mxu0
    %v472 = vadd.f32 0.0, %v471
    %v473 = vpop.f32.mrf.mxu0
    %v474 = vpop.f32.mrf.mxu0
    %v475 = vpop.f32.mrf.mxu0
    %476 = vdwg.mxu0
    %478 = vrot.lane.b32.xlu0 %v276, 96
    %v479 = vpop.permute.xlu0 %478
    %v481 = vsel %vm283, %v276, 0
    %v484 = vsel %vm283, %v479, 0
    %486 = vmatprep.subr.bf16.mxu0 0
    %487 = vmatpush1.bf16.xpose.msra.mxu0 0
    %488 = vmatprep.subr.bf16.mxu0 0
    %489 = vmatpush1.bf16.xpose.msra.mxu0 0
    %490 = vmatprep.subr.bf16.mxu0 0
    %491 = vmatpush1.bf16.xpose.msra.mxu0 0
    %492 = vmatprep.subr.bf16.mxu0 0
    %493 = vmatpush1.bf16.xpose.msra.mxu0 0
    %494 = vmatprep.subr.bf16.mxu0 0
    %495 = vmatpush1.bf16.xpose.msra.mxu0 0
    %496 = vmatprep.subr.bf16.mxu0 0
    %497 = vmatpush1.bf16.xpose.msra.mxu0 0
    %498 = vmatprep.subr.bf16.mxu0 0
    %499 = vmatpush1.bf16.xpose.msra.mxu0 0
    %500 = vmatprep.subr.bf16.mxu0 0
    %501 = vmatpush1.bf16.xpose.msra.mxu0 %v484
    %502 = vmatprep.subr.bf16.mxu0 0
    %503 = vmatpush2.bf16.xpose.msra.mxu0 0
    %504 = vmatprep.subr.bf16.mxu0 0
    %505 = vmatpush2.bf16.xpose.msra.mxu0 0
    %506 = vmatprep.subr.bf16.mxu0 0
    %507 = vmatpush2.bf16.xpose.msra.mxu0 0
    %508 = vmatprep.subr.bf16.mxu0 0
    %509 = vmatpush2.bf16.xpose.msra.mxu0 0
    %510 = vmatprep.subr.bf16.mxu0 0
    %511 = vmatpush2.bf16.xpose.msra.mxu0 0
    %512 = vmatprep.subr.bf16.mxu0 0
    %513 = vmatpush2.bf16.xpose.msra.mxu0 0
    %514 = vmatprep.subr.bf16.mxu0 0
    %515 = vmatpush2.bf16.xpose.msra.mxu0 0
    %516 = vmatprep.subr.bf16.mxu0 0
    %517 = vmatpush2.bf16.xpose.msra.mxu0 0
    %518 = vmatprep.mubr.bf16.mxu0 0
    %519 = vmatmul.mubr.bf16.gmra.mxu0 %v481
    %v520 = vpop.f32.mrf.mxu0
    %v521 = vadd.f32 0.0, %v520
    %v522 = vpop.f32.mrf.mxu0
    %v523 = vpop.f32.mrf.mxu0
    %v524 = vpop.f32.mrf.mxu0
    %525 = vdwg.mxu0
    %527 = vrot.lane.b32.xlu0 %v277, 96
    %v528 = vpop.permute.xlu0 %527
    %v530 = vsel %vm283, %v277, 0
    %v533 = vsel %vm283, %v528, 0
    %535 = vmatprep.subr.bf16.mxu0 0
    %536 = vmatpush1.bf16.xpose.msra.mxu0 0
    %537 = vmatprep.subr.bf16.mxu0 0
    %538 = vmatpush1.bf16.xpose.msra.mxu0 0
    %539 = vmatprep.subr.bf16.mxu0 0
    %540 = vmatpush1.bf16.xpose.msra.mxu0 0
    %541 = vmatprep.subr.bf16.mxu0 0
    %542 = vmatpush1.bf16.xpose.msra.mxu0 0
    %543 = vmatprep.subr.bf16.mxu0 0
    %544 = vmatpush1.bf16.xpose.msra.mxu0 0
    %545 = vmatprep.subr.bf16.mxu0 0
    %546 = vmatpush1.bf16.xpose.msra.mxu0 0
    %547 = vmatprep.subr.bf16.mxu0 0
    %548 = vmatpush1.bf16.xpose.msra.mxu0 0
    %549 = vmatprep.subr.bf16.mxu0 0
    %550 = vmatpush1.bf16.xpose.msra.mxu0 %v533
    %551 = vmatprep.subr.bf16.mxu0 0
    %552 = vmatpush2.bf16.xpose.msra.mxu0 0
    %553 = vmatprep.subr.bf16.mxu0 0
    %554 = vmatpush2.bf16.xpose.msra.mxu0 0
    %555 = vmatprep.subr.bf16.mxu0 0
    %556 = vmatpush2.bf16.xpose.msra.mxu0 0
    %557 = vmatprep.subr.bf16.mxu0 0
    %558 = vmatpush2.bf16.xpose.msra.mxu0 0
    %559 = vmatprep.subr.bf16.mxu0 0
    %560 = vmatpush2.bf16.xpose.msra.mxu0 0
    %561 = vmatprep.subr.bf16.mxu0 0
    %562 = vmatpush2.bf16.xpose.msra.mxu0 0
    %563 = vmatprep.subr.bf16.mxu0 0
    %564 = vmatpush2.bf16.xpose.msra.mxu0 0
    %565 = vmatprep.subr.bf16.mxu0 0
    %566 = vmatpush2.bf16.xpose.msra.mxu0 0
    %567 = vmatprep.mubr.bf16.mxu0 0
    %568 = vmatmul.mubr.bf16.gmra.mxu0 %v530
    %v569 = vpop.f32.mrf.mxu0
    %v570 = vadd.f32 0.0, %v569
    %v571 = vpop.f32.mrf.mxu0
    %v572 = vpop.f32.mrf.mxu0
    %v573 = vpop.f32.mrf.mxu0
    %574 = vdwg.mxu0
    %576 = vrot.lane.b32.xlu0 %v278, 96
    %v577 = vpop.permute.xlu0 %576
    %v579 = vsel %vm283, %v278, 0
    %v582 = vsel %vm283, %v577, 0
    %584 = vmatprep.subr.bf16.mxu0 0
    %585 = vmatpush1.bf16.xpose.msra.mxu0 0
    %586 = vmatprep.subr.bf16.mxu0 0
    %587 = vmatpush1.bf16.xpose.msra.mxu0 0
    %588 = vmatprep.subr.bf16.mxu0 0
    %589 = vmatpush1.bf16.xpose.msra.mxu0 0
    %590 = vmatprep.subr.bf16.mxu0 0
    %591 = vmatpush1.bf16.xpose.msra.mxu0 0
    %592 = vmatprep.subr.bf16.mxu0 0
    %593 = vmatpush1.bf16.xpose.msra.mxu0 0
    %594 = vmatprep.subr.bf16.mxu0 0
    %595 = vmatpush1.bf16.xpose.msra.mxu0 0
    %596 = vmatprep.subr.bf16.mxu0 0
    %597 = vmatpush1.bf16.xpose.msra.mxu0 0
    %598 = vmatprep.subr.bf16.mxu0 0
    %599 = vmatpush1.bf16.xpose.msra.mxu0 %v582
    %600 = vmatprep.subr.bf16.mxu0 0
    %601 = vmatpush2.bf16.xpose.msra.mxu0 0
    %602 = vmatprep.subr.bf16.mxu0 0
    %603 = vmatpush2.bf16.xpose.msra.mxu0 0
    %604 = vmatprep.subr.bf16.mxu0 0
    %605 = vmatpush2.bf16.xpose.msra.mxu0 0
    %606 = vmatprep.subr.bf16.mxu0 0
    %607 = vmatpush2.bf16.xpose.msra.mxu0 0
    %608 = vmatprep.subr.bf16.mxu0 0
    %609 = vmatpush2.bf16.xpose.msra.mxu0 0
    %610 = vmatprep.subr.bf16.mxu0 0
    %611 = vmatpush2.bf16.xpose.msra.mxu0 0
    %612 = vmatprep.subr.bf16.mxu0 0
    %613 = vmatpush2.bf16.xpose.msra.mxu0 0
    %614 = vmatprep.subr.bf16.mxu0 0
    %615 = vmatpush2.bf16.xpose.msra.mxu0 0
    %616 = vmatprep.mubr.bf16.mxu0 0
    %617 = vmatmul.mubr.bf16.gmra.mxu0 %v579
    %v618 = vpop.f32.mrf.mxu0
    %v619 = vadd.f32 0.0, %v618
    %v620 = vpop.f32.mrf.mxu0
    %v621 = vpop.f32.mrf.mxu0
    %v622 = vpop.f32.mrf.mxu0
    %623 = vdwg.mxu0
    %625 = vrot.lane.b32.xlu0 %v279, 96
    %v626 = vpop.permute.xlu0 %625
    %v628 = vsel %vm283, %v279, 0
    %v631 = vsel %vm283, %v626, 0
    %633 = vmatprep.subr.bf16.mxu0 0
    %634 = vmatpush1.bf16.xpose.msra.mxu0 0
    %635 = vmatprep.subr.bf16.mxu0 0
    %636 = vmatpush1.bf16.xpose.msra.mxu0 0
    %637 = vmatprep.subr.bf16.mxu0 0
    %638 = vmatpush1.bf16.xpose.msra.mxu0 0
    %639 = vmatprep.subr.bf16.mxu0 0
    %640 = vmatpush1.bf16.xpose.msra.mxu0 0
    %641 = vmatprep.subr.bf16.mxu0 0
    %642 = vmatpush1.bf16.xpose.msra.mxu0 0
    %643 = vmatprep.subr.bf16.mxu0 0
    %644 = vmatpush1.bf16.xpose.msra.mxu0 0
    %645 = vmatprep.subr.bf16.mxu0 0
    %646 = vmatpush1.bf16.xpose.msra.mxu0 0
    %647 = vmatprep.subr.bf16.mxu0 0
    %648 = vmatpush1.bf16.xpose.msra.mxu0 %v631
    %649 = vmatprep.subr.bf16.mxu0 0
    %650 = vmatpush2.bf16.xpose.msra.mxu0 0
    %651 = vmatprep.subr.bf16.mxu0 0
    %652 = vmatpush2.bf16.xpose.msra.mxu0 0
    %653 = vmatprep.subr.bf16.mxu0 0
    %654 = vmatpush2.bf16.xpose.msra.mxu0 0
    %655 = vmatprep.subr.bf16.mxu0 0
    %656 = vmatpush2.bf16.xpose.msra.mxu0 0
    %657 = vmatprep.subr.bf16.mxu0 0
    %658 = vmatpush2.bf16.xpose.msra.mxu0 0
    %659 = vmatprep.subr.bf16.mxu0 0
    %660 = vmatpush2.bf16.xpose.msra.mxu0 0
    %661 = vmatprep.subr.bf16.mxu0 0
    %662 = vmatpush2.bf16.xpose.msra.mxu0 0
    %663 = vmatprep.subr.bf16.mxu0 0
    %664 = vmatpush2.bf16.xpose.msra.mxu0 0
    %665 = vmatprep.mubr.bf16.mxu0 0
    %666 = vmatmul.mubr.bf16.gmra.mxu0 %v628
    %v667 = vpop.f32.mrf.mxu0
    %v668 = vadd.f32 0.0, %v667
    %v669 = vpop.f32.mrf.mxu0
    %v670 = vpop.f32.mrf.mxu0
    %v671 = vpop.f32.mrf.mxu0
    %672 = vdwg.mxu0
    %v673 = vsel %vm283, %v325, -inf
    %674 = vmax.xlane.f32.xlu0 %v673
    %v675 = vpop.xlane.xlu0 %674
    %v676 = vsel %vm283, %v374, -inf
    %677 = vmax.xlane.f32.xlu0 %v676
    %v678 = vpop.xlane.xlu0 %677
    %v679 = vsel %vm283, %v423, -inf
    %680 = vmax.xlane.f32.xlu0 %v679
    %v681 = vpop.xlane.xlu0 %680
    %v682 = vsel %vm283, %v472, -inf
    %683 = vmax.xlane.f32.xlu0 %v682
    %v684 = vpop.xlane.xlu0 %683
    %v685 = vsel %vm283, %v521, -inf
    %686 = vmax.xlane.f32.xlu0 %v685
    %v687 = vpop.xlane.xlu0 %686
    %v688 = vsel %vm283, %v570, -inf
    %689 = vmax.xlane.f32.xlu0 %v688
    %v690 = vpop.xlane.xlu0 %689
    %v691 = vsel %vm283, %v619, -inf
    %692 = vmax.xlane.f32.xlu0 %v691
    %v693 = vpop.xlane.xlu0 %692
    %v694 = vsel %vm283, %v668, -inf
    %695 = vmax.xlane.f32.xlu0 %v694
    %v696 = vpop.xlane.xlu0 %695
    %v697 = vsub.f32 %v325, %v675
    %v698 = vsub.f32 %v374, %v678
    %v699 = vsub.f32 %v423, %v681
    %v700 = vsub.f32 %v472, %v684
    %v701 = vsub.f32 %v521, %v687
    %v702 = vsub.f32 %v570, %v690
    %v703 = vsub.f32 %v619, %v693
    %v704 = vsub.f32 %v668, %v696
    %v705 = vmul.f32 %v697, 1.442695
    %v706 = vpow.pop %v705
    %v707 = vmul.f32 %v698, 1.442695
    %v708 = vpow.pop %v707
    %v709 = vmul.f32 %v699, 1.442695
    %v710 = vpow.pop %v709
    %v711 = vmul.f32 %v700, 1.442695
    %v712 = vpow.pop %v711
    %v713 = vmul.f32 %v701, 1.442695
    %v714 = vpow.pop %v713
    %v715 = vmul.f32 %v702, 1.442695
    %v716 = vpow.pop %v715
    %v717 = vmul.f32 %v703, 1.442695
    %v718 = vpow.pop %v717
    %v719 = vmul.f32 %v704, 1.442695
    %v720 = vpow.pop %v719
    %v721 = vsel %vm283, %v706, 0.0
    %722 = vadd.xlane.f32.xlu0 %v721
    %v723 = vpop.xlane.xlu0 %722
    %v724 = vsel %vm283, %v708, 0.0
    %725 = vadd.xlane.f32.xlu0 %v724
    %v726 = vpop.xlane.xlu0 %725
    %v727 = vsel %vm283, %v710, 0.0
    %728 = vadd.xlane.f32.xlu0 %v727
    %v729 = vpop.xlane.xlu0 %728
    %v730 = vsel %vm283, %v712, 0.0
    %731 = vadd.xlane.f32.xlu0 %v730
    %v732 = vpop.xlane.xlu0 %731
    %v733 = vsel %vm283, %v714, 0.0
    %734 = vadd.xlane.f32.xlu0 %v733
    %v735 = vpop.xlane.xlu0 %734
    %v736 = vsel %vm283, %v716, 0.0
    %737 = vadd.xlane.f32.xlu0 %v736
    %v738 = vpop.xlane.xlu0 %737
    %v739 = vsel %vm283, %v718, 0.0
    %740 = vadd.xlane.f32.xlu0 %v739
    %v741 = vpop.xlane.xlu0 %740
    %v742 = vsel %vm283, %v720, 0.0
    %743 = vadd.xlane.f32.xlu0 %v742
    %v744 = vpop.xlane.xlu0 %743
    %v745 = vpack.c.bf16 %v706, %v706
    %v746 = vpack.c.bf16 %v708, %v708
    %v747 = vpack.c.bf16 %v710, %v710
    %v748 = vpack.c.bf16 %v712, %v712
    %v749 = vpack.c.bf16 %v714, %v714
    %v750 = vpack.c.bf16 %v716, %v716
    %v751 = vpack.c.bf16 %v718, %v718
    %v752 = vpack.c.bf16 %v720, %v720
    %753 = vrot.lane.b32.xlu0 %v272, 64
    %v754 = vpop.permute.xlu0 %753
    %v756 = vsel %vm283, %v745, 0
    %vm758 = vcmask 1043456
    %v760 = vsel %vm758, %v754, 0
    %762 = vmatprep.subr.bf16.mxu0 0
    %763 = vmatpush1.bf16.msra.mxu0 0
    %764 = vmatprep.subr.bf16.mxu0 0
    %765 = vmatpush1.bf16.msra.mxu0 0
    %766 = vmatprep.subr.bf16.mxu0 0
    %767 = vmatpush1.bf16.msra.mxu0 0
    %768 = vmatprep.subr.bf16.mxu0 0
    %769 = vmatpush1.bf16.msra.mxu0 0
    %770 = vmatprep.subr.bf16.mxu0 0
    %771 = vmatpush1.bf16.msra.mxu0 0
    %772 = vmatprep.subr.bf16.mxu0 0
    %773 = vmatpush1.bf16.msra.mxu0 0
    %774 = vmatprep.subr.bf16.mxu0 0
    %775 = vmatpush1.bf16.msra.mxu0 0
    %776 = vmatprep.subr.bf16.mxu0 0
    %777 = vmatpush1.bf16.msra.mxu0 %v760
    %778 = vmatprep.subr.bf16.mxu0 0
    %779 = vmatpush2.bf16.msra.mxu0 0
    %780 = vmatprep.subr.bf16.mxu0 0
    %781 = vmatpush2.bf16.msra.mxu0 0
    %782 = vmatprep.subr.bf16.mxu0 0
    %783 = vmatpush2.bf16.msra.mxu0 0
    %784 = vmatprep.subr.bf16.mxu0 0
    %785 = vmatpush2.bf16.msra.mxu0 0
    %786 = vmatprep.subr.bf16.mxu0 0
    %787 = vmatpush2.bf16.msra.mxu0 0
    %788 = vmatprep.subr.bf16.mxu0 0
    %789 = vmatpush2.bf16.msra.mxu0 0
    %790 = vmatprep.subr.bf16.mxu0 0
    %791 = vmatpush2.bf16.msra.mxu0 0
    %792 = vmatprep.subr.bf16.mxu0 0
    %793 = vmatpush2.bf16.msra.mxu0 0
    %794 = vmatprep.mubr.bf16.mxu0 0
    %795 = vmatmul.mubr.bf16.gmra.mxu0 %v756
    %v796 = vpop.f32.mrf.mxu0
    %v797 = vadd.f32 0.0, %v796
    %v798 = vpop.f32.mrf.mxu0
    %v799 = vpop.f32.mrf.mxu0
    %v800 = vpop.f32.mrf.mxu0
    %801 = vdwg.mxu0
    %802 = vrot.lane.b32.xlu0 %v273, 64
    %v803 = vpop.permute.xlu0 %802
    %v805 = vsel %vm283, %v746, 0
    %v808 = vsel %vm758, %v803, 0
    %810 = vmatprep.subr.bf16.mxu0 0
    %811 = vmatpush1.bf16.msra.mxu0 0
    %812 = vmatprep.subr.bf16.mxu0 0
    %813 = vmatpush1.bf16.msra.mxu0 0
    %814 = vmatprep.subr.bf16.mxu0 0
    %815 = vmatpush1.bf16.msra.mxu0 0
    %816 = vmatprep.subr.bf16.mxu0 0
    %817 = vmatpush1.bf16.msra.mxu0 0
    %818 = vmatprep.subr.bf16.mxu0 0
    %819 = vmatpush1.bf16.msra.mxu0 0
    %820 = vmatprep.subr.bf16.mxu0 0
    %821 = vmatpush1.bf16.msra.mxu0 0
    %822 = vmatprep.subr.bf16.mxu0 0
    %823 = vmatpush1.bf16.msra.mxu0 0
    %824 = vmatprep.subr.bf16.mxu0 0
    %825 = vmatpush1.bf16.msra.mxu0 %v808
    %826 = vmatprep.subr.bf16.mxu0 0
    %827 = vmatpush2.bf16.msra.mxu0 0
    %828 = vmatprep.subr.bf16.mxu0 0
    %829 = vmatpush2.bf16.msra.mxu0 0
    %830 = vmatprep.subr.bf16.mxu0 0
    %831 = vmatpush2.bf16.msra.mxu0 0
    %832 = vmatprep.subr.bf16.mxu0 0
    %833 = vmatpush2.bf16.msra.mxu0 0
    %834 = vmatprep.subr.bf16.mxu0 0
    %835 = vmatpush2.bf16.msra.mxu0 0
    %836 = vmatprep.subr.bf16.mxu0 0
    %837 = vmatpush2.bf16.msra.mxu0 0
    %838 = vmatprep.subr.bf16.mxu0 0
    %839 = vmatpush2.bf16.msra.mxu0 0
    %840 = vmatprep.subr.bf16.mxu0 0
    %841 = vmatpush2.bf16.msra.mxu0 0
    %842 = vmatprep.mubr.bf16.mxu0 0
    %843 = vmatmul.mubr.bf16.gmra.mxu0 %v805
    %v844 = vpop.f32.mrf.mxu0
    %v845 = vadd.f32 0.0, %v844
    %v846 = vpop.f32.mrf.mxu0
    %v847 = vpop.f32.mrf.mxu0
    %v848 = vpop.f32.mrf.mxu0
    %849 = vdwg.mxu0
    %850 = vrot.lane.b32.xlu0 %v274, 64
    %v851 = vpop.permute.xlu0 %850
    %v853 = vsel %vm283, %v747, 0
    %v856 = vsel %vm758, %v851, 0
    %858 = vmatprep.subr.bf16.mxu0 0
    %859 = vmatpush1.bf16.msra.mxu0 0
    %860 = vmatprep.subr.bf16.mxu0 0
    %861 = vmatpush1.bf16.msra.mxu0 0
    %862 = vmatprep.subr.bf16.mxu0 0
    %863 = vmatpush1.bf16.msra.mxu0 0
    %864 = vmatprep.subr.bf16.mxu0 0
    %865 = vmatpush1.bf16.msra.mxu0 0
    %866 = vmatprep.subr.bf16.mxu0 0
    %867 = vmatpush1.bf16.msra.mxu0 0
    %868 = vmatprep.subr.bf16.mxu0 0
    %869 = vmatpush1.bf16.msra.mxu0 0
    %870 = vmatprep.subr.bf16.mxu0 0
    %871 = vmatpush1.bf16.msra.mxu0 0
    %872 = vmatprep.subr.bf16.mxu0 0
    %873 = vmatpush1.bf16.msra.mxu0 %v856
    %874 = vmatprep.subr.bf16.mxu0 0
    %875 = vmatpush2.bf16.msra.mxu0 0
    %876 = vmatprep.subr.bf16.mxu0 0
    %877 = vmatpush2.bf16.msra.mxu0 0
    %878 = vmatprep.subr.bf16.mxu0 0
    %879 = vmatpush2.bf16.msra.mxu0 0
    %880 = vmatprep.subr.bf16.mxu0 0
    %881 = vmatpush2.bf16.msra.mxu0 0
    %882 = vmatprep.subr.bf16.mxu0 0
    %883 = vmatpush2.bf16.msra.mxu0 0
    %884 = vmatprep.subr.bf16.mxu0 0
    %885 = vmatpush2.bf16.msra.mxu0 0
    %886 = vmatprep.subr.bf16.mxu0 0
    %887 = vmatpush2.bf16.msra.mxu0 0
    %888 = vmatprep.subr.bf16.mxu0 0
    %889 = vmatpush2.bf16.msra.mxu0 0
    %890 = vmatprep.mubr.bf16.mxu0 0
    %891 = vmatmul.mubr.bf16.gmra.mxu0 %v853
    %v892 = vpop.f32.mrf.mxu0
    %v893 = vadd.f32 0.0, %v892
    %v894 = vpop.f32.mrf.mxu0
    %v895 = vpop.f32.mrf.mxu0
    %v896 = vpop.f32.mrf.mxu0
    %897 = vdwg.mxu0
    %898 = vrot.lane.b32.xlu0 %v275, 64
    %v899 = vpop.permute.xlu0 %898
    %v901 = vsel %vm283, %v748, 0
    %v904 = vsel %vm758, %v899, 0
    %906 = vmatprep.subr.bf16.mxu0 0
    %907 = vmatpush1.bf16.msra.mxu0 0
    %908 = vmatprep.subr.bf16.mxu0 0
    %909 = vmatpush1.bf16.msra.mxu0 0
    %910 = vmatprep.subr.bf16.mxu0 0
    %911 = vmatpush1.bf16.msra.mxu0 0
    %912 = vmatprep.subr.bf16.mxu0 0
    %913 = vmatpush1.bf16.msra.mxu0 0
    %914 = vmatprep.subr.bf16.mxu0 0
    %915 = vmatpush1.bf16.msra.mxu0 0
    %916 = vmatprep.subr.bf16.mxu0 0
    %917 = vmatpush1.bf16.msra.mxu0 0
    %918 = vmatprep.subr.bf16.mxu0 0
    %919 = vmatpush1.bf16.msra.mxu0 0
    %920 = vmatprep.subr.bf16.mxu0 0
    %921 = vmatpush1.bf16.msra.mxu0 %v904
    %922 = vmatprep.subr.bf16.mxu0 0
    %923 = vmatpush2.bf16.msra.mxu0 0
    %924 = vmatprep.subr.bf16.mxu0 0
    %925 = vmatpush2.bf16.msra.mxu0 0
    %926 = vmatprep.subr.bf16.mxu0 0
    %927 = vmatpush2.bf16.msra.mxu0 0
    %928 = vmatprep.subr.bf16.mxu0 0
    %929 = vmatpush2.bf16.msra.mxu0 0
    %930 = vmatprep.subr.bf16.mxu0 0
    %931 = vmatpush2.bf16.msra.mxu0 0
    %932 = vmatprep.subr.bf16.mxu0 0
    %933 = vmatpush2.bf16.msra.mxu0 0
    %934 = vmatprep.subr.bf16.mxu0 0
    %935 = vmatpush2.bf16.msra.mxu0 0
    %936 = vmatprep.subr.bf16.mxu0 0
    %937 = vmatpush2.bf16.msra.mxu0 0
    %938 = vmatprep.mubr.bf16.mxu0 0
    %939 = vmatmul.mubr.bf16.gmra.mxu0 %v901
    %v940 = vpop.f32.mrf.mxu0
    %v941 = vadd.f32 0.0, %v940
    %v942 = vpop.f32.mrf.mxu0
    %v943 = vpop.f32.mrf.mxu0
    %v944 = vpop.f32.mrf.mxu0
    %945 = vdwg.mxu0
    %946 = vrot.lane.b32.xlu0 %v276, 64
    %v947 = vpop.permute.xlu0 %946
    %v949 = vsel %vm283, %v749, 0
    %v952 = vsel %vm758, %v947, 0
    %954 = vmatprep.subr.bf16.mxu0 0
    %955 = vmatpush1.bf16.msra.mxu0 0
    %956 = vmatprep.subr.bf16.mxu0 0
    %957 = vmatpush1.bf16.msra.mxu0 0
    %958 = vmatprep.subr.bf16.mxu0 0
    %959 = vmatpush1.bf16.msra.mxu0 0
    %960 = vmatprep.subr.bf16.mxu0 0
    %961 = vmatpush1.bf16.msra.mxu0 0
    %962 = vmatprep.subr.bf16.mxu0 0
    %963 = vmatpush1.bf16.msra.mxu0 0
    %964 = vmatprep.subr.bf16.mxu0 0
    %965 = vmatpush1.bf16.msra.mxu0 0
    %966 = vmatprep.subr.bf16.mxu0 0
    %967 = vmatpush1.bf16.msra.mxu0 0
    %968 = vmatprep.subr.bf16.mxu0 0
    %969 = vmatpush1.bf16.msra.mxu0 %v952
    %970 = vmatprep.subr.bf16.mxu0 0
    %971 = vmatpush2.bf16.msra.mxu0 0
    %972 = vmatprep.subr.bf16.mxu0 0
    %973 = vmatpush2.bf16.msra.mxu0 0
    %974 = vmatprep.subr.bf16.mxu0 0
    %975 = vmatpush2.bf16.msra.mxu0 0
    %976 = vmatprep.subr.bf16.mxu0 0
    %977 = vmatpush2.bf16.msra.mxu0 0
    %978 = vmatprep.subr.bf16.mxu0 0
    %979 = vmatpush2.bf16.msra.mxu0 0
    %980 = vmatprep.subr.bf16.mxu0 0
    %981 = vmatpush2.bf16.msra.mxu0 0
    %982 = vmatprep.subr.bf16.mxu0 0
    %983 = vmatpush2.bf16.msra.mxu0 0
    %984 = vmatprep.subr.bf16.mxu0 0
    %985 = vmatpush2.bf16.msra.mxu0 0
    %986 = vmatprep.mubr.bf16.mxu0 0
    %987 = vmatmul.mubr.bf16.gmra.mxu0 %v949
    %v988 = vpop.f32.mrf.mxu0
    %v989 = vadd.f32 0.0, %v988
    %v990 = vpop.f32.mrf.mxu0
    %v991 = vpop.f32.mrf.mxu0
    %v992 = vpop.f32.mrf.mxu0
    %993 = vdwg.mxu0
    %994 = vrot.lane.b32.xlu0 %v277, 64
    %v995 = vpop.permute.xlu0 %994
    %v997 = vsel %vm283, %v750, 0
    %v1000 = vsel %vm758, %v995, 0
    %1002 = vmatprep.subr.bf16.mxu0 0
    %1003 = vmatpush1.bf16.msra.mxu0 0
    %1004 = vmatprep.subr.bf16.mxu0 0
    %1005 = vmatpush1.bf16.msra.mxu0 0
    %1006 = vmatprep.subr.bf16.mxu0 0
    %1007 = vmatpush1.bf16.msra.mxu0 0
    %1008 = vmatprep.subr.bf16.mxu0 0
    %1009 = vmatpush1.bf16.msra.mxu0 0
    %1010 = vmatprep.subr.bf16.mxu0 0
    %1011 = vmatpush1.bf16.msra.mxu0 0
    %1012 = vmatprep.subr.bf16.mxu0 0
    %1013 = vmatpush1.bf16.msra.mxu0 0
    %1014 = vmatprep.subr.bf16.mxu0 0
    %1015 = vmatpush1.bf16.msra.mxu0 0
    %1016 = vmatprep.subr.bf16.mxu0 0
    %1017 = vmatpush1.bf16.msra.mxu0 %v1000
    %1018 = vmatprep.subr.bf16.mxu0 0
    %1019 = vmatpush2.bf16.msra.mxu0 0
    %1020 = vmatprep.subr.bf16.mxu0 0
    %1021 = vmatpush2.bf16.msra.mxu0 0
    %1022 = vmatprep.subr.bf16.mxu0 0
    %1023 = vmatpush2.bf16.msra.mxu0 0
    %1024 = vmatprep.subr.bf16.mxu0 0
    %1025 = vmatpush2.bf16.msra.mxu0 0
    %1026 = vmatprep.subr.bf16.mxu0 0
    %1027 = vmatpush2.bf16.msra.mxu0 0
    %1028 = vmatprep.subr.bf16.mxu0 0
    %1029 = vmatpush2.bf16.msra.mxu0 0
    %1030 = vmatprep.subr.bf16.mxu0 0
    %1031 = vmatpush2.bf16.msra.mxu0 0
    %1032 = vmatprep.subr.bf16.mxu0 0
    %1033 = vmatpush2.bf16.msra.mxu0 0
    %1034 = vmatprep.mubr.bf16.mxu0 0
    %1035 = vmatmul.mubr.bf16.gmra.mxu0 %v997
    %v1036 = vpop.f32.mrf.mxu0
    %v1037 = vadd.f32 0.0, %v1036
    %v1038 = vpop.f32.mrf.mxu0
    %v1039 = vpop.f32.mrf.mxu0
    %v1040 = vpop.f32.mrf.mxu0
    %1041 = vdwg.mxu0
    %1042 = vrot.lane.b32.xlu0 %v278, 64
    %v1043 = vpop.permute.xlu0 %1042
    %v1045 = vsel %vm283, %v751, 0
    %v1048 = vsel %vm758, %v1043, 0
    %1050 = vmatprep.subr.bf16.mxu0 0
    %1051 = vmatpush1.bf16.msra.mxu0 0
    %1052 = vmatprep.subr.bf16.mxu0 0
    %1053 = vmatpush1.bf16.msra.mxu0 0
    %1054 = vmatprep.subr.bf16.mxu0 0
    %1055 = vmatpush1.bf16.msra.mxu0 0
    %1056 = vmatprep.subr.bf16.mxu0 0
    %1057 = vmatpush1.bf16.msra.mxu0 0
    %1058 = vmatprep.subr.bf16.mxu0 0
    %1059 = vmatpush1.bf16.msra.mxu0 0
    %1060 = vmatprep.subr.bf16.mxu0 0
    %1061 = vmatpush1.bf16.msra.mxu0 0
    %1062 = vmatprep.subr.bf16.mxu0 0
    %1063 = vmatpush1.bf16.msra.mxu0 0
    %1064 = vmatprep.subr.bf16.mxu0 0
    %1065 = vmatpush1.bf16.msra.mxu0 %v1048
    %1066 = vmatprep.subr.bf16.mxu0 0
    %1067 = vmatpush2.bf16.msra.mxu0 0
    %1068 = vmatprep.subr.bf16.mxu0 0
    %1069 = vmatpush2.bf16.msra.mxu0 0
    %1070 = vmatprep.subr.bf16.mxu0 0
    %1071 = vmatpush2.bf16.msra.mxu0 0
    %1072 = vmatprep.subr.bf16.mxu0 0
    %1073 = vmatpush2.bf16.msra.mxu0 0
    %1074 = vmatprep.subr.bf16.mxu0 0
    %1075 = vmatpush2.bf16.msra.mxu0 0
    %1076 = vmatprep.subr.bf16.mxu0 0
    %1077 = vmatpush2.bf16.msra.mxu0 0
    %1078 = vmatprep.subr.bf16.mxu0 0
    %1079 = vmatpush2.bf16.msra.mxu0 0
    %1080 = vmatprep.subr.bf16.mxu0 0
    %1081 = vmatpush2.bf16.msra.mxu0 0
    %1082 = vmatprep.mubr.bf16.mxu0 0
    %1083 = vmatmul.mubr.bf16.gmra.mxu0 %v1045
    %v1084 = vpop.f32.mrf.mxu0
    %v1085 = vadd.f32 0.0, %v1084
    %v1086 = vpop.f32.mrf.mxu0
    %v1087 = vpop.f32.mrf.mxu0
    %v1088 = vpop.f32.mrf.mxu0
    %1089 = vdwg.mxu0
    %1090 = vrot.lane.b32.xlu0 %v279, 64
    %v1091 = vpop.permute.xlu0 %1090
    %v1093 = vsel %vm283, %v752, 0
    %v1096 = vsel %vm758, %v1091, 0
    %1098 = vmatprep.subr.bf16.mxu0 0
    %1099 = vmatpush1.bf16.msra.mxu0 0
    %1100 = vmatprep.subr.bf16.mxu0 0
    %1101 = vmatpush1.bf16.msra.mxu0 0
    %1102 = vmatprep.subr.bf16.mxu0 0
    %1103 = vmatpush1.bf16.msra.mxu0 0
    %1104 = vmatprep.subr.bf16.mxu0 0
    %1105 = vmatpush1.bf16.msra.mxu0 0
    %1106 = vmatprep.subr.bf16.mxu0 0
    %1107 = vmatpush1.bf16.msra.mxu0 0
    %1108 = vmatprep.subr.bf16.mxu0 0
    %1109 = vmatpush1.bf16.msra.mxu0 0
    %1110 = vmatprep.subr.bf16.mxu0 0
    %1111 = vmatpush1.bf16.msra.mxu0 0
    %1112 = vmatprep.subr.bf16.mxu0 0
    %1113 = vmatpush1.bf16.msra.mxu0 %v1096
    %1114 = vmatprep.subr.bf16.mxu0 0
    %1115 = vmatpush2.bf16.msra.mxu0 0
    %1116 = vmatprep.subr.bf16.mxu0 0
    %1117 = vmatpush2.bf16.msra.mxu0 0
    %1118 = vmatprep.subr.bf16.mxu0 0
    %1119 = vmatpush2.bf16.msra.mxu0 0
    %1120 = vmatprep.subr.bf16.mxu0 0
    %1121 = vmatpush2.bf16.msra.mxu0 0
    %1122 = vmatprep.subr.bf16.mxu0 0
    %1123 = vmatpush2.bf16.msra.mxu0 0
    %1124 = vmatprep.subr.bf16.mxu0 0
    %1125 = vmatpush2.bf16.msra.mxu0 0
    %1126 = vmatprep.subr.bf16.mxu0 0
    %1127 = vmatpush2.bf16.msra.mxu0 0
    %1128 = vmatprep.subr.bf16.mxu0 0
    %1129 = vmatpush2.bf16.msra.mxu0 0
    %1130 = vmatprep.mubr.bf16.mxu0 0
    %1131 = vmatmul.mubr.bf16.gmra.mxu0 %v1093
    %v1132 = vpop.f32.mrf.mxu0
    %v1133 = vadd.f32 0.0, %v1132
    %v1134 = vpop.f32.mrf.mxu0
    %v1135 = vpop.f32.mrf.mxu0
    %v1136 = vpop.f32.mrf.mxu0
    %1137 = vdwg.mxu0
    %v1138 = vrcp.pop %v723
    %v1139 = vrcp.pop %v726
    %v1140 = vrcp.pop %v729
    %v1141 = vrcp.pop %v732
    %v1142 = vrcp.pop %v735
    %v1143 = vrcp.pop %v738
    %v1144 = vrcp.pop %v741
    %v1145 = vrcp.pop %v744
    %v1146 = vmul.f32 %v797, %v1138
    %v1147 = vmul.f32 %v845, %v1139
    %v1148 = vmul.f32 %v893, %v1140
    %v1149 = vmul.f32 %v941, %v1141
    %v1150 = vmul.f32 %v989, %v1142
    %v1151 = vmul.f32 %v1037, %v1143
    %v1152 = vmul.f32 %v1085, %v1144
    %v1153 = vmul.f32 %v1133, %v1145
    %v1154 = vpack.c.bf16 %v1147, %v1146
    %v1155 = vpack.c.bf16 %v1149, %v1148
    %v1156 = vpack.c.bf16 %v1151, %v1150
    %v1157 = vpack.c.bf16 %v1153, %v1152
    %v1162 = vunpack.c.l.b16 %v1154
    %v1163 = vunpack.c.h.b16 %v1154
    %v1164 = vunpack.c.l.b16 %v1155
    %v1165 = vunpack.c.h.b16 %v1155
    %v1166 = vunpack.c.l.b16 %v1156
    %v1167 = vunpack.c.h.b16 %v1156
    %v1168 = vunpack.c.l.b16 %v1157
    %v1169 = vunpack.c.h.b16 %v1157
    %v1170 = vpack.c.b16 %v1162, %v1162
    %v1171 = vpack.c.b16 %v1163, %v1163
    %v1172 = vpack.c.b16 %v1164, %v1164
    %v1173 = vpack.c.b16 %v1165, %v1165
    %v1174 = vpack.c.b16 %v1166, %v1166
    %v1175 = vpack.c.b16 %v1167, %v1167
    %v1176 = vpack.c.b16 %v1168, %v1168
    %v1177 = vpack.c.b16 %v1169, %v1169
    %vm1186 = vcmask 60416
    %1187 = vst.msk [vmem:[#allocation2] sm:$0xf] %vm1186, %v1170
    %1188 = vst.msk [vmem:[#allocation2 + $0x4] sm:$0xf] %vm1186, %v1171
    %1189 = vst.msk [vmem:[#allocation2 + $0x8] sm:$0xf] %vm1186, %v1172
    %1190 = vst.msk [vmem:[#allocation2 + $0xc] sm:$0xf] %vm1186, %v1173
    %1191 = vst.msk [vmem:[#allocation2 + $0x10] sm:$0xf] %vm1186, %v1174
    %1192 = vst.msk [vmem:[#allocation2 + $0x14] sm:$0xf] %vm1186, %v1175
    %1193 = vst.msk [vmem:[#allocation2 + $0x18] sm:$0xf] %vm1186, %v1176
    %1194 = vst.msk [vmem:[#allocation2 + $0x1c] sm:$0xf] %vm1186, %v1177
    %1195 = vrot.lane.b32.xlu0 %v272, 120
    %v1196 = vpop.permute.xlu0 %1195
    %1197 = vrot.lane.b32.xlu0 %v272, 88
    %v1198 = vpop.permute.xlu0 %1197
    %v1200 = vsel %vm283, %v1196, 0
    %v1203 = vsel %vm283, %v1198, 0
    %1205 = vmatprep.subr.bf16.mxu0 0
    %1206 = vmatpush1.bf16.xpose.msra.mxu0 0
    %1207 = vmatprep.subr.bf16.mxu0 0
    %1208 = vmatpush1.bf16.xpose.msra.mxu0 0
    %1209 = vmatprep.subr.bf16.mxu0 0
    %1210 = vmatpush1.bf16.xpose.msra.mxu0 0
    %1211 = vmatprep.subr.bf16.mxu0 0
    %1212 = vmatpush1.bf16.xpose.msra.mxu0 0
    %1213 = vmatprep.subr.bf16.mxu0 0
    %1214 = vmatpush1.bf16.xpose.msra.mxu0 0
    %1215 = vmatprep.subr.bf16.mxu0 0
    %1216 = vmatpush1.bf16.xpose.msra.mxu0 0
    %1217 = vmatprep.subr.bf16.mxu0 0
    %1218 = vmatpush1.bf16.xpose.msra.mxu0 0
    %1219 = vmatprep.subr.bf16.mxu0 0
    %1220 = vmatpush1.bf16.xpose.msra.mxu0 %v1203
    %1221 = vmatprep.subr.bf16.mxu0 0
    %1222 = vmatpush2.bf16.xpose.msra.mxu0 0
    %1223 = vmatprep.subr.bf16.mxu0 0
    %1224 = vmatpush2.bf16.xpose.msra.mxu0 0
    %1225 = vmatprep.subr.bf16.mxu0 0
    %1226 = vmatpush2.bf16.xpose.msra.mxu0 0
    %1227 = vmatprep.subr.bf16.mxu0 0
    %1228 = vmatpush2.bf16.xpose.msra.mxu0 0
    %1229 = vmatprep.subr.bf16.mxu0 0
    %1230 = vmatpush2.bf16.xpose.msra.mxu0 0
    %1231 = vmatprep.subr.bf16.mxu0 0
    %1232 = vmatpush2.bf16.xpose.msra.mxu0 0
    %1233 = vmatprep.subr.bf16.mxu0 0
    %1234 = vmatpush2.bf16.xpose.msra.mxu0 0
    %1235 = vmatprep.subr.bf16.mxu0 0
    %1236 = vmatpush2.bf16.xpose.msra.mxu0 0
    %1237 = vmatprep.mubr.bf16.mxu0 0
    %1238 = vmatmul.mubr.bf16.gmra.mxu0 %v1200
    %v1239 = vpop.f32.mrf.mxu0
    %v1240 = vadd.f32 0.0, %v1239
    %v1241 = vpop.f32.mrf.mxu0
    %v1242 = vpop.f32.mrf.mxu0
    %v1243 = vpop.f32.mrf.mxu0
    %1244 = vdwg.mxu0
    %1245 = vrot.lane.b32.xlu0 %v273, 120
    %v1246 = vpop.permute.xlu0 %1245
    %1247 = vrot.lane.b32.xlu0 %v273, 88
    %v1248 = vpop.permute.xlu0 %1247
    %v1250 = vsel %vm283, %v1246, 0
    %v1253 = vsel %vm283, %v1248, 0
    %1255 = vmatprep.subr.bf16.mxu0 0
    %1256 = vmatpush1.bf16.xpose.msra.mxu0 0
    %1257 = vmatprep.subr.bf16.mxu0 0
    %1258 = vmatpush1.bf16.xpose.msra.mxu0 0
    %1259 = vmatprep.subr.bf16.mxu0 0
    %1260 = vmatpush1.bf16.xpose.msra.mxu0 0
    %1261 = vmatprep.subr.bf16.mxu0 0
    %1262 = vmatpush1.bf16.xpose.msra.mxu0 0
    %1263 = vmatprep.subr.bf16.mxu0 0
    %1264 = vmatpush1.bf16.xpose.msra.mxu0 0
    %1265 = vmatprep.subr.bf16.mxu0 0
    %1266 = vmatpush1.bf16.xpose.msra.mxu0 0
    %1267 = vmatprep.subr.bf16.mxu0 0
    %1268 = vmatpush1.bf16.xpose.msra.mxu0 0
    %1269 = vmatprep.subr.bf16.mxu0 0
    %1270 = vmatpush1.bf16.xpose.msra.mxu0 %v1253
    %1271 = vmatprep.subr.bf16.mxu0 0
    %1272 = vmatpush2.bf16.xpose.msra.mxu0 0
    %1273 = vmatprep.subr.bf16.mxu0 0
    %1274 = vmatpush2.bf16.xpose.msra.mxu0 0
    %1275 = vmatprep.subr.bf16.mxu0 0
    %1276 = vmatpush2.bf16.xpose.msra.mxu0 0
    %1277 = vmatprep.subr.bf16.mxu0 0
    %1278 = vmatpush2.bf16.xpose.msra.mxu0 0
    %1279 = vmatprep.subr.bf16.mxu0 0
    %1280 = vmatpush2.bf16.xpose.msra.mxu0 0
    %1281 = vmatprep.subr.bf16.mxu0 0
    %1282 = vmatpush2.bf16.xpose.msra.mxu0 0
    %1283 = vmatprep.subr.bf16.mxu0 0
    %1284 = vmatpush2.bf16.xpose.msra.mxu0 0
    %1285 = vmatprep.subr.bf16.mxu0 0
    %1286 = vmatpush2.bf16.xpose.msra.mxu0 0
    %1287 = vmatprep.mubr.bf16.mxu0 0
    %1288 = vmatmul.mubr.bf16.gmra.mxu0 %v1250
    %v1289 = vpop.f32.mrf.mxu0
    %v1290 = vadd.f32 0.0, %v1289
    %v1291 = vpop.f32.mrf.mxu0
    %v1292 = vpop.f32.mrf.mxu0
    %v1293 = vpop.f32.mrf.mxu0
    %1294 = vdwg.mxu0
    %1295 = vrot.lane.b32.xlu0 %v274, 120
    %v1296 = vpop.permute.xlu0 %1295
    %1297 = vrot.lane.b32.xlu0 %v274, 88
    %v1298 = vpop.permute.xlu0 %1297
    %v1300 = vsel %vm283, %v1296, 0
    %v1303 = vsel %vm283, %v1298, 0
    %1305 = vmatprep.subr.bf16.mxu0 0
    %1306 = vmatpush1.bf16.xpose.msra.mxu0 0
    %1307 = vmatprep.subr.bf16.mxu0 0
    %1308 = vmatpush1.bf16.xpose.msra.mxu0 0
    %1309 = vmatprep.subr.bf16.mxu0 0
    %1310 = vmatpush1.bf16.xpose.msra.mxu0 0
    %1311 = vmatprep.subr.bf16.mxu0 0
    %1312 = vmatpush1.bf16.xpose.msra.mxu0 0
    %1313 = vmatprep.subr.bf16.mxu0 0
    %1314 = vmatpush1.bf16.xpose.msra.mxu0 0
    %1315 = vmatprep.subr.bf16.mxu0 0
    %1316 = vmatpush1.bf16.xpose.msra.mxu0 0
    %1317 = vmatprep.subr.bf16.mxu0 0
    %1318 = vmatpush1.bf16.xpose.msra.mxu0 0
    %1319 = vmatprep.subr.bf16.mxu0 0
    %1320 = vmatpush1.bf16.xpose.msra.mxu0 %v1303
    %1321 = vmatprep.subr.bf16.mxu0 0
    %1322 = vmatpush2.bf16.xpose.msra.mxu0 0
    %1323 = vmatprep.subr.bf16.mxu0 0
    %1324 = vmatpush2.bf16.xpose.msra.mxu0 0
    %1325 = vmatprep.subr.bf16.mxu0 0
    %1326 = vmatpush2.bf16.xpose.msra.mxu0 0
    %1327 = vmatprep.subr.bf16.mxu0 0
    %1328 = vmatpush2.bf16.xpose.msra.mxu0 0
    %1329 = vmatprep.subr.bf16.mxu0 0
    %1330 = vmatpush2.bf16.xpose.msra.mxu0 0
    %1331 = vmatprep.subr.bf16.mxu0 0
    %1332 = vmatpush2.bf16.xpose.msra.mxu0 0
    %1333 = vmatprep.subr.bf16.mxu0 0
    %1334 = vmatpush2.bf16.xpose.msra.mxu0 0
    %1335 = vmatprep.subr.bf16.mxu0 0
    %1336 = vmatpush2.bf16.xpose.msra.mxu0 0
    %1337 = vmatprep.mubr.bf16.mxu0 0
    %1338 = vmatmul.mubr.bf16.gmra.mxu0 %v1300
    %v1339 = vpop.f32.mrf.mxu0
    %v1340 = vadd.f32 0.0, %v1339
    %v1341 = vpop.f32.mrf.mxu0
    %v1342 = vpop.f32.mrf.mxu0
    %v1343 = vpop.f32.mrf.mxu0
    %1344 = vdwg.mxu0
    %1345 = vrot.lane.b32.xlu0 %v275, 120
    %v1346 = vpop.permute.xlu0 %1345
    %1347 = vrot.lane.b32.xlu0 %v275, 88
    %v1348 = vpop.permute.xlu0 %1347
    %v1350 = vsel %vm283, %v1346, 0
    %v1353 = vsel %vm283, %v1348, 0
    %1355 = vmatprep.subr.bf16.mxu0 0
    %1356 = vmatpush1.bf16.xpose.msra.mxu0 0
    %1357 = vmatprep.subr.bf16.mxu0 0
    %1358 = vmatpush1.bf16.xpose.msra.mxu0 0
    %1359 = vmatprep.subr.bf16.mxu0 0
    %1360 = vmatpush1.bf16.xpose.msra.mxu0 0
    %1361 = vmatprep.subr.bf16.mxu0 0
    %1362 = vmatpush1.bf16.xpose.msra.mxu0 0
    %1363 = vmatprep.subr.bf16.mxu0 0
    %1364 = vmatpush1.bf16.xpose.msra.mxu0 0
    %1365 = vmatprep.subr.bf16.mxu0 0
    %1366 = vmatpush1.bf16.xpose.msra.mxu0 0
    %1367 = vmatprep.subr.bf16.mxu0 0
    %1368 = vmatpush1.bf16.xpose.msra.mxu0 0
    %1369 = vmatprep.subr.bf16.mxu0 0
    %1370 = vmatpush1.bf16.xpose.msra.mxu0 %v1353
    %1371 = vmatprep.subr.bf16.mxu0 0
    %1372 = vmatpush2.bf16.xpose.msra.mxu0 0
    %1373 = vmatprep.subr.bf16.mxu0 0
    %1374 = vmatpush2.bf16.xpose.msra.mxu0 0
    %1375 = vmatprep.subr.bf16.mxu0 0
    %1376 = vmatpush2.bf16.xpose.msra.mxu0 0
    %1377 = vmatprep.subr.bf16.mxu0 0
    %1378 = vmatpush2.bf16.xpose.msra.mxu0 0
    %1379 = vmatprep.subr.bf16.mxu0 0
    %1380 = vmatpush2.bf16.xpose.msra.mxu0 0
    %1381 = vmatprep.subr.bf16.mxu0 0
    %1382 = vmatpush2.bf16.xpose.msra.mxu0 0
    %1383 = vmatprep.subr.bf16.mxu0 0
    %1384 = vmatpush2.bf16.xpose.msra.mxu0 0
    %1385 = vmatprep.subr.bf16.mxu0 0
    %1386 = vmatpush2.bf16.xpose.msra.mxu0 0
    %1387 = vmatprep.mubr.bf16.mxu0 0
    %1388 = vmatmul.mubr.bf16.gmra.mxu0 %v1350
    %v1389 = vpop.f32.mrf.mxu0
    %v1390 = vadd.f32 0.0, %v1389
    %v1391 = vpop.f32.mrf.mxu0
    %v1392 = vpop.f32.mrf.mxu0
    %v1393 = vpop.f32.mrf.mxu0
    %1394 = vdwg.mxu0
    %1395 = vrot.lane.b32.xlu0 %v276, 120
    %v1396 = vpop.permute.xlu0 %1395
    %1397 = vrot.lane.b32.xlu0 %v276, 88
    %v1398 = vpop.permute.xlu0 %1397
    %v1400 = vsel %vm283, %v1396, 0
    %v1403 = vsel %vm283, %v1398, 0
    %1405 = vmatprep.subr.bf16.mxu0 0
    %1406 = vmatpush1.bf16.xpose.msra.mxu0 0
    %1407 = vmatprep.subr.bf16.mxu0 0
    %1408 = vmatpush1.bf16.xpose.msra.mxu0 0
    %1409 = vmatprep.subr.bf16.mxu0 0
    %1410 = vmatpush1.bf16.xpose.msra.mxu0 0
    %1411 = vmatprep.subr.bf16.mxu0 0
    %1412 = vmatpush1.bf16.xpose.msra.mxu0 0
    %1413 = vmatprep.subr.bf16.mxu0 0
    %1414 = vmatpush1.bf16.xpose.msra.mxu0 0
    %1415 = vmatprep.subr.bf16.mxu0 0
    %1416 = vmatpush1.bf16.xpose.msra.mxu0 0
    %1417 = vmatprep.subr.bf16.mxu0 0
    %1418 = vmatpush1.bf16.xpose.msra.mxu0 0
    %1419 = vmatprep.subr.bf16.mxu0 0
    %1420 = vmatpush1.bf16.xpose.msra.mxu0 %v1403
    %1421 = vmatprep.subr.bf16.mxu0 0
    %1422 = vmatpush2.bf16.xpose.msra.mxu0 0
    %1423 = vmatprep.subr.bf16.mxu0 0
    %1424 = vmatpush2.bf16.xpose.msra.mxu0 0
    %1425 = vmatprep.subr.bf16.mxu0 0
    %1426 = vmatpush2.bf16.xpose.msra.mxu0 0
    %1427 = vmatprep.subr.bf16.mxu0 0
    %1428 = vmatpush2.bf16.xpose.msra.mxu0 0
    %1429 = vmatprep.subr.bf16.mxu0 0
    %1430 = vmatpush2.bf16.xpose.msra.mxu0 0
    %1431 = vmatprep.subr.bf16.mxu0 0
    %1432 = vmatpush2.bf16.xpose.msra.mxu0 0
    %1433 = vmatprep.subr.bf16.mxu0 0
    %1434 = vmatpush2.bf16.xpose.msra.mxu0 0
    %1435 = vmatprep.subr.bf16.mxu0 0
    %1436 = vmatpush2.bf16.xpose.msra.mxu0 0
    %1437 = vmatprep.mubr.bf16.mxu0 0
    %1438 = vmatmul.mubr.bf16.gmra.mxu0 %v1400
    %v1439 = vpop.f32.mrf.mxu0
    %v1440 = vadd.f32 0.0, %v1439
    %v1441 = vpop.f32.mrf.mxu0
    %v1442 = vpop.f32.mrf.mxu0
    %v1443 = vpop.f32.mrf.mxu0
    %1444 = vdwg.mxu0
    %1445 = vrot.lane.b32.xlu0 %v277, 120
    %v1446 = vpop.permute.xlu0 %1445
    %1447 = vrot.lane.b32.xlu0 %v277, 88
    %v1448 = vpop.permute.xlu0 %1447
    %v1450 = vsel %vm283, %v1446, 0
    %v1453 = vsel %vm283, %v1448, 0
    %1455 = vmatprep.subr.bf16.mxu0 0
    %1456 = vmatpush1.bf16.xpose.msra.mxu0 0
    %1457 = vmatprep.subr.bf16.mxu0 0
    %1458 = vmatpush1.bf16.xpose.msra.mxu0 0
    %1459 = vmatprep.subr.bf16.mxu0 0
    %1460 = vmatpush1.bf16.xpose.msra.mxu0 0
    %1461 = vmatprep.subr.bf16.mxu0 0
    %1462 = vmatpush1.bf16.xpose.msra.mxu0 0
    %1463 = vmatprep.subr.bf16.mxu0 0
    %1464 = vmatpush1.bf16.xpose.msra.mxu0 0
    %1465 = vmatprep.subr.bf16.mxu0 0
    %1466 = vmatpush1.bf16.xpose.msra.mxu0 0
    %1467 = vmatprep.subr.bf16.mxu0 0
    %1468 = vmatpush1.bf16.xpose.msra.mxu0 0
    %1469 = vmatprep.subr.bf16.mxu0 0
    %1470 = vmatpush1.bf16.xpose.msra.mxu0 %v1453
    %1471 = vmatprep.subr.bf16.mxu0 0
    %1472 = vmatpush2.bf16.xpose.msra.mxu0 0
    %1473 = vmatprep.subr.bf16.mxu0 0
    %1474 = vmatpush2.bf16.xpose.msra.mxu0 0
    %1475 = vmatprep.subr.bf16.mxu0 0
    %1476 = vmatpush2.bf16.xpose.msra.mxu0 0
    %1477 = vmatprep.subr.bf16.mxu0 0
    %1478 = vmatpush2.bf16.xpose.msra.mxu0 0
    %1479 = vmatprep.subr.bf16.mxu0 0
    %1480 = vmatpush2.bf16.xpose.msra.mxu0 0
    %1481 = vmatprep.subr.bf16.mxu0 0
    %1482 = vmatpush2.bf16.xpose.msra.mxu0 0
    %1483 = vmatprep.subr.bf16.mxu0 0
    %1484 = vmatpush2.bf16.xpose.msra.mxu0 0
    %1485 = vmatprep.subr.bf16.mxu0 0
    %1486 = vmatpush2.bf16.xpose.msra.mxu0 0
    %1487 = vmatprep.mubr.bf16.mxu0 0
    %1488 = vmatmul.mubr.bf16.gmra.mxu0 %v1450
    %v1489 = vpop.f32.mrf.mxu0
    %v1490 = vadd.f32 0.0, %v1489
    %v1491 = vpop.f32.mrf.mxu0
    %v1492 = vpop.f32.mrf.mxu0
    %v1493 = vpop.f32.mrf.mxu0
    %1494 = vdwg.mxu0
    %1495 = vrot.lane.b32.xlu0 %v278, 120
    %v1496 = vpop.permute.xlu0 %1495
    %1497 = vrot.lane.b32.xlu0 %v278, 88
    %v1498 = vpop.permute.xlu0 %1497
    %v1500 = vsel %vm283, %v1496, 0
    %v1503 = vsel %vm283, %v1498, 0
    %1505 = vmatprep.subr.bf16.mxu0 0
    %1506 = vmatpush1.bf16.xpose.msra.mxu0 0
    %1507 = vmatprep.subr.bf16.mxu0 0
    %1508 = vmatpush1.bf16.xpose.msra.mxu0 0
    %1509 = vmatprep.subr.bf16.mxu0 0
    %1510 = vmatpush1.bf16.xpose.msra.mxu0 0
    %1511 = vmatprep.subr.bf16.mxu0 0
    %1512 = vmatpush1.bf16.xpose.msra.mxu0 0
    %1513 = vmatprep.subr.bf16.mxu0 0
    %1514 = vmatpush1.bf16.xpose.msra.mxu0 0
    %1515 = vmatprep.subr.bf16.mxu0 0
    %1516 = vmatpush1.bf16.xpose.msra.mxu0 0
    %1517 = vmatprep.subr.bf16.mxu0 0
    %1518 = vmatpush1.bf16.xpose.msra.mxu0 0
    %1519 = vmatprep.subr.bf16.mxu0 0
    %1520 = vmatpush1.bf16.xpose.msra.mxu0 %v1503
    %1521 = vmatprep.subr.bf16.mxu0 0
    %1522 = vmatpush2.bf16.xpose.msra.mxu0 0
    %1523 = vmatprep.subr.bf16.mxu0 0
    %1524 = vmatpush2.bf16.xpose.msra.mxu0 0
    %1525 = vmatprep.subr.bf16.mxu0 0
    %1526 = vmatpush2.bf16.xpose.msra.mxu0 0
    %1527 = vmatprep.subr.bf16.mxu0 0
    %1528 = vmatpush2.bf16.xpose.msra.mxu0 0
    %1529 = vmatprep.subr.bf16.mxu0 0
    %1530 = vmatpush2.bf16.xpose.msra.mxu0 0
    %1531 = vmatprep.subr.bf16.mxu0 0
    %1532 = vmatpush2.bf16.xpose.msra.mxu0 0
    %1533 = vmatprep.subr.bf16.mxu0 0
    %1534 = vmatpush2.bf16.xpose.msra.mxu0 0
    %1535 = vmatprep.subr.bf16.mxu0 0
    %1536 = vmatpush2.bf16.xpose.msra.mxu0 0
    %1537 = vmatprep.mubr.bf16.mxu0 0
    %1538 = vmatmul.mubr.bf16.gmra.mxu0 %v1500
    %v1539 = vpop.f32.mrf.mxu0
    %v1540 = vadd.f32 0.0, %v1539
    %v1541 = vpop.f32.mrf.mxu0
    %v1542 = vpop.f32.mrf.mxu0
    %v1543 = vpop.f32.mrf.mxu0
    %1544 = vdwg.mxu0
    %1545 = vrot.lane.b32.xlu0 %v279, 120
    %v1546 = vpop.permute.xlu0 %1545
    %1547 = vrot.lane.b32.xlu0 %v279, 88
    %v1548 = vpop.permute.xlu0 %1547
    %v1550 = vsel %vm283, %v1546, 0
    %v1553 = vsel %vm283, %v1548, 0
    %1555 = vmatprep.subr.bf16.mxu0 0
    %1556 = vmatpush1.bf16.xpose.msra.mxu0 0
    %1557 = vmatprep.subr.bf16.mxu0 0
    %1558 = vmatpush1.bf16.xpose.msra.mxu0 0
    %1559 = vmatprep.subr.bf16.mxu0 0
    %1560 = vmatpush1.bf16.xpose.msra.mxu0 0
    %1561 = vmatprep.subr.bf16.mxu0 0
    %1562 = vmatpush1.bf16.xpose.msra.mxu0 0
    %1563 = vmatprep.subr.bf16.mxu0 0
    %1564 = vmatpush1.bf16.xpose.msra.mxu0 0
    %1565 = vmatprep.subr.bf16.mxu0 0
    %1566 = vmatpush1.bf16.xpose.msra.mxu0 0
    %1567 = vmatprep.subr.bf16.mxu0 0
    %1568 = vmatpush1.bf16.xpose.msra.mxu0 0
    %1569 = vmatprep.subr.bf16.mxu0 0
    %1570 = vmatpush1.bf16.xpose.msra.mxu0 %v1553
    %1571 = vmatprep.subr.bf16.mxu0 0
    %1572 = vmatpush2.bf16.xpose.msra.mxu0 0
    %1573 = vmatprep.subr.bf16.mxu0 0
    %1574 = vmatpush2.bf16.xpose.msra.mxu0 0
    %1575 = vmatprep.subr.bf16.mxu0 0
    %1576 = vmatpush2.bf16.xpose.msra.mxu0 0
    %1577 = vmatprep.subr.bf16.mxu0 0
    %1578 = vmatpush2.bf16.xpose.msra.mxu0 0
    %1579 = vmatprep.subr.bf16.mxu0 0
    %1580 = vmatpush2.bf16.xpose.msra.mxu0 0
    %1581 = vmatprep.subr.bf16.mxu0 0
    %1582 = vmatpush2.bf16.xpose.msra.mxu0 0
    %1583 = vmatprep.subr.bf16.mxu0 0
    %1584 = vmatpush2.bf16.xpose.msra.mxu0 0
    %1585 = vmatprep.subr.bf16.mxu0 0
    %1586 = vmatpush2.bf16.xpose.msra.mxu0 0
    %1587 = vmatprep.mubr.bf16.mxu0 0
    %1588 = vmatmul.mubr.bf16.gmra.mxu0 %v1550
    %v1589 = vpop.f32.mrf.mxu0
    %v1590 = vadd.f32 0.0, %v1589
    %v1591 = vpop.f32.mrf.mxu0
    %v1592 = vpop.f32.mrf.mxu0
    %v1593 = vpop.f32.mrf.mxu0
    %1594 = vdwg.mxu0
    %v1595 = vsel %vm283, %v1240, -inf
    %1596 = vmax.xlane.f32.xlu0 %v1595
    %v1597 = vpop.xlane.xlu0 %1596
    %v1598 = vsel %vm283, %v1290, -inf
    %1599 = vmax.xlane.f32.xlu0 %v1598
    %v1600 = vpop.xlane.xlu0 %1599
    %v1601 = vsel %vm283, %v1340, -inf
    %1602 = vmax.xlane.f32.xlu0 %v1601
    %v1603 = vpop.xlane.xlu0 %1602
    %v1604 = vsel %vm283, %v1390, -inf
    %1605 = vmax.xlane.f32.xlu0 %v1604
    %v1606 = vpop.xlane.xlu0 %1605
    %v1607 = vsel %vm283, %v1440, -inf
    %1608 = vmax.xlane.f32.xlu0 %v1607
    %v1609 = vpop.xlane.xlu0 %1608
    %v1610 = vsel %vm283, %v1490, -inf
    %1611 = vmax.xlane.f32.xlu0 %v1610
    %v1612 = vpop.xlane.xlu0 %1611
    %v1613 = vsel %vm283, %v1540, -inf
    %1614 = vmax.xlane.f32.xlu0 %v1613
    %v1615 = vpop.xlane.xlu0 %1614
    %v1616 = vsel %vm283, %v1590, -inf
    %1617 = vmax.xlane.f32.xlu0 %v1616
    %v1618 = vpop.xlane.xlu0 %1617
    %v1619 = vsub.f32 %v1240, %v1597
    %v1620 = vsub.f32 %v1290, %v1600
    %v1621 = vsub.f32 %v1340, %v1603
    %v1622 = vsub.f32 %v1390, %v1606
    %v1623 = vsub.f32 %v1440, %v1609
    %v1624 = vsub.f32 %v1490, %v1612
    %v1625 = vsub.f32 %v1540, %v1615
    %v1626 = vsub.f32 %v1590, %v1618
    %v1627 = vmul.f32 %v1619, 1.442695
    %v1628 = vpow.pop %v1627
    %v1629 = vmul.f32 %v1620, 1.442695
    %v1630 = vpow.pop %v1629
    %v1631 = vmul.f32 %v1621, 1.442695
    %v1632 = vpow.pop %v1631
    %v1633 = vmul.f32 %v1622, 1.442695
    %v1634 = vpow.pop %v1633
    %v1635 = vmul.f32 %v1623, 1.442695
    %v1636 = vpow.pop %v1635
    %v1637 = vmul.f32 %v1624, 1.442695
    %v1638 = vpow.pop %v1637
    %v1639 = vmul.f32 %v1625, 1.442695
    %v1640 = vpow.pop %v1639
    %v1641 = vmul.f32 %v1626, 1.442695
    %v1642 = vpow.pop %v1641
    %v1643 = vsel %vm283, %v1628, 0.0
    %1644 = vadd.xlane.f32.xlu0 %v1643
    %v1645 = vpop.xlane.xlu0 %1644
    %v1646 = vsel %vm283, %v1630, 0.0
    %1647 = vadd.xlane.f32.xlu0 %v1646
    %v1648 = vpop.xlane.xlu0 %1647
    %v1649 = vsel %vm283, %v1632, 0.0
    %1650 = vadd.xlane.f32.xlu0 %v1649
    %v1651 = vpop.xlane.xlu0 %1650
    %v1652 = vsel %vm283, %v1634, 0.0
    %1653 = vadd.xlane.f32.xlu0 %v1652
    %v1654 = vpop.xlane.xlu0 %1653
    %v1655 = vsel %vm283, %v1636, 0.0
    %1656 = vadd.xlane.f32.xlu0 %v1655
    %v1657 = vpop.xlane.xlu0 %1656
    %v1658 = vsel %vm283, %v1638, 0.0
    %1659 = vadd.xlane.f32.xlu0 %v1658
    %v1660 = vpop.xlane.xlu0 %1659
    %v1661 = vsel %vm283, %v1640, 0.0
    %1662 = vadd.xlane.f32.xlu0 %v1661
    %v1663 = vpop.xlane.xlu0 %1662
    %v1664 = vsel %vm283, %v1642, 0.0
    %1665 = vadd.xlane.f32.xlu0 %v1664
    %v1666 = vpop.xlane.xlu0 %1665
    %v1667 = vpack.c.bf16 %v1628, %v1628
    %v1668 = vpack.c.bf16 %v1630, %v1630
    %v1669 = vpack.c.bf16 %v1632, %v1632
    %v1670 = vpack.c.bf16 %v1634, %v1634
    %v1671 = vpack.c.bf16 %v1636, %v1636
    %v1672 = vpack.c.bf16 %v1638, %v1638
    %v1673 = vpack.c.bf16 %v1640, %v1640
    %v1674 = vpack.c.bf16 %v1642, %v1642
    %1675 = vrot.lane.b32.xlu0 %v272, 56
    %v1676 = vpop.permute.xlu0 %1675
    %v1678 = vsel %vm283, %v1667, 0
    %v1681 = vsel %vm758, %v1676, 0
    %1683 = vmatprep.subr.bf16.mxu0 0
    %1684 = vmatpush1.bf16.msra.mxu0 0
    %1685 = vmatprep.subr.bf16.mxu0 0
    %1686 = vmatpush1.bf16.msra.mxu0 0
    %1687 = vmatprep.subr.bf16.mxu0 0
    %1688 = vmatpush1.bf16.msra.mxu0 0
    %1689 = vmatprep.subr.bf16.mxu0 0
    %1690 = vmatpush1.bf16.msra.mxu0 0
    %1691 = vmatprep.subr.bf16.mxu0 0
    %1692 = vmatpush1.bf16.msra.mxu0 0
    %1693 = vmatprep.subr.bf16.mxu0 0
    %1694 = vmatpush1.bf16.msra.mxu0 0
    %1695 = vmatprep.subr.bf16.mxu0 0
    %1696 = vmatpush1.bf16.msra.mxu0 0
    %1697 = vmatprep.subr.bf16.mxu0 0
    %1698 = vmatpush1.bf16.msra.mxu0 %v1681
    %1699 = vmatprep.subr.bf16.mxu0 0
    %1700 = vmatpush2.bf16.msra.mxu0 0
    %1701 = vmatprep.subr.bf16.mxu0 0
    %1702 = vmatpush2.bf16.msra.mxu0 0
    %1703 = vmatprep.subr.bf16.mxu0 0
    %1704 = vmatpush2.bf16.msra.mxu0 0
    %1705 = vmatprep.subr.bf16.mxu0 0
    %1706 = vmatpush2.bf16.msra.mxu0 0
    %1707 = vmatprep.subr.bf16.mxu0 0
    %1708 = vmatpush2.bf16.msra.mxu0 0
    %1709 = vmatprep.subr.bf16.mxu0 0
    %1710 = vmatpush2.bf16.msra.mxu0 0
    %1711 = vmatprep.subr.bf16.mxu0 0
    %1712 = vmatpush2.bf16.msra.mxu0 0
    %1713 = vmatprep.subr.bf16.mxu0 0
    %1714 = vmatpush2.bf16.msra.mxu0 0
    %1715 = vmatprep.mubr.bf16.mxu0 0
    %1716 = vmatmul.mubr.bf16.gmra.mxu0 %v1678
    %v1717 = vpop.f32.mrf.mxu0
    %v1718 = vadd.f32 0.0, %v1717
    %v1719 = vpop.f32.mrf.mxu0
    %v1720 = vpop.f32.mrf.mxu0
    %v1721 = vpop.f32.mrf.mxu0
    %1722 = vdwg.mxu0
    %1723 = vrot.lane.b32.xlu0 %v273, 56
    %v1724 = vpop.permute.xlu0 %1723
    %v1726 = vsel %vm283, %v1668, 0
    %v1729 = vsel %vm758, %v1724, 0
    %1731 = vmatprep.subr.bf16.mxu0 0
    %1732 = vmatpush1.bf16.msra.mxu0 0
    %1733 = vmatprep.subr.bf16.mxu0 0
    %1734 = vmatpush1.bf16.msra.mxu0 0
    %1735 = vmatprep.subr.bf16.mxu0 0
    %1736 = vmatpush1.bf16.msra.mxu0 0
    %1737 = vmatprep.subr.bf16.mxu0 0
    %1738 = vmatpush1.bf16.msra.mxu0 0
    %1739 = vmatprep.subr.bf16.mxu0 0
    %1740 = vmatpush1.bf16.msra.mxu0 0
    %1741 = vmatprep.subr.bf16.mxu0 0
    %1742 = vmatpush1.bf16.msra.mxu0 0
    %1743 = vmatprep.subr.bf16.mxu0 0
    %1744 = vmatpush1.bf16.msra.mxu0 0
    %1745 = vmatprep.subr.bf16.mxu0 0
    %1746 = vmatpush1.bf16.msra.mxu0 %v1729
    %1747 = vmatprep.subr.bf16.mxu0 0
    %1748 = vmatpush2.bf16.msra.mxu0 0
    %1749 = vmatprep.subr.bf16.mxu0 0
    %1750 = vmatpush2.bf16.msra.mxu0 0
    %1751 = vmatprep.subr.bf16.mxu0 0
    %1752 = vmatpush2.bf16.msra.mxu0 0
    %1753 = vmatprep.subr.bf16.mxu0 0
    %1754 = vmatpush2.bf16.msra.mxu0 0
    %1755 = vmatprep.subr.bf16.mxu0 0
    %1756 = vmatpush2.bf16.msra.mxu0 0
    %1757 = vmatprep.subr.bf16.mxu0 0
    %1758 = vmatpush2.bf16.msra.mxu0 0
    %1759 = vmatprep.subr.bf16.mxu0 0
    %1760 = vmatpush2.bf16.msra.mxu0 0
    %1761 = vmatprep.subr.bf16.mxu0 0
    %1762 = vmatpush2.bf16.msra.mxu0 0
    %1763 = vmatprep.mubr.bf16.mxu0 0
    %1764 = vmatmul.mubr.bf16.gmra.mxu0 %v1726
    %v1765 = vpop.f32.mrf.mxu0
    %v1766 = vadd.f32 0.0, %v1765
    %v1767 = vpop.f32.mrf.mxu0
    %v1768 = vpop.f32.mrf.mxu0
    %v1769 = vpop.f32.mrf.mxu0
    %1770 = vdwg.mxu0
    %1771 = vrot.lane.b32.xlu0 %v274, 56
    %v1772 = vpop.permute.xlu0 %1771
    %v1774 = vsel %vm283, %v1669, 0
    %v1777 = vsel %vm758, %v1772, 0
    %1779 = vmatprep.subr.bf16.mxu0 0
    %1780 = vmatpush1.bf16.msra.mxu0 0
    %1781 = vmatprep.subr.bf16.mxu0 0
    %1782 = vmatpush1.bf16.msra.mxu0 0
    %1783 = vmatprep.subr.bf16.mxu0 0
    %1784 = vmatpush1.bf16.msra.mxu0 0
    %1785 = vmatprep.subr.bf16.mxu0 0
    %1786 = vmatpush1.bf16.msra.mxu0 0
    %1787 = vmatprep.subr.bf16.mxu0 0
    %1788 = vmatpush1.bf16.msra.mxu0 0
    %1789 = vmatprep.subr.bf16.mxu0 0
    %1790 = vmatpush1.bf16.msra.mxu0 0
    %1791 = vmatprep.subr.bf16.mxu0 0
    %1792 = vmatpush1.bf16.msra.mxu0 0
    %1793 = vmatprep.subr.bf16.mxu0 0
    %1794 = vmatpush1.bf16.msra.mxu0 %v1777
    %1795 = vmatprep.subr.bf16.mxu0 0
    %1796 = vmatpush2.bf16.msra.mxu0 0
    %1797 = vmatprep.subr.bf16.mxu0 0
    %1798 = vmatpush2.bf16.msra.mxu0 0
    %1799 = vmatprep.subr.bf16.mxu0 0
    %1800 = vmatpush2.bf16.msra.mxu0 0
    %1801 = vmatprep.subr.bf16.mxu0 0
    %1802 = vmatpush2.bf16.msra.mxu0 0
    %1803 = vmatprep.subr.bf16.mxu0 0
    %1804 = vmatpush2.bf16.msra.mxu0 0
    %1805 = vmatprep.subr.bf16.mxu0 0
    %1806 = vmatpush2.bf16.msra.mxu0 0
    %1807 = vmatprep.subr.bf16.mxu0 0
    %1808 = vmatpush2.bf16.msra.mxu0 0
    %1809 = vmatprep.subr.bf16.mxu0 0
    %1810 = vmatpush2.bf16.msra.mxu0 0
    %1811 = vmatprep.mubr.bf16.mxu0 0
    %1812 = vmatmul.mubr.bf16.gmra.mxu0 %v1774
    %v1813 = vpop.f32.mrf.mxu0
    %v1814 = vadd.f32 0.0, %v1813
    %v1815 = vpop.f32.mrf.mxu0
    %v1816 = vpop.f32.mrf.mxu0
    %v1817 = vpop.f32.mrf.mxu0
    %1818 = vdwg.mxu0
    %1819 = vrot.lane.b32.xlu0 %v275, 56
    %v1820 = vpop.permute.xlu0 %1819
    %v1822 = vsel %vm283, %v1670, 0
    %v1825 = vsel %vm758, %v1820, 0
    %1827 = vmatprep.subr.bf16.mxu0 0
    %1828 = vmatpush1.bf16.msra.mxu0 0
    %1829 = vmatprep.subr.bf16.mxu0 0
    %1830 = vmatpush1.bf16.msra.mxu0 0
    %1831 = vmatprep.subr.bf16.mxu0 0
    %1832 = vmatpush1.bf16.msra.mxu0 0
    %1833 = vmatprep.subr.bf16.mxu0 0
    %1834 = vmatpush1.bf16.msra.mxu0 0
    %1835 = vmatprep.subr.bf16.mxu0 0
    %1836 = vmatpush1.bf16.msra.mxu0 0
    %1837 = vmatprep.subr.bf16.mxu0 0
    %1838 = vmatpush1.bf16.msra.mxu0 0
    %1839 = vmatprep.subr.bf16.mxu0 0
    %1840 = vmatpush1.bf16.msra.mxu0 0
    %1841 = vmatprep.subr.bf16.mxu0 0
    %1842 = vmatpush1.bf16.msra.mxu0 %v1825
    %1843 = vmatprep.subr.bf16.mxu0 0
    %1844 = vmatpush2.bf16.msra.mxu0 0
    %1845 = vmatprep.subr.bf16.mxu0 0
    %1846 = vmatpush2.bf16.msra.mxu0 0
    %1847 = vmatprep.subr.bf16.mxu0 0
    %1848 = vmatpush2.bf16.msra.mxu0 0
    %1849 = vmatprep.subr.bf16.mxu0 0
    %1850 = vmatpush2.bf16.msra.mxu0 0
    %1851 = vmatprep.subr.bf16.mxu0 0
    %1852 = vmatpush2.bf16.msra.mxu0 0
    %1853 = vmatprep.subr.bf16.mxu0 0
    %1854 = vmatpush2.bf16.msra.mxu0 0
    %1855 = vmatprep.subr.bf16.mxu0 0
    %1856 = vmatpush2.bf16.msra.mxu0 0
    %1857 = vmatprep.subr.bf16.mxu0 0
    %1858 = vmatpush2.bf16.msra.mxu0 0
    %1859 = vmatprep.mubr.bf16.mxu0 0
    %1860 = vmatmul.mubr.bf16.gmra.mxu0 %v1822
    %v1861 = vpop.f32.mrf.mxu0
    %v1862 = vadd.f32 0.0, %v1861
    %v1863 = vpop.f32.mrf.mxu0
    %v1864 = vpop.f32.mrf.mxu0
    %v1865 = vpop.f32.mrf.mxu0
    %1866 = vdwg.mxu0
    %1867 = vrot.lane.b32.xlu0 %v276, 56
    %v1868 = vpop.permute.xlu0 %1867
    %v1870 = vsel %vm283, %v1671, 0
    %v1873 = vsel %vm758, %v1868, 0
    %1875 = vmatprep.subr.bf16.mxu0 0
    %1876 = vmatpush1.bf16.msra.mxu0 0
    %1877 = vmatprep.subr.bf16.mxu0 0
    %1878 = vmatpush1.bf16.msra.mxu0 0
    %1879 = vmatprep.subr.bf16.mxu0 0
    %1880 = vmatpush1.bf16.msra.mxu0 0
    %1881 = vmatprep.subr.bf16.mxu0 0
    %1882 = vmatpush1.bf16.msra.mxu0 0
    %1883 = vmatprep.subr.bf16.mxu0 0
    %1884 = vmatpush1.bf16.msra.mxu0 0
    %1885 = vmatprep.subr.bf16.mxu0 0
    %1886 = vmatpush1.bf16.msra.mxu0 0
    %1887 = vmatprep.subr.bf16.mxu0 0
    %1888 = vmatpush1.bf16.msra.mxu0 0
    %1889 = vmatprep.subr.bf16.mxu0 0
    %1890 = vmatpush1.bf16.msra.mxu0 %v1873
    %1891 = vmatprep.subr.bf16.mxu0 0
    %1892 = vmatpush2.bf16.msra.mxu0 0
    %1893 = vmatprep.subr.bf16.mxu0 0
    %1894 = vmatpush2.bf16.msra.mxu0 0
    %1895 = vmatprep.subr.bf16.mxu0 0
    %1896 = vmatpush2.bf16.msra.mxu0 0
    %1897 = vmatprep.subr.bf16.mxu0 0
    %1898 = vmatpush2.bf16.msra.mxu0 0
    %1899 = vmatprep.subr.bf16.mxu0 0
    %1900 = vmatpush2.bf16.msra.mxu0 0
    %1901 = vmatprep.subr.bf16.mxu0 0
    %1902 = vmatpush2.bf16.msra.mxu0 0
    %1903 = vmatprep.subr.bf16.mxu0 0
    %1904 = vmatpush2.bf16.msra.mxu0 0
    %1905 = vmatprep.subr.bf16.mxu0 0
    %1906 = vmatpush2.bf16.msra.mxu0 0
    %1907 = vmatprep.mubr.bf16.mxu0 0
    %1908 = vmatmul.mubr.bf16.gmra.mxu0 %v1870
    %v1909 = vpop.f32.mrf.mxu0
    %v1910 = vadd.f32 0.0, %v1909
    %v1911 = vpop.f32.mrf.mxu0
    %v1912 = vpop.f32.mrf.mxu0
    %v1913 = vpop.f32.mrf.mxu0
    %1914 = vdwg.mxu0
    %1915 = vrot.lane.b32.xlu0 %v277, 56
    %v1916 = vpop.permute.xlu0 %1915
    %v1918 = vsel %vm283, %v1672, 0
    %v1921 = vsel %vm758, %v1916, 0
    %1923 = vmatprep.subr.bf16.mxu0 0
    %1924 = vmatpush1.bf16.msra.mxu0 0
    %1925 = vmatprep.subr.bf16.mxu0 0
    %1926 = vmatpush1.bf16.msra.mxu0 0
    %1927 = vmatprep.subr.bf16.mxu0 0
    %1928 = vmatpush1.bf16.msra.mxu0 0
    %1929 = vmatprep.subr.bf16.mxu0 0
    %1930 = vmatpush1.bf16.msra.mxu0 0
    %1931 = vmatprep.subr.bf16.mxu0 0
    %1932 = vmatpush1.bf16.msra.mxu0 0
    %1933 = vmatprep.subr.bf16.mxu0 0
    %1934 = vmatpush1.bf16.msra.mxu0 0
    %1935 = vmatprep.subr.bf16.mxu0 0
    %1936 = vmatpush1.bf16.msra.mxu0 0
    %1937 = vmatprep.subr.bf16.mxu0 0
    %1938 = vmatpush1.bf16.msra.mxu0 %v1921
    %1939 = vmatprep.subr.bf16.mxu0 0
    %1940 = vmatpush2.bf16.msra.mxu0 0
    %1941 = vmatprep.subr.bf16.mxu0 0
    %1942 = vmatpush2.bf16.msra.mxu0 0
    %1943 = vmatprep.subr.bf16.mxu0 0
    %1944 = vmatpush2.bf16.msra.mxu0 0
    %1945 = vmatprep.subr.bf16.mxu0 0
    %1946 = vmatpush2.bf16.msra.mxu0 0
    %1947 = vmatprep.subr.bf16.mxu0 0
    %1948 = vmatpush2.bf16.msra.mxu0 0
    %1949 = vmatprep.subr.bf16.mxu0 0
    %1950 = vmatpush2.bf16.msra.mxu0 0
    %1951 = vmatprep.subr.bf16.mxu0 0
    %1952 = vmatpush2.bf16.msra.mxu0 0
    %1953 = vmatprep.subr.bf16.mxu0 0
    %1954 = vmatpush2.bf16.msra.mxu0 0
    %1955 = vmatprep.mubr.bf16.mxu0 0
    %1956 = vmatmul.mubr.bf16.gmra.mxu0 %v1918
    %v1957 = vpop.f32.mrf.mxu0
    %v1958 = vadd.f32 0.0, %v1957
    %v1959 = vpop.f32.mrf.mxu0
    %v1960 = vpop.f32.mrf.mxu0
    %v1961 = vpop.f32.mrf.mxu0
    %1962 = vdwg.mxu0
    %1963 = vrot.lane.b32.xlu0 %v278, 56
    %v1964 = vpop.permute.xlu0 %1963
    %v1966 = vsel %vm283, %v1673, 0
    %v1969 = vsel %vm758, %v1964, 0
    %1971 = vmatprep.subr.bf16.mxu0 0
    %1972 = vmatpush1.bf16.msra.mxu0 0
    %1973 = vmatprep.subr.bf16.mxu0 0
    %1974 = vmatpush1.bf16.msra.mxu0 0
    %1975 = vmatprep.subr.bf16.mxu0 0
    %1976 = vmatpush1.bf16.msra.mxu0 0
    %1977 = vmatprep.subr.bf16.mxu0 0
    %1978 = vmatpush1.bf16.msra.mxu0 0
    %1979 = vmatprep.subr.bf16.mxu0 0
    %1980 = vmatpush1.bf16.msra.mxu0 0
    %1981 = vmatprep.subr.bf16.mxu0 0
    %1982 = vmatpush1.bf16.msra.mxu0 0
    %1983 = vmatprep.subr.bf16.mxu0 0
    %1984 = vmatpush1.bf16.msra.mxu0 0
    %1985 = vmatprep.subr.bf16.mxu0 0
    %1986 = vmatpush1.bf16.msra.mxu0 %v1969
    %1987 = vmatprep.subr.bf16.mxu0 0
    %1988 = vmatpush2.bf16.msra.mxu0 0
    %1989 = vmatprep.subr.bf16.mxu0 0
    %1990 = vmatpush2.bf16.msra.mxu0 0
    %1991 = vmatprep.subr.bf16.mxu0 0
    %1992 = vmatpush2.bf16.msra.mxu0 0
    %1993 = vmatprep.subr.bf16.mxu0 0
    %1994 = vmatpush2.bf16.msra.mxu0 0
    %1995 = vmatprep.subr.bf16.mxu0 0
    %1996 = vmatpush2.bf16.msra.mxu0 0
    %1997 = vmatprep.subr.bf16.mxu0 0
    %1998 = vmatpush2.bf16.msra.mxu0 0
    %1999 = vmatprep.subr.bf16.mxu0 0
    %2000 = vmatpush2.bf16.msra.mxu0 0
    %2001 = vmatprep.subr.bf16.mxu0 0
    %2002 = vmatpush2.bf16.msra.mxu0 0
    %2003 = vmatprep.mubr.bf16.mxu0 0
    %2004 = vmatmul.mubr.bf16.gmra.mxu0 %v1966
    %v2005 = vpop.f32.mrf.mxu0
    %v2006 = vadd.f32 0.0, %v2005
    %v2007 = vpop.f32.mrf.mxu0
    %v2008 = vpop.f32.mrf.mxu0
    %v2009 = vpop.f32.mrf.mxu0
    %2010 = vdwg.mxu0
    %2011 = vrot.lane.b32.xlu0 %v279, 56
    %v2012 = vpop.permute.xlu0 %2011
    %v2014 = vsel %vm283, %v1674, 0
    %v2017 = vsel %vm758, %v2012, 0
    %2019 = vmatprep.subr.bf16.mxu0 0
    %2020 = vmatpush1.bf16.msra.mxu0 0
    %2021 = vmatprep.subr.bf16.mxu0 0
    %2022 = vmatpush1.bf16.msra.mxu0 0
    %2023 = vmatprep.subr.bf16.mxu0 0
    %2024 = vmatpush1.bf16.msra.mxu0 0
    %2025 = vmatprep.subr.bf16.mxu0 0
    %2026 = vmatpush1.bf16.msra.mxu0 0
    %2027 = vmatprep.subr.bf16.mxu0 0
    %2028 = vmatpush1.bf16.msra.mxu0 0
    %2029 = vmatprep.subr.bf16.mxu0 0
    %2030 = vmatpush1.bf16.msra.mxu0 0
    %2031 = vmatprep.subr.bf16.mxu0 0
    %2032 = vmatpush1.bf16.msra.mxu0 0
    %2033 = vmatprep.subr.bf16.mxu0 0
    %2034 = vmatpush1.bf16.msra.mxu0 %v2017
    %2035 = vmatprep.subr.bf16.mxu0 0
    %2036 = vmatpush2.bf16.msra.mxu0 0
    %2037 = vmatprep.subr.bf16.mxu0 0
    %2038 = vmatpush2.bf16.msra.mxu0 0
    %2039 = vmatprep.subr.bf16.mxu0 0
    %2040 = vmatpush2.bf16.msra.mxu0 0
    %2041 = vmatprep.subr.bf16.mxu0 0
    %2042 = vmatpush2.bf16.msra.mxu0 0
    %2043 = vmatprep.subr.bf16.mxu0 0
    %2044 = vmatpush2.bf16.msra.mxu0 0
    %2045 = vmatprep.subr.bf16.mxu0 0
    %2046 = vmatpush2.bf16.msra.mxu0 0
    %2047 = vmatprep.subr.bf16.mxu0 0
    %2048 = vmatpush2.bf16.msra.mxu0 0
    %2049 = vmatprep.subr.bf16.mxu0 0
    %2050 = vmatpush2.bf16.msra.mxu0 0
    %2051 = vmatprep.mubr.bf16.mxu0 0
    %2052 = vmatmul.mubr.bf16.gmra.mxu0 %v2014
    %v2053 = vpop.f32.mrf.mxu0
    %v2054 = vadd.f32 0.0, %v2053
    %v2055 = vpop.f32.mrf.mxu0
    %v2056 = vpop.f32.mrf.mxu0
    %v2057 = vpop.f32.mrf.mxu0
    %2058 = vdwg.mxu0
    %v2059 = vrcp.pop %v1645
    %v2060 = vrcp.pop %v1648
    %v2061 = vrcp.pop %v1651
    %v2062 = vrcp.pop %v1654
    %v2063 = vrcp.pop %v1657
    %v2064 = vrcp.pop %v1660
    %v2065 = vrcp.pop %v1663
    %v2066 = vrcp.pop %v1666
    %v2067 = vmul.f32 %v1718, %v2059
    %v2068 = vmul.f32 %v1766, %v2060
    %v2069 = vmul.f32 %v1814, %v2061
    %v2070 = vmul.f32 %v1862, %v2062
    %v2071 = vmul.f32 %v1910, %v2063
    %v2072 = vmul.f32 %v1958, %v2064
    %v2073 = vmul.f32 %v2006, %v2065
    %v2074 = vmul.f32 %v2054, %v2066
    %v2075 = vpack.c.bf16 %v2068, %v2067
    %v2076 = vpack.c.bf16 %v2070, %v2069
    %v2077 = vpack.c.bf16 %v2072, %v2071
    %v2078 = vpack.c.bf16 %v2074, %v2073
    %v2083 = vunpack.c.l.b16 %v2075
    %v2084 = vunpack.c.h.b16 %v2075
    %v2085 = vunpack.c.l.b16 %v2076
    %v2086 = vunpack.c.h.b16 %v2076
    %v2087 = vunpack.c.l.b16 %v2077
    %v2088 = vunpack.c.h.b16 %v2077
    %v2089 = vunpack.c.l.b16 %v2078
    %v2090 = vunpack.c.h.b16 %v2078
    %v2091 = vpack.c.b16 %v2083, %v2083
    %v2092 = vpack.c.b16 %v2084, %v2084
    %v2093 = vpack.c.b16 %v2085, %v2085
    %v2094 = vpack.c.b16 %v2086, %v2086
    %v2095 = vpack.c.b16 %v2087, %v2087
    %v2096 = vpack.c.b16 %v2088, %v2088
    %v2097 = vpack.c.b16 %v2089, %v2089
    %v2098 = vpack.c.b16 %v2090, %v2090
    %2099 = vrot.lane.b32.xlu0 %v2091, 8
    %v2100 = vpop.permute.xlu0 %2099
    %2101 = vrot.lane.b32.xlu0 %v2092, 8
    %v2102 = vpop.permute.xlu0 %2101
    %2103 = vrot.lane.b32.xlu0 %v2093, 8
    %v2104 = vpop.permute.xlu0 %2103
    %2105 = vrot.lane.b32.xlu0 %v2094, 8
    %v2106 = vpop.permute.xlu0 %2105
    %2107 = vrot.lane.b32.xlu0 %v2095, 8
    %v2108 = vpop.permute.xlu0 %2107
    %2109 = vrot.lane.b32.xlu0 %v2096, 8
    %v2110 = vpop.permute.xlu0 %2109
    %2111 = vrot.lane.b32.xlu0 %v2097, 8
    %v2112 = vpop.permute.xlu0 %2111
    %2113 = vrot.lane.b32.xlu0 %v2098, 8
    %v2114 = vpop.permute.xlu0 %2113
    %vm2123 = vcmask 126016
    %2124 = vst.msk [vmem:[#allocation2] sm:$0xf] %vm2123, %v2100
    %2125 = vst.msk [vmem:[#allocation2 + $0x4] sm:$0xf] %vm2123, %v2102
    %2126 = vst.msk [vmem:[#allocation2 + $0x8] sm:$0xf] %vm2123, %v2104
    %2127 = vst.msk [vmem:[#allocation2 + $0xc] sm:$0xf] %vm2123, %v2106
    %2128 = vst.msk [vmem:[#allocation2 + $0x10] sm:$0xf] %vm2123, %v2108
    %2129 = vst.msk [vmem:[#allocation2 + $0x14] sm:$0xf] %vm2123, %v2110
    %2130 = vst.msk [vmem:[#allocation2 + $0x18] sm:$0xf] %vm2123, %v2112
    %2131 = vst.msk [vmem:[#allocation2 + $0x1c] sm:$0xf] %vm2123, %v2114
    %2132 = vrot.lane.b32.xlu0 %v272, 112
    %v2133 = vpop.permute.xlu0 %2132
    %2134 = vrot.lane.b32.xlu0 %v272, 80
    %v2135 = vpop.permute.xlu0 %2134
    %v2137 = vsel %vm283, %v2133, 0
    %v2140 = vsel %vm283, %v2135, 0
    %2142 = vmatprep.subr.bf16.mxu0 0
    %2143 = vmatpush1.bf16.xpose.msra.mxu0 0
    %2144 = vmatprep.subr.bf16.mxu0 0
    %2145 = vmatpush1.bf16.xpose.msra.mxu0 0
    %2146 = vmatprep.subr.bf16.mxu0 0
    %2147 = vmatpush1.bf16.xpose.msra.mxu0 0
    %2148 = vmatprep.subr.bf16.mxu0 0
    %2149 = vmatpush1.bf16.xpose.msra.mxu0 0
    %2150 = vmatprep.subr.bf16.mxu0 0
    %2151 = vmatpush1.bf16.xpose.msra.mxu0 0
    %2152 = vmatprep.subr.bf16.mxu0 0
    %2153 = vmatpush1.bf16.xpose.msra.mxu0 0
    %2154 = vmatprep.subr.bf16.mxu0 0
    %2155 = vmatpush1.bf16.xpose.msra.mxu0 0
    %2156 = vmatprep.subr.bf16.mxu0 0
    %2157 = vmatpush1.bf16.xpose.msra.mxu0 %v2140
    %2158 = vmatprep.subr.bf16.mxu0 0
    %2159 = vmatpush2.bf16.xpose.msra.mxu0 0
    %2160 = vmatprep.subr.bf16.mxu0 0
    %2161 = vmatpush2.bf16.xpose.msra.mxu0 0
    %2162 = vmatprep.subr.bf16.mxu0 0
    %2163 = vmatpush2.bf16.xpose.msra.mxu0 0
    %2164 = vmatprep.subr.bf16.mxu0 0
    %2165 = vmatpush2.bf16.xpose.msra.mxu0 0
    %2166 = vmatprep.subr.bf16.mxu0 0
    %2167 = vmatpush2.bf16.xpose.msra.mxu0 0
    %2168 = vmatprep.subr.bf16.mxu0 0
    %2169 = vmatpush2.bf16.xpose.msra.mxu0 0
    %2170 = vmatprep.subr.bf16.mxu0 0
    %2171 = vmatpush2.bf16.xpose.msra.mxu0 0
    %2172 = vmatprep.subr.bf16.mxu0 0
    %2173 = vmatpush2.bf16.xpose.msra.mxu0 0
    %2174 = vmatprep.mubr.bf16.mxu0 0
    %2175 = vmatmul.mubr.bf16.gmra.mxu0 %v2137
    %v2176 = vpop.f32.mrf.mxu0
    %v2177 = vadd.f32 0.0, %v2176
    %v2178 = vpop.f32.mrf.mxu0
    %v2179 = vpop.f32.mrf.mxu0
    %v2180 = vpop.f32.mrf.mxu0
    %2181 = vdwg.mxu0
    %2182 = vrot.lane.b32.xlu0 %v273, 112
    %v2183 = vpop.permute.xlu0 %2182
    %2184 = vrot.lane.b32.xlu0 %v273, 80
    %v2185 = vpop.permute.xlu0 %2184
    %v2187 = vsel %vm283, %v2183, 0
    %v2190 = vsel %vm283, %v2185, 0
    %2192 = vmatprep.subr.bf16.mxu0 0
    %2193 = vmatpush1.bf16.xpose.msra.mxu0 0
    %2194 = vmatprep.subr.bf16.mxu0 0
    %2195 = vmatpush1.bf16.xpose.msra.mxu0 0
    %2196 = vmatprep.subr.bf16.mxu0 0
    %2197 = vmatpush1.bf16.xpose.msra.mxu0 0
    %2198 = vmatprep.subr.bf16.mxu0 0
    %2199 = vmatpush1.bf16.xpose.msra.mxu0 0
    %2200 = vmatprep.subr.bf16.mxu0 0
    %2201 = vmatpush1.bf16.xpose.msra.mxu0 0
    %2202 = vmatprep.subr.bf16.mxu0 0
    %2203 = vmatpush1.bf16.xpose.msra.mxu0 0
    %2204 = vmatprep.subr.bf16.mxu0 0
    %2205 = vmatpush1.bf16.xpose.msra.mxu0 0
    %2206 = vmatprep.subr.bf16.mxu0 0
    %2207 = vmatpush1.bf16.xpose.msra.mxu0 %v2190
    %2208 = vmatprep.subr.bf16.mxu0 0
    %2209 = vmatpush2.bf16.xpose.msra.mxu0 0
    %2210 = vmatprep.subr.bf16.mxu0 0
    %2211 = vmatpush2.bf16.xpose.msra.mxu0 0
    %2212 = vmatprep.subr.bf16.mxu0 0
    %2213 = vmatpush2.bf16.xpose.msra.mxu0 0
    %2214 = vmatprep.subr.bf16.mxu0 0
    %2215 = vmatpush2.bf16.xpose.msra.mxu0 0
    %2216 = vmatprep.subr.bf16.mxu0 0
    %2217 = vmatpush2.bf16.xpose.msra.mxu0 0
    %2218 = vmatprep.subr.bf16.mxu0 0
    %2219 = vmatpush2.bf16.xpose.msra.mxu0 0
    %2220 = vmatprep.subr.bf16.mxu0 0
    %2221 = vmatpush2.bf16.xpose.msra.mxu0 0
    %2222 = vmatprep.subr.bf16.mxu0 0
    %2223 = vmatpush2.bf16.xpose.msra.mxu0 0
    %2224 = vmatprep.mubr.bf16.mxu0 0
    %2225 = vmatmul.mubr.bf16.gmra.mxu0 %v2187
    %v2226 = vpop.f32.mrf.mxu0
    %v2227 = vadd.f32 0.0, %v2226
    %v2228 = vpop.f32.mrf.mxu0
    %v2229 = vpop.f32.mrf.mxu0
    %v2230 = vpop.f32.mrf.mxu0
    %2231 = vdwg.mxu0
    %2232 = vrot.lane.b32.xlu0 %v274, 112
    %v2233 = vpop.permute.xlu0 %2232
    %2234 = vrot.lane.b32.xlu0 %v274, 80
    %v2235 = vpop.permute.xlu0 %2234
    %v2237 = vsel %vm283, %v2233, 0
    %v2240 = vsel %vm283, %v2235, 0
    %2242 = vmatprep.subr.bf16.mxu0 0
    %2243 = vmatpush1.bf16.xpose.msra.mxu0 0
    %2244 = vmatprep.subr.bf16.mxu0 0
    %2245 = vmatpush1.bf16.xpose.msra.mxu0 0
    %2246 = vmatprep.subr.bf16.mxu0 0
    %2247 = vmatpush1.bf16.xpose.msra.mxu0 0
    %2248 = vmatprep.subr.bf16.mxu0 0
    %2249 = vmatpush1.bf16.xpose.msra.mxu0 0
    %2250 = vmatprep.subr.bf16.mxu0 0
    %2251 = vmatpush1.bf16.xpose.msra.mxu0 0
    %2252 = vmatprep.subr.bf16.mxu0 0
    %2253 = vmatpush1.bf16.xpose.msra.mxu0 0
    %2254 = vmatprep.subr.bf16.mxu0 0
    %2255 = vmatpush1.bf16.xpose.msra.mxu0 0
    %2256 = vmatprep.subr.bf16.mxu0 0
    %2257 = vmatpush1.bf16.xpose.msra.mxu0 %v2240
    %2258 = vmatprep.subr.bf16.mxu0 0
    %2259 = vmatpush2.bf16.xpose.msra.mxu0 0
    %2260 = vmatprep.subr.bf16.mxu0 0
    %2261 = vmatpush2.bf16.xpose.msra.mxu0 0
    %2262 = vmatprep.subr.bf16.mxu0 0
    %2263 = vmatpush2.bf16.xpose.msra.mxu0 0
    %2264 = vmatprep.subr.bf16.mxu0 0
    %2265 = vmatpush2.bf16.xpose.msra.mxu0 0
    %2266 = vmatprep.subr.bf16.mxu0 0
    %2267 = vmatpush2.bf16.xpose.msra.mxu0 0
    %2268 = vmatprep.subr.bf16.mxu0 0
    %2269 = vmatpush2.bf16.xpose.msra.mxu0 0
    %2270 = vmatprep.subr.bf16.mxu0 0
    %2271 = vmatpush2.bf16.xpose.msra.mxu0 0
    %2272 = vmatprep.subr.bf16.mxu0 0
    %2273 = vmatpush2.bf16.xpose.msra.mxu0 0
    %2274 = vmatprep.mubr.bf16.mxu0 0
    %2275 = vmatmul.mubr.bf16.gmra.mxu0 %v2237
    %v2276 = vpop.f32.mrf.mxu0
    %v2277 = vadd.f32 0.0, %v2276
    %v2278 = vpop.f32.mrf.mxu0
    %v2279 = vpop.f32.mrf.mxu0
    %v2280 = vpop.f32.mrf.mxu0
    %2281 = vdwg.mxu0
    %2282 = vrot.lane.b32.xlu0 %v275, 112
    %v2283 = vpop.permute.xlu0 %2282
    %2284 = vrot.lane.b32.xlu0 %v275, 80
    %v2285 = vpop.permute.xlu0 %2284
    %v2287 = vsel %vm283, %v2283, 0
    %v2290 = vsel %vm283, %v2285, 0
    %2292 = vmatprep.subr.bf16.mxu0 0
    %2293 = vmatpush1.bf16.xpose.msra.mxu0 0
    %2294 = vmatprep.subr.bf16.mxu0 0
    %2295 = vmatpush1.bf16.xpose.msra.mxu0 0
    %2296 = vmatprep.subr.bf16.mxu0 0
    %2297 = vmatpush1.bf16.xpose.msra.mxu0 0
    %2298 = vmatprep.subr.bf16.mxu0 0
    %2299 = vmatpush1.bf16.xpose.msra.mxu0 0
    %2300 = vmatprep.subr.bf16.mxu0 0
    %2301 = vmatpush1.bf16.xpose.msra.mxu0 0
    %2302 = vmatprep.subr.bf16.mxu0 0
    %2303 = vmatpush1.bf16.xpose.msra.mxu0 0
    %2304 = vmatprep.subr.bf16.mxu0 0
    %2305 = vmatpush1.bf16.xpose.msra.mxu0 0
    %2306 = vmatprep.subr.bf16.mxu0 0
    %2307 = vmatpush1.bf16.xpose.msra.mxu0 %v2290
    %2308 = vmatprep.subr.bf16.mxu0 0
    %2309 = vmatpush2.bf16.xpose.msra.mxu0 0
    %2310 = vmatprep.subr.bf16.mxu0 0
    %2311 = vmatpush2.bf16.xpose.msra.mxu0 0
    %2312 = vmatprep.subr.bf16.mxu0 0
    %2313 = vmatpush2.bf16.xpose.msra.mxu0 0
    %2314 = vmatprep.subr.bf16.mxu0 0
    %2315 = vmatpush2.bf16.xpose.msra.mxu0 0
    %2316 = vmatprep.subr.bf16.mxu0 0
    %2317 = vmatpush2.bf16.xpose.msra.mxu0 0
    %2318 = vmatprep.subr.bf16.mxu0 0
    %2319 = vmatpush2.bf16.xpose.msra.mxu0 0
    %2320 = vmatprep.subr.bf16.mxu0 0
    %2321 = vmatpush2.bf16.xpose.msra.mxu0 0
    %2322 = vmatprep.subr.bf16.mxu0 0
    %2323 = vmatpush2.bf16.xpose.msra.mxu0 0
    %2324 = vmatprep.mubr.bf16.mxu0 0
    %2325 = vmatmul.mubr.bf16.gmra.mxu0 %v2287
    %v2326 = vpop.f32.mrf.mxu0
    %v2327 = vadd.f32 0.0, %v2326
    %v2328 = vpop.f32.mrf.mxu0
    %v2329 = vpop.f32.mrf.mxu0
    %v2330 = vpop.f32.mrf.mxu0
    %2331 = vdwg.mxu0
    %2332 = vrot.lane.b32.xlu0 %v276, 112
    %v2333 = vpop.permute.xlu0 %2332
    %2334 = vrot.lane.b32.xlu0 %v276, 80
    %v2335 = vpop.permute.xlu0 %2334
    %v2337 = vsel %vm283, %v2333, 0
    %v2340 = vsel %vm283, %v2335, 0
    %2342 = vmatprep.subr.bf16.mxu0 0
    %2343 = vmatpush1.bf16.xpose.msra.mxu0 0
    %2344 = vmatprep.subr.bf16.mxu0 0
    %2345 = vmatpush1.bf16.xpose.msra.mxu0 0
    %2346 = vmatprep.subr.bf16.mxu0 0
    %2347 = vmatpush1.bf16.xpose.msra.mxu0 0
    %2348 = vmatprep.subr.bf16.mxu0 0
    %2349 = vmatpush1.bf16.xpose.msra.mxu0 0
    %2350 = vmatprep.subr.bf16.mxu0 0
    %2351 = vmatpush1.bf16.xpose.msra.mxu0 0
    %2352 = vmatprep.subr.bf16.mxu0 0
    %2353 = vmatpush1.bf16.xpose.msra.mxu0 0
    %2354 = vmatprep.subr.bf16.mxu0 0
    %2355 = vmatpush1.bf16.xpose.msra.mxu0 0
    %2356 = vmatprep.subr.bf16.mxu0 0
    %2357 = vmatpush1.bf16.xpose.msra.mxu0 %v2340
    %2358 = vmatprep.subr.bf16.mxu0 0
    %2359 = vmatpush2.bf16.xpose.msra.mxu0 0
    %2360 = vmatprep.subr.bf16.mxu0 0
    %2361 = vmatpush2.bf16.xpose.msra.mxu0 0
    %2362 = vmatprep.subr.bf16.mxu0 0
    %2363 = vmatpush2.bf16.xpose.msra.mxu0 0
    %2364 = vmatprep.subr.bf16.mxu0 0
    %2365 = vmatpush2.bf16.xpose.msra.mxu0 0
    %2366 = vmatprep.subr.bf16.mxu0 0
    %2367 = vmatpush2.bf16.xpose.msra.mxu0 0
    %2368 = vmatprep.subr.bf16.mxu0 0
    %2369 = vmatpush2.bf16.xpose.msra.mxu0 0
    %2370 = vmatprep.subr.bf16.mxu0 0
    %2371 = vmatpush2.bf16.xpose.msra.mxu0 0
    %2372 = vmatprep.subr.bf16.mxu0 0
    %2373 = vmatpush2.bf16.xpose.msra.mxu0 0
    %2374 = vmatprep.mubr.bf16.mxu0 0
    %2375 = vmatmul.mubr.bf16.gmra.mxu0 %v2337
    %v2376 = vpop.f32.mrf.mxu0
    %v2377 = vadd.f32 0.0, %v2376
    %v2378 = vpop.f32.mrf.mxu0
    %v2379 = vpop.f32.mrf.mxu0
    %v2380 = vpop.f32.mrf.mxu0
    %2381 = vdwg.mxu0
    %2382 = vrot.lane.b32.xlu0 %v277, 112
    %v2383 = vpop.permute.xlu0 %2382
    %2384 = vrot.lane.b32.xlu0 %v277, 80
    %v2385 = vpop.permute.xlu0 %2384
    %v2387 = vsel %vm283, %v2383, 0
    %v2390 = vsel %vm283, %v2385, 0
    %2392 = vmatprep.subr.bf16.mxu0 0
    %2393 = vmatpush1.bf16.xpose.msra.mxu0 0
    %2394 = vmatprep.subr.bf16.mxu0 0
    %2395 = vmatpush1.bf16.xpose.msra.mxu0 0
    %2396 = vmatprep.subr.bf16.mxu0 0
    %2397 = vmatpush1.bf16.xpose.msra.mxu0 0
    %2398 = vmatprep.subr.bf16.mxu0 0
    %2399 = vmatpush1.bf16.xpose.msra.mxu0 0
    %2400 = vmatprep.subr.bf16.mxu0 0
    %2401 = vmatpush1.bf16.xpose.msra.mxu0 0
    %2402 = vmatprep.subr.bf16.mxu0 0
    %2403 = vmatpush1.bf16.xpose.msra.mxu0 0
    %2404 = vmatprep.subr.bf16.mxu0 0
    %2405 = vmatpush1.bf16.xpose.msra.mxu0 0
    %2406 = vmatprep.subr.bf16.mxu0 0
    %2407 = vmatpush1.bf16.xpose.msra.mxu0 %v2390
    %2408 = vmatprep.subr.bf16.mxu0 0
    %2409 = vmatpush2.bf16.xpose.msra.mxu0 0
    %2410 = vmatprep.subr.bf16.mxu0 0
    %2411 = vmatpush2.bf16.xpose.msra.mxu0 0
    %2412 = vmatprep.subr.bf16.mxu0 0
    %2413 = vmatpush2.bf16.xpose.msra.mxu0 0
    %2414 = vmatprep.subr.bf16.mxu0 0
    %2415 = vmatpush2.bf16.xpose.msra.mxu0 0
    %2416 = vmatprep.subr.bf16.mxu0 0
    %2417 = vmatpush2.bf16.xpose.msra.mxu0 0
    %2418 = vmatprep.subr.bf16.mxu0 0
    %2419 = vmatpush2.bf16.xpose.msra.mxu0 0
    %2420 = vmatprep.subr.bf16.mxu0 0
    %2421 = vmatpush2.bf16.xpose.msra.mxu0 0
    %2422 = vmatprep.subr.bf16.mxu0 0
    %2423 = vmatpush2.bf16.xpose.msra.mxu0 0
    %2424 = vmatprep.mubr.bf16.mxu0 0
    %2425 = vmatmul.mubr.bf16.gmra.mxu0 %v2387
    %v2426 = vpop.f32.mrf.mxu0
    %v2427 = vadd.f32 0.0, %v2426
    %v2428 = vpop.f32.mrf.mxu0
    %v2429 = vpop.f32.mrf.mxu0
    %v2430 = vpop.f32.mrf.mxu0
    %2431 = vdwg.mxu0
    %2432 = vrot.lane.b32.xlu0 %v278, 112
    %v2433 = vpop.permute.xlu0 %2432
    %2434 = vrot.lane.b32.xlu0 %v278, 80
    %v2435 = vpop.permute.xlu0 %2434
    %v2437 = vsel %vm283, %v2433, 0
    %v2440 = vsel %vm283, %v2435, 0
    %2442 = vmatprep.subr.bf16.mxu0 0
    %2443 = vmatpush1.bf16.xpose.msra.mxu0 0
    %2444 = vmatprep.subr.bf16.mxu0 0
    %2445 = vmatpush1.bf16.xpose.msra.mxu0 0
    %2446 = vmatprep.subr.bf16.mxu0 0
    %2447 = vmatpush1.bf16.xpose.msra.mxu0 0
    %2448 = vmatprep.subr.bf16.mxu0 0
    %2449 = vmatpush1.bf16.xpose.msra.mxu0 0
    %2450 = vmatprep.subr.bf16.mxu0 0
    %2451 = vmatpush1.bf16.xpose.msra.mxu0 0
    %2452 = vmatprep.subr.bf16.mxu0 0
    %2453 = vmatpush1.bf16.xpose.msra.mxu0 0
    %2454 = vmatprep.subr.bf16.mxu0 0
    %2455 = vmatpush1.bf16.xpose.msra.mxu0 0
    %2456 = vmatprep.subr.bf16.mxu0 0
    %2457 = vmatpush1.bf16.xpose.msra.mxu0 %v2440
    %2458 = vmatprep.subr.bf16.mxu0 0
    %2459 = vmatpush2.bf16.xpose.msra.mxu0 0
    %2460 = vmatprep.subr.bf16.mxu0 0
    %2461 = vmatpush2.bf16.xpose.msra.mxu0 0
    %2462 = vmatprep.subr.bf16.mxu0 0
    %2463 = vmatpush2.bf16.xpose.msra.mxu0 0
    %2464 = vmatprep.subr.bf16.mxu0 0
    %2465 = vmatpush2.bf16.xpose.msra.mxu0 0
    %2466 = vmatprep.subr.bf16.mxu0 0
    %2467 = vmatpush2.bf16.xpose.msra.mxu0 0
    %2468 = vmatprep.subr.bf16.mxu0 0
    %2469 = vmatpush2.bf16.xpose.msra.mxu0 0
    %2470 = vmatprep.subr.bf16.mxu0 0
    %2471 = vmatpush2.bf16.xpose.msra.mxu0 0
    %2472 = vmatprep.subr.bf16.mxu0 0
    %2473 = vmatpush2.bf16.xpose.msra.mxu0 0
    %2474 = vmatprep.mubr.bf16.mxu0 0
    %2475 = vmatmul.mubr.bf16.gmra.mxu0 %v2437
    %v2476 = vpop.f32.mrf.mxu0
    %v2477 = vadd.f32 0.0, %v2476
    %v2478 = vpop.f32.mrf.mxu0
    %v2479 = vpop.f32.mrf.mxu0
    %v2480 = vpop.f32.mrf.mxu0
    %2481 = vdwg.mxu0
    %2482 = vrot.lane.b32.xlu0 %v279, 112
    %v2483 = vpop.permute.xlu0 %2482
    %2484 = vrot.lane.b32.xlu0 %v279, 80
    %v2485 = vpop.permute.xlu0 %2484
    %v2487 = vsel %vm283, %v2483, 0
    %v2490 = vsel %vm283, %v2485, 0
    %2492 = vmatprep.subr.bf16.mxu0 0
    %2493 = vmatpush1.bf16.xpose.msra.mxu0 0
    %2494 = vmatprep.subr.bf16.mxu0 0
    %2495 = vmatpush1.bf16.xpose.msra.mxu0 0
    %2496 = vmatprep.subr.bf16.mxu0 0
    %2497 = vmatpush1.bf16.xpose.msra.mxu0 0
    %2498 = vmatprep.subr.bf16.mxu0 0
    %2499 = vmatpush1.bf16.xpose.msra.mxu0 0
    %2500 = vmatprep.subr.bf16.mxu0 0
    %2501 = vmatpush1.bf16.xpose.msra.mxu0 0
    %2502 = vmatprep.subr.bf16.mxu0 0
    %2503 = vmatpush1.bf16.xpose.msra.mxu0 0
    %2504 = vmatprep.subr.bf16.mxu0 0
    %2505 = vmatpush1.bf16.xpose.msra.mxu0 0
    %2506 = vmatprep.subr.bf16.mxu0 0
    %2507 = vmatpush1.bf16.xpose.msra.mxu0 %v2490
    %2508 = vmatprep.subr.bf16.mxu0 0
    %2509 = vmatpush2.bf16.xpose.msra.mxu0 0
    %2510 = vmatprep.subr.bf16.mxu0 0
    %2511 = vmatpush2.bf16.xpose.msra.mxu0 0
    %2512 = vmatprep.subr.bf16.mxu0 0
    %2513 = vmatpush2.bf16.xpose.msra.mxu0 0
    %2514 = vmatprep.subr.bf16.mxu0 0
    %2515 = vmatpush2.bf16.xpose.msra.mxu0 0
    %2516 = vmatprep.subr.bf16.mxu0 0
    %2517 = vmatpush2.bf16.xpose.msra.mxu0 0
    %2518 = vmatprep.subr.bf16.mxu0 0
    %2519 = vmatpush2.bf16.xpose.msra.mxu0 0
    %2520 = vmatprep.subr.bf16.mxu0 0
    %2521 = vmatpush2.bf16.xpose.msra.mxu0 0
    %2522 = vmatprep.subr.bf16.mxu0 0
    %2523 = vmatpush2.bf16.xpose.msra.mxu0 0
    %2524 = vmatprep.mubr.bf16.mxu0 0
    %2525 = vmatmul.mubr.bf16.gmra.mxu0 %v2487
    %v2526 = vpop.f32.mrf.mxu0
    %v2527 = vadd.f32 0.0, %v2526
    %v2528 = vpop.f32.mrf.mxu0
    %v2529 = vpop.f32.mrf.mxu0
    %v2530 = vpop.f32.mrf.mxu0
    %2531 = vdwg.mxu0
    %v2532 = vsel %vm283, %v2177, -inf
    %2533 = vmax.xlane.f32.xlu0 %v2532
    %v2534 = vpop.xlane.xlu0 %2533
    %v2535 = vsel %vm283, %v2227, -inf
    %2536 = vmax.xlane.f32.xlu0 %v2535
    %v2537 = vpop.xlane.xlu0 %2536
    %v2538 = vsel %vm283, %v2277, -inf
    %2539 = vmax.xlane.f32.xlu0 %v2538
    %v2540 = vpop.xlane.xlu0 %2539
    %v2541 = vsel %vm283, %v2327, -inf
    %2542 = vmax.xlane.f32.xlu0 %v2541
    %v2543 = vpop.xlane.xlu0 %2542
    %v2544 = vsel %vm283, %v2377, -inf
    %2545 = vmax.xlane.f32.xlu0 %v2544
    %v2546 = vpop.xlane.xlu0 %2545
    %v2547 = vsel %vm283, %v2427, -inf
    %2548 = vmax.xlane.f32.xlu0 %v2547
    %v2549 = vpop.xlane.xlu0 %2548
    %v2550 = vsel %vm283, %v2477, -inf
    %2551 = vmax.xlane.f32.xlu0 %v2550
    %v2552 = vpop.xlane.xlu0 %2551
    %v2553 = vsel %vm283, %v2527, -inf
    %2554 = vmax.xlane.f32.xlu0 %v2553
    %v2555 = vpop.xlane.xlu0 %2554
    %v2556 = vsub.f32 %v2177, %v2534
    %v2557 = vsub.f32 %v2227, %v2537
    %v2558 = vsub.f32 %v2277, %v2540
    %v2559 = vsub.f32 %v2327, %v2543
    %v2560 = vsub.f32 %v2377, %v2546
    %v2561 = vsub.f32 %v2427, %v2549
    %v2562 = vsub.f32 %v2477, %v2552
    %v2563 = vsub.f32 %v2527, %v2555
    %v2564 = vmul.f32 %v2556, 1.442695
    %v2565 = vpow.pop %v2564
    %v2566 = vmul.f32 %v2557, 1.442695
    %v2567 = vpow.pop %v2566
    %v2568 = vmul.f32 %v2558, 1.442695
    %v2569 = vpow.pop %v2568
    %v2570 = vmul.f32 %v2559, 1.442695
    %v2571 = vpow.pop %v2570
    %v2572 = vmul.f32 %v2560, 1.442695
    %v2573 = vpow.pop %v2572
    %v2574 = vmul.f32 %v2561, 1.442695
    %v2575 = vpow.pop %v2574
    %v2576 = vmul.f32 %v2562, 1.442695
    %v2577 = vpow.pop %v2576
    %v2578 = vmul.f32 %v2563, 1.442695
    %v2579 = vpow.pop %v2578
    %v2580 = vsel %vm283, %v2565, 0.0
    %2581 = vadd.xlane.f32.xlu0 %v2580
    %v2582 = vpop.xlane.xlu0 %2581
    %v2583 = vsel %vm283, %v2567, 0.0
    %2584 = vadd.xlane.f32.xlu0 %v2583
    %v2585 = vpop.xlane.xlu0 %2584
    %v2586 = vsel %vm283, %v2569, 0.0
    %2587 = vadd.xlane.f32.xlu0 %v2586
    %v2588 = vpop.xlane.xlu0 %2587
    %v2589 = vsel %vm283, %v2571, 0.0
    %2590 = vadd.xlane.f32.xlu0 %v2589
    %v2591 = vpop.xlane.xlu0 %2590
    %v2592 = vsel %vm283, %v2573, 0.0
    %2593 = vadd.xlane.f32.xlu0 %v2592
    %v2594 = vpop.xlane.xlu0 %2593
    %v2595 = vsel %vm283, %v2575, 0.0
    %2596 = vadd.xlane.f32.xlu0 %v2595
    %v2597 = vpop.xlane.xlu0 %2596
    %v2598 = vsel %vm283, %v2577, 0.0
    %2599 = vadd.xlane.f32.xlu0 %v2598
    %v2600 = vpop.xlane.xlu0 %2599
    %v2601 = vsel %vm283, %v2579, 0.0
    %2602 = vadd.xlane.f32.xlu0 %v2601
    %v2603 = vpop.xlane.xlu0 %2602
    %v2604 = vpack.c.bf16 %v2565, %v2565
    %v2605 = vpack.c.bf16 %v2567, %v2567
    %v2606 = vpack.c.bf16 %v2569, %v2569
    %v2607 = vpack.c.bf16 %v2571, %v2571
    %v2608 = vpack.c.bf16 %v2573, %v2573
    %v2609 = vpack.c.bf16 %v2575, %v2575
    %v2610 = vpack.c.bf16 %v2577, %v2577
    %v2611 = vpack.c.bf16 %v2579, %v2579
    %2612 = vrot.lane.b32.xlu0 %v272, 48
    %v2613 = vpop.permute.xlu0 %2612
    %v2615 = vsel %vm283, %v2604, 0
    %v2618 = vsel %vm758, %v2613, 0
    %2620 = vmatprep.subr.bf16.mxu0 0
    %2621 = vmatpush1.bf16.msra.mxu0 0
    %2622 = vmatprep.subr.bf16.mxu0 0
    %2623 = vmatpush1.bf16.msra.mxu0 0
    %2624 = vmatprep.subr.bf16.mxu0 0
    %2625 = vmatpush1.bf16.msra.mxu0 0
    %2626 = vmatprep.subr.bf16.mxu0 0
    %2627 = vmatpush1.bf16.msra.mxu0 0
    %2628 = vmatprep.subr.bf16.mxu0 0
    %2629 = vmatpush1.bf16.msra.mxu0 0
    %2630 = vmatprep.subr.bf16.mxu0 0
    %2631 = vmatpush1.bf16.msra.mxu0 0
    %2632 = vmatprep.subr.bf16.mxu0 0
    %2633 = vmatpush1.bf16.msra.mxu0 0
    %2634 = vmatprep.subr.bf16.mxu0 0
    %2635 = vmatpush1.bf16.msra.mxu0 %v2618
    %2636 = vmatprep.subr.bf16.mxu0 0
    %2637 = vmatpush2.bf16.msra.mxu0 0
    %2638 = vmatprep.subr.bf16.mxu0 0
    %2639 = vmatpush2.bf16.msra.mxu0 0
    %2640 = vmatprep.subr.bf16.mxu0 0
    %2641 = vmatpush2.bf16.msra.mxu0 0
    %2642 = vmatprep.subr.bf16.mxu0 0
    %2643 = vmatpush2.bf16.msra.mxu0 0
    %2644 = vmatprep.subr.bf16.mxu0 0
    %2645 = vmatpush2.bf16.msra.mxu0 0
    %2646 = vmatprep.subr.bf16.mxu0 0
    %2647 = vmatpush2.bf16.msra.mxu0 0
    %2648 = vmatprep.subr.bf16.mxu0 0
    %2649 = vmatpush2.bf16.msra.mxu0 0
    %2650 = vmatprep.subr.bf16.mxu0 0
    %2651 = vmatpush2.bf16.msra.mxu0 0
    %2652 = vmatprep.mubr.bf16.mxu0 0
    %2653 = vmatmul.mubr.bf16.gmra.mxu0 %v2615
    %v2654 = vpop.f32.mrf.mxu0
    %v2655 = vadd.f32 0.0, %v2654
    %v2656 = vpop.f32.mrf.mxu0
    %v2657 = vpop.f32.mrf.mxu0
    %v2658 = vpop.f32.mrf.mxu0
    %2659 = vdwg.mxu0
    %2660 = vrot.lane.b32.xlu0 %v273, 48
    %v2661 = vpop.permute.xlu0 %2660
    %v2663 = vsel %vm283, %v2605, 0
    %v2666 = vsel %vm758, %v2661, 0
    %2668 = vmatprep.subr.bf16.mxu0 0
    %2669 = vmatpush1.bf16.msra.mxu0 0
    %2670 = vmatprep.subr.bf16.mxu0 0
    %2671 = vmatpush1.bf16.msra.mxu0 0
    %2672 = vmatprep.subr.bf16.mxu0 0
    %2673 = vmatpush1.bf16.msra.mxu0 0
    %2674 = vmatprep.subr.bf16.mxu0 0
    %2675 = vmatpush1.bf16.msra.mxu0 0
    %2676 = vmatprep.subr.bf16.mxu0 0
    %2677 = vmatpush1.bf16.msra.mxu0 0
    %2678 = vmatprep.subr.bf16.mxu0 0
    %2679 = vmatpush1.bf16.msra.mxu0 0
    %2680 = vmatprep.subr.bf16.mxu0 0
    %2681 = vmatpush1.bf16.msra.mxu0 0
    %2682 = vmatprep.subr.bf16.mxu0 0
    %2683 = vmatpush1.bf16.msra.mxu0 %v2666
    %2684 = vmatprep.subr.bf16.mxu0 0
    %2685 = vmatpush2.bf16.msra.mxu0 0
    %2686 = vmatprep.subr.bf16.mxu0 0
    %2687 = vmatpush2.bf16.msra.mxu0 0
    %2688 = vmatprep.subr.bf16.mxu0 0
    %2689 = vmatpush2.bf16.msra.mxu0 0
    %2690 = vmatprep.subr.bf16.mxu0 0
    %2691 = vmatpush2.bf16.msra.mxu0 0
    %2692 = vmatprep.subr.bf16.mxu0 0
    %2693 = vmatpush2.bf16.msra.mxu0 0
    %2694 = vmatprep.subr.bf16.mxu0 0
    %2695 = vmatpush2.bf16.msra.mxu0 0
    %2696 = vmatprep.subr.bf16.mxu0 0
    %2697 = vmatpush2.bf16.msra.mxu0 0
    %2698 = vmatprep.subr.bf16.mxu0 0
    %2699 = vmatpush2.bf16.msra.mxu0 0
    %2700 = vmatprep.mubr.bf16.mxu0 0
    %2701 = vmatmul.mubr.bf16.gmra.mxu0 %v2663
    %v2702 = vpop.f32.mrf.mxu0
    %v2703 = vadd.f32 0.0, %v2702
    %v2704 = vpop.f32.mrf.mxu0
    %v2705 = vpop.f32.mrf.mxu0
    %v2706 = vpop.f32.mrf.mxu0
    %2707 = vdwg.mxu0
    %2708 = vrot.lane.b32.xlu0 %v274, 48
    %v2709 = vpop.permute.xlu0 %2708
    %v2711 = vsel %vm283, %v2606, 0
    %v2714 = vsel %vm758, %v2709, 0
    %2716 = vmatprep.subr.bf16.mxu0 0
    %2717 = vmatpush1.bf16.msra.mxu0 0
    %2718 = vmatprep.subr.bf16.mxu0 0
    %2719 = vmatpush1.bf16.msra.mxu0 0
    %2720 = vmatprep.subr.bf16.mxu0 0
    %2721 = vmatpush1.bf16.msra.mxu0 0
    %2722 = vmatprep.subr.bf16.mxu0 0
    %2723 = vmatpush1.bf16.msra.mxu0 0
    %2724 = vmatprep.subr.bf16.mxu0 0
    %2725 = vmatpush1.bf16.msra.mxu0 0
    %2726 = vmatprep.subr.bf16.mxu0 0
    %2727 = vmatpush1.bf16.msra.mxu0 0
    %2728 = vmatprep.subr.bf16.mxu0 0
    %2729 = vmatpush1.bf16.msra.mxu0 0
    %2730 = vmatprep.subr.bf16.mxu0 0
    %2731 = vmatpush1.bf16.msra.mxu0 %v2714
    %2732 = vmatprep.subr.bf16.mxu0 0
    %2733 = vmatpush2.bf16.msra.mxu0 0
    %2734 = vmatprep.subr.bf16.mxu0 0
    %2735 = vmatpush2.bf16.msra.mxu0 0
    %2736 = vmatprep.subr.bf16.mxu0 0
    %2737 = vmatpush2.bf16.msra.mxu0 0
    %2738 = vmatprep.subr.bf16.mxu0 0
    %2739 = vmatpush2.bf16.msra.mxu0 0
    %2740 = vmatprep.subr.bf16.mxu0 0
    %2741 = vmatpush2.bf16.msra.mxu0 0
    %2742 = vmatprep.subr.bf16.mxu0 0
    %2743 = vmatpush2.bf16.msra.mxu0 0
    %2744 = vmatprep.subr.bf16.mxu0 0
    %2745 = vmatpush2.bf16.msra.mxu0 0
    %2746 = vmatprep.subr.bf16.mxu0 0
    %2747 = vmatpush2.bf16.msra.mxu0 0
    %2748 = vmatprep.mubr.bf16.mxu0 0
    %2749 = vmatmul.mubr.bf16.gmra.mxu0 %v2711
    %v2750 = vpop.f32.mrf.mxu0
    %v2751 = vadd.f32 0.0, %v2750
    %v2752 = vpop.f32.mrf.mxu0
    %v2753 = vpop.f32.mrf.mxu0
    %v2754 = vpop.f32.mrf.mxu0
    %2755 = vdwg.mxu0
    %2756 = vrot.lane.b32.xlu0 %v275, 48
    %v2757 = vpop.permute.xlu0 %2756
    %v2759 = vsel %vm283, %v2607, 0
    %v2762 = vsel %vm758, %v2757, 0
    %2764 = vmatprep.subr.bf16.mxu0 0
    %2765 = vmatpush1.bf16.msra.mxu0 0
    %2766 = vmatprep.subr.bf16.mxu0 0
    %2767 = vmatpush1.bf16.msra.mxu0 0
    %2768 = vmatprep.subr.bf16.mxu0 0
    %2769 = vmatpush1.bf16.msra.mxu0 0
    %2770 = vmatprep.subr.bf16.mxu0 0
    %2771 = vmatpush1.bf16.msra.mxu0 0
    %2772 = vmatprep.subr.bf16.mxu0 0
    %2773 = vmatpush1.bf16.msra.mxu0 0
    %2774 = vmatprep.subr.bf16.mxu0 0
    %2775 = vmatpush1.bf16.msra.mxu0 0
    %2776 = vmatprep.subr.bf16.mxu0 0
    %2777 = vmatpush1.bf16.msra.mxu0 0
    %2778 = vmatprep.subr.bf16.mxu0 0
    %2779 = vmatpush1.bf16.msra.mxu0 %v2762
    %2780 = vmatprep.subr.bf16.mxu0 0
    %2781 = vmatpush2.bf16.msra.mxu0 0
    %2782 = vmatprep.subr.bf16.mxu0 0
    %2783 = vmatpush2.bf16.msra.mxu0 0
    %2784 = vmatprep.subr.bf16.mxu0 0
    %2785 = vmatpush2.bf16.msra.mxu0 0
    %2786 = vmatprep.subr.bf16.mxu0 0
    %2787 = vmatpush2.bf16.msra.mxu0 0
    %2788 = vmatprep.subr.bf16.mxu0 0
    %2789 = vmatpush2.bf16.msra.mxu0 0
    %2790 = vmatprep.subr.bf16.mxu0 0
    %2791 = vmatpush2.bf16.msra.mxu0 0
    %2792 = vmatprep.subr.bf16.mxu0 0
    %2793 = vmatpush2.bf16.msra.mxu0 0
    %2794 = vmatprep.subr.bf16.mxu0 0
    %2795 = vmatpush2.bf16.msra.mxu0 0
    %2796 = vmatprep.mubr.bf16.mxu0 0
    %2797 = vmatmul.mubr.bf16.gmra.mxu0 %v2759
    %v2798 = vpop.f32.mrf.mxu0
    %v2799 = vadd.f32 0.0, %v2798
    %v2800 = vpop.f32.mrf.mxu0
    %v2801 = vpop.f32.mrf.mxu0
    %v2802 = vpop.f32.mrf.mxu0
    %2803 = vdwg.mxu0
    %2804 = vrot.lane.b32.xlu0 %v276, 48
    %v2805 = vpop.permute.xlu0 %2804
    %v2807 = vsel %vm283, %v2608, 0
    %v2810 = vsel %vm758, %v2805, 0
    %2812 = vmatprep.subr.bf16.mxu0 0
    %2813 = vmatpush1.bf16.msra.mxu0 0
    %2814 = vmatprep.subr.bf16.mxu0 0
    %2815 = vmatpush1.bf16.msra.mxu0 0
    %2816 = vmatprep.subr.bf16.mxu0 0
    %2817 = vmatpush1.bf16.msra.mxu0 0
    %2818 = vmatprep.subr.bf16.mxu0 0
    %2819 = vmatpush1.bf16.msra.mxu0 0
    %2820 = vmatprep.subr.bf16.mxu0 0
    %2821 = vmatpush1.bf16.msra.mxu0 0
    %2822 = vmatprep.subr.bf16.mxu0 0
    %2823 = vmatpush1.bf16.msra.mxu0 0
    %2824 = vmatprep.subr.bf16.mxu0 0
    %2825 = vmatpush1.bf16.msra.mxu0 0
    %2826 = vmatprep.subr.bf16.mxu0 0
    %2827 = vmatpush1.bf16.msra.mxu0 %v2810
    %2828 = vmatprep.subr.bf16.mxu0 0
    %2829 = vmatpush2.bf16.msra.mxu0 0
    %2830 = vmatprep.subr.bf16.mxu0 0
    %2831 = vmatpush2.bf16.msra.mxu0 0
    %2832 = vmatprep.subr.bf16.mxu0 0
    %2833 = vmatpush2.bf16.msra.mxu0 0
    %2834 = vmatprep.subr.bf16.mxu0 0
    %2835 = vmatpush2.bf16.msra.mxu0 0
    %2836 = vmatprep.subr.bf16.mxu0 0
    %2837 = vmatpush2.bf16.msra.mxu0 0
    %2838 = vmatprep.subr.bf16.mxu0 0
    %2839 = vmatpush2.bf16.msra.mxu0 0
    %2840 = vmatprep.subr.bf16.mxu0 0
    %2841 = vmatpush2.bf16.msra.mxu0 0
    %2842 = vmatprep.subr.bf16.mxu0 0
    %2843 = vmatpush2.bf16.msra.mxu0 0
    %2844 = vmatprep.mubr.bf16.mxu0 0
    %2845 = vmatmul.mubr.bf16.gmra.mxu0 %v2807
    %v2846 = vpop.f32.mrf.mxu0
    %v2847 = vadd.f32 0.0, %v2846
    %v2848 = vpop.f32.mrf.mxu0
    %v2849 = vpop.f32.mrf.mxu0
    %v2850 = vpop.f32.mrf.mxu0
    %2851 = vdwg.mxu0
    %2852 = vrot.lane.b32.xlu0 %v277, 48
    %v2853 = vpop.permute.xlu0 %2852
    %v2855 = vsel %vm283, %v2609, 0
    %v2858 = vsel %vm758, %v2853, 0
    %2860 = vmatprep.subr.bf16.mxu0 0
    %2861 = vmatpush1.bf16.msra.mxu0 0
    %2862 = vmatprep.subr.bf16.mxu0 0
    %2863 = vmatpush1.bf16.msra.mxu0 0
    %2864 = vmatprep.subr.bf16.mxu0 0
    %2865 = vmatpush1.bf16.msra.mxu0 0
    %2866 = vmatprep.subr.bf16.mxu0 0
    %2867 = vmatpush1.bf16.msra.mxu0 0
    %2868 = vmatprep.subr.bf16.mxu0 0
    %2869 = vmatpush1.bf16.msra.mxu0 0
    %2870 = vmatprep.subr.bf16.mxu0 0
    %2871 = vmatpush1.bf16.msra.mxu0 0
    %2872 = vmatprep.subr.bf16.mxu0 0
    %2873 = vmatpush1.bf16.msra.mxu0 0
    %2874 = vmatprep.subr.bf16.mxu0 0
    %2875 = vmatpush1.bf16.msra.mxu0 %v2858
    %2876 = vmatprep.subr.bf16.mxu0 0
    %2877 = vmatpush2.bf16.msra.mxu0 0
    %2878 = vmatprep.subr.bf16.mxu0 0
    %2879 = vmatpush2.bf16.msra.mxu0 0
    %2880 = vmatprep.subr.bf16.mxu0 0
    %2881 = vmatpush2.bf16.msra.mxu0 0
    %2882 = vmatprep.subr.bf16.mxu0 0
    %2883 = vmatpush2.bf16.msra.mxu0 0
    %2884 = vmatprep.subr.bf16.mxu0 0
    %2885 = vmatpush2.bf16.msra.mxu0 0
    %2886 = vmatprep.subr.bf16.mxu0 0
    %2887 = vmatpush2.bf16.msra.mxu0 0
    %2888 = vmatprep.subr.bf16.mxu0 0
    %2889 = vmatpush2.bf16.msra.mxu0 0
    %2890 = vmatprep.subr.bf16.mxu0 0
    %2891 = vmatpush2.bf16.msra.mxu0 0
    %2892 = vmatprep.mubr.bf16.mxu0 0
    %2893 = vmatmul.mubr.bf16.gmra.mxu0 %v2855
    %v2894 = vpop.f32.mrf.mxu0
    %v2895 = vadd.f32 0.0, %v2894
    %v2896 = vpop.f32.mrf.mxu0
    %v2897 = vpop.f32.mrf.mxu0
    %v2898 = vpop.f32.mrf.mxu0
    %2899 = vdwg.mxu0
    %2900 = vrot.lane.b32.xlu0 %v278, 48
    %v2901 = vpop.permute.xlu0 %2900
    %v2903 = vsel %vm283, %v2610, 0
    %v2906 = vsel %vm758, %v2901, 0
    %2908 = vmatprep.subr.bf16.mxu0 0
    %2909 = vmatpush1.bf16.msra.mxu0 0
    %2910 = vmatprep.subr.bf16.mxu0 0
    %2911 = vmatpush1.bf16.msra.mxu0 0
    %2912 = vmatprep.subr.bf16.mxu0 0
    %2913 = vmatpush1.bf16.msra.mxu0 0
    %2914 = vmatprep.subr.bf16.mxu0 0
    %2915 = vmatpush1.bf16.msra.mxu0 0
    %2916 = vmatprep.subr.bf16.mxu0 0
    %2917 = vmatpush1.bf16.msra.mxu0 0
    %2918 = vmatprep.subr.bf16.mxu0 0
    %2919 = vmatpush1.bf16.msra.mxu0 0
    %2920 = vmatprep.subr.bf16.mxu0 0
    %2921 = vmatpush1.bf16.msra.mxu0 0
    %2922 = vmatprep.subr.bf16.mxu0 0
    %2923 = vmatpush1.bf16.msra.mxu0 %v2906
    %2924 = vmatprep.subr.bf16.mxu0 0
    %2925 = vmatpush2.bf16.msra.mxu0 0
    %2926 = vmatprep.subr.bf16.mxu0 0
    %2927 = vmatpush2.bf16.msra.mxu0 0
    %2928 = vmatprep.subr.bf16.mxu0 0
    %2929 = vmatpush2.bf16.msra.mxu0 0
    %2930 = vmatprep.subr.bf16.mxu0 0
    %2931 = vmatpush2.bf16.msra.mxu0 0
    %2932 = vmatprep.subr.bf16.mxu0 0
    %2933 = vmatpush2.bf16.msra.mxu0 0
    %2934 = vmatprep.subr.bf16.mxu0 0
    %2935 = vmatpush2.bf16.msra.mxu0 0
    %2936 = vmatprep.subr.bf16.mxu0 0
    %2937 = vmatpush2.bf16.msra.mxu0 0
    %2938 = vmatprep.subr.bf16.mxu0 0
    %2939 = vmatpush2.bf16.msra.mxu0 0
    %2940 = vmatprep.mubr.bf16.mxu0 0
    %2941 = vmatmul.mubr.bf16.gmra.mxu0 %v2903
    %v2942 = vpop.f32.mrf.mxu0
    %v2943 = vadd.f32 0.0, %v2942
    %v2944 = vpop.f32.mrf.mxu0
    %v2945 = vpop.f32.mrf.mxu0
    %v2946 = vpop.f32.mrf.mxu0
    %2947 = vdwg.mxu0
    %2948 = vrot.lane.b32.xlu0 %v279, 48
    %v2949 = vpop.permute.xlu0 %2948
    %v2951 = vsel %vm283, %v2611, 0
    %v2954 = vsel %vm758, %v2949, 0
    %2956 = vmatprep.subr.bf16.mxu0 0
    %2957 = vmatpush1.bf16.msra.mxu0 0
    %2958 = vmatprep.subr.bf16.mxu0 0
    %2959 = vmatpush1.bf16.msra.mxu0 0
    %2960 = vmatprep.subr.bf16.mxu0 0
    %2961 = vmatpush1.bf16.msra.mxu0 0
    %2962 = vmatprep.subr.bf16.mxu0 0
    %2963 = vmatpush1.bf16.msra.mxu0 0
    %2964 = vmatprep.subr.bf16.mxu0 0
    %2965 = vmatpush1.bf16.msra.mxu0 0
    %2966 = vmatprep.subr.bf16.mxu0 0
    %2967 = vmatpush1.bf16.msra.mxu0 0
    %2968 = vmatprep.subr.bf16.mxu0 0
    %2969 = vmatpush1.bf16.msra.mxu0 0
    %2970 = vmatprep.subr.bf16.mxu0 0
    %2971 = vmatpush1.bf16.msra.mxu0 %v2954
    %2972 = vmatprep.subr.bf16.mxu0 0
    %2973 = vmatpush2.bf16.msra.mxu0 0
    %2974 = vmatprep.subr.bf16.mxu0 0
    %2975 = vmatpush2.bf16.msra.mxu0 0
    %2976 = vmatprep.subr.bf16.mxu0 0
    %2977 = vmatpush2.bf16.msra.mxu0 0
    %2978 = vmatprep.subr.bf16.mxu0 0
    %2979 = vmatpush2.bf16.msra.mxu0 0
    %2980 = vmatprep.subr.bf16.mxu0 0
    %2981 = vmatpush2.bf16.msra.mxu0 0
    %2982 = vmatprep.subr.bf16.mxu0 0
    %2983 = vmatpush2.bf16.msra.mxu0 0
    %2984 = vmatprep.subr.bf16.mxu0 0
    %2985 = vmatpush2.bf16.msra.mxu0 0
    %2986 = vmatprep.subr.bf16.mxu0 0
    %2987 = vmatpush2.bf16.msra.mxu0 0
    %2988 = vmatprep.mubr.bf16.mxu0 0
    %2989 = vmatmul.mubr.bf16.gmra.mxu0 %v2951
    %v2990 = vpop.f32.mrf.mxu0
    %v2991 = vadd.f32 0.0, %v2990
    %v2992 = vpop.f32.mrf.mxu0
    %v2993 = vpop.f32.mrf.mxu0
    %v2994 = vpop.f32.mrf.mxu0
    %2995 = vdwg.mxu0
    %v2996 = vrcp.pop %v2582
    %v2997 = vrcp.pop %v2585
    %v2998 = vrcp.pop %v2588
    %v2999 = vrcp.pop %v2591
    %v3000 = vrcp.pop %v2594
    %v3001 = vrcp.pop %v2597
    %v3002 = vrcp.pop %v2600
    %v3003 = vrcp.pop %v2603
    %v3004 = vmul.f32 %v2655, %v2996
    %v3005 = vmul.f32 %v2703, %v2997
    %v3006 = vmul.f32 %v2751, %v2998
    %v3007 = vmul.f32 %v2799, %v2999
    %v3008 = vmul.f32 %v2847, %v3000
    %v3009 = vmul.f32 %v2895, %v3001
    %v3010 = vmul.f32 %v2943, %v3002
    %v3011 = vmul.f32 %v2991, %v3003
    %v3012 = vpack.c.bf16 %v3005, %v3004
    %v3013 = vpack.c.bf16 %v3007, %v3006
    %v3014 = vpack.c.bf16 %v3009, %v3008
    %v3015 = vpack.c.bf16 %v3011, %v3010
    %v3020 = vunpack.c.l.b16 %v3012
    %v3021 = vunpack.c.h.b16 %v3012
    %v3022 = vunpack.c.l.b16 %v3013
    %v3023 = vunpack.c.h.b16 %v3013
    %v3024 = vunpack.c.l.b16 %v3014
    %v3025 = vunpack.c.h.b16 %v3014
    %v3026 = vunpack.c.l.b16 %v3015
    %v3027 = vunpack.c.h.b16 %v3015
    %v3028 = vpack.c.b16 %v3020, %v3020
    %v3029 = vpack.c.b16 %v3021, %v3021
    %v3030 = vpack.c.b16 %v3022, %v3022
    %v3031 = vpack.c.b16 %v3023, %v3023
    %v3032 = vpack.c.b16 %v3024, %v3024
    %v3033 = vpack.c.b16 %v3025, %v3025
    %v3034 = vpack.c.b16 %v3026, %v3026
    %v3035 = vpack.c.b16 %v3027, %v3027
    %3036 = vrot.lane.b32.xlu0 %v3028, 16
    %v3037 = vpop.permute.xlu0 %3036
    %3038 = vrot.lane.b32.xlu0 %v3029, 16
    %v3039 = vpop.permute.xlu0 %3038
    %3040 = vrot.lane.b32.xlu0 %v3030, 16
    %v3041 = vpop.permute.xlu0 %3040
    %3042 = vrot.lane.b32.xlu0 %v3031, 16
    %v3043 = vpop.permute.xlu0 %3042
    %3044 = vrot.lane.b32.xlu0 %v3032, 16
    %v3045 = vpop.permute.xlu0 %3044
    %3046 = vrot.lane.b32.xlu0 %v3033, 16
    %v3047 = vpop.permute.xlu0 %3046
    %3048 = vrot.lane.b32.xlu0 %v3034, 16
    %v3049 = vpop.permute.xlu0 %3048
    %3050 = vrot.lane.b32.xlu0 %v3035, 16
    %v3051 = vpop.permute.xlu0 %3050
    %vm3060 = vcmask 191616
    %3061 = vst.msk [vmem:[#allocation2] sm:$0xf] %vm3060, %v3037
    %3062 = vst.msk [vmem:[#allocation2 + $0x4] sm:$0xf] %vm3060, %v3039
    %3063 = vst.msk [vmem:[#allocation2 + $0x8] sm:$0xf] %vm3060, %v3041
    %3064 = vst.msk [vmem:[#allocation2 + $0xc] sm:$0xf] %vm3060, %v3043
    %3065 = vst.msk [vmem:[#allocation2 + $0x10] sm:$0xf] %vm3060, %v3045
    %3066 = vst.msk [vmem:[#allocation2 + $0x14] sm:$0xf] %vm3060, %v3047
    %3067 = vst.msk [vmem:[#allocation2 + $0x18] sm:$0xf] %vm3060, %v3049
    %3068 = vst.msk [vmem:[#allocation2 + $0x1c] sm:$0xf] %vm3060, %v3051
    %3069 = vrot.lane.b32.xlu0 %v272, 104
    %v3070 = vpop.permute.xlu0 %3069
    %3071 = vrot.lane.b32.xlu0 %v272, 72
    %v3072 = vpop.permute.xlu0 %3071
    %v3074 = vsel %vm283, %v3070, 0
    %v3077 = vsel %vm283, %v3072, 0
    %3079 = vmatprep.subr.bf16.mxu0 0
    %3080 = vmatpush1.bf16.xpose.msra.mxu0 0
    %3081 = vmatprep.subr.bf16.mxu0 0
    %3082 = vmatpush1.bf16.xpose.msra.mxu0 0
    %3083 = vmatprep.subr.bf16.mxu0 0
    %3084 = vmatpush1.bf16.xpose.msra.mxu0 0
    %3085 = vmatprep.subr.bf16.mxu0 0
    %3086 = vmatpush1.bf16.xpose.msra.mxu0 0
    %3087 = vmatprep.subr.bf16.mxu0 0
    %3088 = vmatpush1.bf16.xpose.msra.mxu0 0
    %3089 = vmatprep.subr.bf16.mxu0 0
    %3090 = vmatpush1.bf16.xpose.msra.mxu0 0
    %3091 = vmatprep.subr.bf16.mxu0 0
    %3092 = vmatpush1.bf16.xpose.msra.mxu0 0
    %3093 = vmatprep.subr.bf16.mxu0 0
    %3094 = vmatpush1.bf16.xpose.msra.mxu0 %v3077
    %3095 = vmatprep.subr.bf16.mxu0 0
    %3096 = vmatpush2.bf16.xpose.msra.mxu0 0
    %3097 = vmatprep.subr.bf16.mxu0 0
    %3098 = vmatpush2.bf16.xpose.msra.mxu0 0
    %3099 = vmatprep.subr.bf16.mxu0 0
    %3100 = vmatpush2.bf16.xpose.msra.mxu0 0
    %3101 = vmatprep.subr.bf16.mxu0 0
    %3102 = vmatpush2.bf16.xpose.msra.mxu0 0
    %3103 = vmatprep.subr.bf16.mxu0 0
    %3104 = vmatpush2.bf16.xpose.msra.mxu0 0
    %3105 = vmatprep.subr.bf16.mxu0 0
    %3106 = vmatpush2.bf16.xpose.msra.mxu0 0
    %3107 = vmatprep.subr.bf16.mxu0 0
    %3108 = vmatpush2.bf16.xpose.msra.mxu0 0
    %3109 = vmatprep.subr.bf16.mxu0 0
    %3110 = vmatpush2.bf16.xpose.msra.mxu0 0
    %3111 = vmatprep.mubr.bf16.mxu0 0
    %3112 = vmatmul.mubr.bf16.gmra.mxu0 %v3074
    %v3113 = vpop.f32.mrf.mxu0
    %v3114 = vadd.f32 0.0, %v3113
    %v3115 = vpop.f32.mrf.mxu0
    %v3116 = vpop.f32.mrf.mxu0
    %v3117 = vpop.f32.mrf.mxu0
    %3118 = vdwg.mxu0
    %3119 = vrot.lane.b32.xlu0 %v273, 104
    %v3120 = vpop.permute.xlu0 %3119
    %3121 = vrot.lane.b32.xlu0 %v273, 72
    %v3122 = vpop.permute.xlu0 %3121
    %v3124 = vsel %vm283, %v3120, 0
    %v3127 = vsel %vm283, %v3122, 0
    %3129 = vmatprep.subr.bf16.mxu0 0
    %3130 = vmatpush1.bf16.xpose.msra.mxu0 0
    %3131 = vmatprep.subr.bf16.mxu0 0
    %3132 = vmatpush1.bf16.xpose.msra.mxu0 0
    %3133 = vmatprep.subr.bf16.mxu0 0
    %3134 = vmatpush1.bf16.xpose.msra.mxu0 0
    %3135 = vmatprep.subr.bf16.mxu0 0
    %3136 = vmatpush1.bf16.xpose.msra.mxu0 0
    %3137 = vmatprep.subr.bf16.mxu0 0
    %3138 = vmatpush1.bf16.xpose.msra.mxu0 0
    %3139 = vmatprep.subr.bf16.mxu0 0
    %3140 = vmatpush1.bf16.xpose.msra.mxu0 0
    %3141 = vmatprep.subr.bf16.mxu0 0
    %3142 = vmatpush1.bf16.xpose.msra.mxu0 0
    %3143 = vmatprep.subr.bf16.mxu0 0
    %3144 = vmatpush1.bf16.xpose.msra.mxu0 %v3127
    %3145 = vmatprep.subr.bf16.mxu0 0
    %3146 = vmatpush2.bf16.xpose.msra.mxu0 0
    %3147 = vmatprep.subr.bf16.mxu0 0
    %3148 = vmatpush2.bf16.xpose.msra.mxu0 0
    %3149 = vmatprep.subr.bf16.mxu0 0
    %3150 = vmatpush2.bf16.xpose.msra.mxu0 0
    %3151 = vmatprep.subr.bf16.mxu0 0
    %3152 = vmatpush2.bf16.xpose.msra.mxu0 0
    %3153 = vmatprep.subr.bf16.mxu0 0
    %3154 = vmatpush2.bf16.xpose.msra.mxu0 0
    %3155 = vmatprep.subr.bf16.mxu0 0
    %3156 = vmatpush2.bf16.xpose.msra.mxu0 0
    %3157 = vmatprep.subr.bf16.mxu0 0
    %3158 = vmatpush2.bf16.xpose.msra.mxu0 0
    %3159 = vmatprep.subr.bf16.mxu0 0
    %3160 = vmatpush2.bf16.xpose.msra.mxu0 0
    %3161 = vmatprep.mubr.bf16.mxu0 0
    %3162 = vmatmul.mubr.bf16.gmra.mxu0 %v3124
    %v3163 = vpop.f32.mrf.mxu0
    %v3164 = vadd.f32 0.0, %v3163
    %v3165 = vpop.f32.mrf.mxu0
    %v3166 = vpop.f32.mrf.mxu0
    %v3167 = vpop.f32.mrf.mxu0
    %3168 = vdwg.mxu0
    %3169 = vrot.lane.b32.xlu0 %v274, 104
    %v3170 = vpop.permute.xlu0 %3169
    %3171 = vrot.lane.b32.xlu0 %v274, 72
    %v3172 = vpop.permute.xlu0 %3171
    %v3174 = vsel %vm283, %v3170, 0
    %v3177 = vsel %vm283, %v3172, 0
    %3179 = vmatprep.subr.bf16.mxu0 0
    %3180 = vmatpush1.bf16.xpose.msra.mxu0 0
    %3181 = vmatprep.subr.bf16.mxu0 0
    %3182 = vmatpush1.bf16.xpose.msra.mxu0 0
    %3183 = vmatprep.subr.bf16.mxu0 0
    %3184 = vmatpush1.bf16.xpose.msra.mxu0 0
    %3185 = vmatprep.subr.bf16.mxu0 0
    %3186 = vmatpush1.bf16.xpose.msra.mxu0 0
    %3187 = vmatprep.subr.bf16.mxu0 0
    %3188 = vmatpush1.bf16.xpose.msra.mxu0 0
    %3189 = vmatprep.subr.bf16.mxu0 0
    %3190 = vmatpush1.bf16.xpose.msra.mxu0 0
    %3191 = vmatprep.subr.bf16.mxu0 0
    %3192 = vmatpush1.bf16.xpose.msra.mxu0 0
    %3193 = vmatprep.subr.bf16.mxu0 0
    %3194 = vmatpush1.bf16.xpose.msra.mxu0 %v3177
    %3195 = vmatprep.subr.bf16.mxu0 0
    %3196 = vmatpush2.bf16.xpose.msra.mxu0 0
    %3197 = vmatprep.subr.bf16.mxu0 0
    %3198 = vmatpush2.bf16.xpose.msra.mxu0 0
    %3199 = vmatprep.subr.bf16.mxu0 0
    %3200 = vmatpush2.bf16.xpose.msra.mxu0 0
    %3201 = vmatprep.subr.bf16.mxu0 0
    %3202 = vmatpush2.bf16.xpose.msra.mxu0 0
    %3203 = vmatprep.subr.bf16.mxu0 0
    %3204 = vmatpush2.bf16.xpose.msra.mxu0 0
    %3205 = vmatprep.subr.bf16.mxu0 0
    %3206 = vmatpush2.bf16.xpose.msra.mxu0 0
    %3207 = vmatprep.subr.bf16.mxu0 0
    %3208 = vmatpush2.bf16.xpose.msra.mxu0 0
    %3209 = vmatprep.subr.bf16.mxu0 0
    %3210 = vmatpush2.bf16.xpose.msra.mxu0 0
    %3211 = vmatprep.mubr.bf16.mxu0 0
    %3212 = vmatmul.mubr.bf16.gmra.mxu0 %v3174
    %v3213 = vpop.f32.mrf.mxu0
    %v3214 = vadd.f32 0.0, %v3213
    %v3215 = vpop.f32.mrf.mxu0
    %v3216 = vpop.f32.mrf.mxu0
    %v3217 = vpop.f32.mrf.mxu0
    %3218 = vdwg.mxu0
    %3219 = vrot.lane.b32.xlu0 %v275, 104
    %v3220 = vpop.permute.xlu0 %3219
    %3221 = vrot.lane.b32.xlu0 %v275, 72
    %v3222 = vpop.permute.xlu0 %3221
    %v3224 = vsel %vm283, %v3220, 0
    %v3227 = vsel %vm283, %v3222, 0
    %3229 = vmatprep.subr.bf16.mxu0 0
    %3230 = vmatpush1.bf16.xpose.msra.mxu0 0
    %3231 = vmatprep.subr.bf16.mxu0 0
    %3232 = vmatpush1.bf16.xpose.msra.mxu0 0
    %3233 = vmatprep.subr.bf16.mxu0 0
    %3234 = vmatpush1.bf16.xpose.msra.mxu0 0
    %3235 = vmatprep.subr.bf16.mxu0 0
    %3236 = vmatpush1.bf16.xpose.msra.mxu0 0
    %3237 = vmatprep.subr.bf16.mxu0 0
    %3238 = vmatpush1.bf16.xpose.msra.mxu0 0
    %3239 = vmatprep.subr.bf16.mxu0 0
    %3240 = vmatpush1.bf16.xpose.msra.mxu0 0
    %3241 = vmatprep.subr.bf16.mxu0 0
    %3242 = vmatpush1.bf16.xpose.msra.mxu0 0
    %3243 = vmatprep.subr.bf16.mxu0 0
    %3244 = vmatpush1.bf16.xpose.msra.mxu0 %v3227
    %3245 = vmatprep.subr.bf16.mxu0 0
    %3246 = vmatpush2.bf16.xpose.msra.mxu0 0
    %3247 = vmatprep.subr.bf16.mxu0 0
    %3248 = vmatpush2.bf16.xpose.msra.mxu0 0
    %3249 = vmatprep.subr.bf16.mxu0 0
    %3250 = vmatpush2.bf16.xpose.msra.mxu0 0
    %3251 = vmatprep.subr.bf16.mxu0 0
    %3252 = vmatpush2.bf16.xpose.msra.mxu0 0
    %3253 = vmatprep.subr.bf16.mxu0 0
    %3254 = vmatpush2.bf16.xpose.msra.mxu0 0
    %3255 = vmatprep.subr.bf16.mxu0 0
    %3256 = vmatpush2.bf16.xpose.msra.mxu0 0
    %3257 = vmatprep.subr.bf16.mxu0 0
    %3258 = vmatpush2.bf16.xpose.msra.mxu0 0
    %3259 = vmatprep.subr.bf16.mxu0 0
    %3260 = vmatpush2.bf16.xpose.msra.mxu0 0
    %3261 = vmatprep.mubr.bf16.mxu0 0
    %3262 = vmatmul.mubr.bf16.gmra.mxu0 %v3224
    %v3263 = vpop.f32.mrf.mxu0
    %v3264 = vadd.f32 0.0, %v3263
    %v3265 = vpop.f32.mrf.mxu0
    %v3266 = vpop.f32.mrf.mxu0
    %v3267 = vpop.f32.mrf.mxu0
    %3268 = vdwg.mxu0
    %3269 = vrot.lane.b32.xlu0 %v276, 104
    %v3270 = vpop.permute.xlu0 %3269
    %3271 = vrot.lane.b32.xlu0 %v276, 72
    %v3272 = vpop.permute.xlu0 %3271
    %v3274 = vsel %vm283, %v3270, 0
    %v3277 = vsel %vm283, %v3272, 0
    %3279 = vmatprep.subr.bf16.mxu0 0
    %3280 = vmatpush1.bf16.xpose.msra.mxu0 0
    %3281 = vmatprep.subr.bf16.mxu0 0
    %3282 = vmatpush1.bf16.xpose.msra.mxu0 0
    %3283 = vmatprep.subr.bf16.mxu0 0
    %3284 = vmatpush1.bf16.xpose.msra.mxu0 0
    %3285 = vmatprep.subr.bf16.mxu0 0
    %3286 = vmatpush1.bf16.xpose.msra.mxu0 0
    %3287 = vmatprep.subr.bf16.mxu0 0
    %3288 = vmatpush1.bf16.xpose.msra.mxu0 0
    %3289 = vmatprep.subr.bf16.mxu0 0
    %3290 = vmatpush1.bf16.xpose.msra.mxu0 0
    %3291 = vmatprep.subr.bf16.mxu0 0
    %3292 = vmatpush1.bf16.xpose.msra.mxu0 0
    %3293 = vmatprep.subr.bf16.mxu0 0
    %3294 = vmatpush1.bf16.xpose.msra.mxu0 %v3277
    %3295 = vmatprep.subr.bf16.mxu0 0
    %3296 = vmatpush2.bf16.xpose.msra.mxu0 0
    %3297 = vmatprep.subr.bf16.mxu0 0
    %3298 = vmatpush2.bf16.xpose.msra.mxu0 0
    %3299 = vmatprep.subr.bf16.mxu0 0
    %3300 = vmatpush2.bf16.xpose.msra.mxu0 0
    %3301 = vmatprep.subr.bf16.mxu0 0
    %3302 = vmatpush2.bf16.xpose.msra.mxu0 0
    %3303 = vmatprep.subr.bf16.mxu0 0
    %3304 = vmatpush2.bf16.xpose.msra.mxu0 0
    %3305 = vmatprep.subr.bf16.mxu0 0
    %3306 = vmatpush2.bf16.xpose.msra.mxu0 0
    %3307 = vmatprep.subr.bf16.mxu0 0
    %3308 = vmatpush2.bf16.xpose.msra.mxu0 0
    %3309 = vmatprep.subr.bf16.mxu0 0
    %3310 = vmatpush2.bf16.xpose.msra.mxu0 0
    %3311 = vmatprep.mubr.bf16.mxu0 0
    %3312 = vmatmul.mubr.bf16.gmra.mxu0 %v3274
    %v3313 = vpop.f32.mrf.mxu0
    %v3314 = vadd.f32 0.0, %v3313
    %v3315 = vpop.f32.mrf.mxu0
    %v3316 = vpop.f32.mrf.mxu0
    %v3317 = vpop.f32.mrf.mxu0
    %3318 = vdwg.mxu0
    %3319 = vrot.lane.b32.xlu0 %v277, 104
    %v3320 = vpop.permute.xlu0 %3319
    %3321 = vrot.lane.b32.xlu0 %v277, 72
    %v3322 = vpop.permute.xlu0 %3321
    %v3324 = vsel %vm283, %v3320, 0
    %v3327 = vsel %vm283, %v3322, 0
    %3329 = vmatprep.subr.bf16.mxu0 0
    %3330 = vmatpush1.bf16.xpose.msra.mxu0 0
    %3331 = vmatprep.subr.bf16.mxu0 0
    %3332 = vmatpush1.bf16.xpose.msra.mxu0 0
    %3333 = vmatprep.subr.bf16.mxu0 0
    %3334 = vmatpush1.bf16.xpose.msra.mxu0 0
    %3335 = vmatprep.subr.bf16.mxu0 0
    %3336 = vmatpush1.bf16.xpose.msra.mxu0 0
    %3337 = vmatprep.subr.bf16.mxu0 0
    %3338 = vmatpush1.bf16.xpose.msra.mxu0 0
    %3339 = vmatprep.subr.bf16.mxu0 0
    %3340 = vmatpush1.bf16.xpose.msra.mxu0 0
    %3341 = vmatprep.subr.bf16.mxu0 0
    %3342 = vmatpush1.bf16.xpose.msra.mxu0 0
    %3343 = vmatprep.subr.bf16.mxu0 0
    %3344 = vmatpush1.bf16.xpose.msra.mxu0 %v3327
    %3345 = vmatprep.subr.bf16.mxu0 0
    %3346 = vmatpush2.bf16.xpose.msra.mxu0 0
    %3347 = vmatprep.subr.bf16.mxu0 0
    %3348 = vmatpush2.bf16.xpose.msra.mxu0 0
    %3349 = vmatprep.subr.bf16.mxu0 0
    %3350 = vmatpush2.bf16.xpose.msra.mxu0 0
    %3351 = vmatprep.subr.bf16.mxu0 0
    %3352 = vmatpush2.bf16.xpose.msra.mxu0 0
    %3353 = vmatprep.subr.bf16.mxu0 0
    %3354 = vmatpush2.bf16.xpose.msra.mxu0 0
    %3355 = vmatprep.subr.bf16.mxu0 0
    %3356 = vmatpush2.bf16.xpose.msra.mxu0 0
    %3357 = vmatprep.subr.bf16.mxu0 0
    %3358 = vmatpush2.bf16.xpose.msra.mxu0 0
    %3359 = vmatprep.subr.bf16.mxu0 0
    %3360 = vmatpush2.bf16.xpose.msra.mxu0 0
    %3361 = vmatprep.mubr.bf16.mxu0 0
    %3362 = vmatmul.mubr.bf16.gmra.mxu0 %v3324
    %v3363 = vpop.f32.mrf.mxu0
    %v3364 = vadd.f32 0.0, %v3363
    %v3365 = vpop.f32.mrf.mxu0
    %v3366 = vpop.f32.mrf.mxu0
    %v3367 = vpop.f32.mrf.mxu0
    %3368 = vdwg.mxu0
    %3369 = vrot.lane.b32.xlu0 %v278, 104
    %v3370 = vpop.permute.xlu0 %3369
    %3371 = vrot.lane.b32.xlu0 %v278, 72
    %v3372 = vpop.permute.xlu0 %3371
    %v3374 = vsel %vm283, %v3370, 0
    %v3377 = vsel %vm283, %v3372, 0
    %3379 = vmatprep.subr.bf16.mxu0 0
    %3380 = vmatpush1.bf16.xpose.msra.mxu0 0
    %3381 = vmatprep.subr.bf16.mxu0 0
    %3382 = vmatpush1.bf16.xpose.msra.mxu0 0
    %3383 = vmatprep.subr.bf16.mxu0 0
    %3384 = vmatpush1.bf16.xpose.msra.mxu0 0
    %3385 = vmatprep.subr.bf16.mxu0 0
    %3386 = vmatpush1.bf16.xpose.msra.mxu0 0
    %3387 = vmatprep.subr.bf16.mxu0 0
    %3388 = vmatpush1.bf16.xpose.msra.mxu0 0
    %3389 = vmatprep.subr.bf16.mxu0 0
    %3390 = vmatpush1.bf16.xpose.msra.mxu0 0
    %3391 = vmatprep.subr.bf16.mxu0 0
    %3392 = vmatpush1.bf16.xpose.msra.mxu0 0
    %3393 = vmatprep.subr.bf16.mxu0 0
    %3394 = vmatpush1.bf16.xpose.msra.mxu0 %v3377
    %3395 = vmatprep.subr.bf16.mxu0 0
    %3396 = vmatpush2.bf16.xpose.msra.mxu0 0
    %3397 = vmatprep.subr.bf16.mxu0 0
    %3398 = vmatpush2.bf16.xpose.msra.mxu0 0
    %3399 = vmatprep.subr.bf16.mxu0 0
    %3400 = vmatpush2.bf16.xpose.msra.mxu0 0
    %3401 = vmatprep.subr.bf16.mxu0 0
    %3402 = vmatpush2.bf16.xpose.msra.mxu0 0
    %3403 = vmatprep.subr.bf16.mxu0 0
    %3404 = vmatpush2.bf16.xpose.msra.mxu0 0
    %3405 = vmatprep.subr.bf16.mxu0 0
    %3406 = vmatpush2.bf16.xpose.msra.mxu0 0
    %3407 = vmatprep.subr.bf16.mxu0 0
    %3408 = vmatpush2.bf16.xpose.msra.mxu0 0
    %3409 = vmatprep.subr.bf16.mxu0 0
    %3410 = vmatpush2.bf16.xpose.msra.mxu0 0
    %3411 = vmatprep.mubr.bf16.mxu0 0
    %3412 = vmatmul.mubr.bf16.gmra.mxu0 %v3374
    %v3413 = vpop.f32.mrf.mxu0
    %v3414 = vadd.f32 0.0, %v3413
    %v3415 = vpop.f32.mrf.mxu0
    %v3416 = vpop.f32.mrf.mxu0
    %v3417 = vpop.f32.mrf.mxu0
    %3418 = vdwg.mxu0
    %3419 = vrot.lane.b32.xlu0 %v279, 104
    %v3420 = vpop.permute.xlu0 %3419
    %3421 = vrot.lane.b32.xlu0 %v279, 72
    %v3422 = vpop.permute.xlu0 %3421
    %v3424 = vsel %vm283, %v3420, 0
    %v3427 = vsel %vm283, %v3422, 0
    %3429 = vmatprep.subr.bf16.mxu0 0
    %3430 = vmatpush1.bf16.xpose.msra.mxu0 0
    %3431 = vmatprep.subr.bf16.mxu0 0
    %3432 = vmatpush1.bf16.xpose.msra.mxu0 0
    %3433 = vmatprep.subr.bf16.mxu0 0
    %3434 = vmatpush1.bf16.xpose.msra.mxu0 0
    %3435 = vmatprep.subr.bf16.mxu0 0
    %3436 = vmatpush1.bf16.xpose.msra.mxu0 0
    %3437 = vmatprep.subr.bf16.mxu0 0
    %3438 = vmatpush1.bf16.xpose.msra.mxu0 0
    %3439 = vmatprep.subr.bf16.mxu0 0
    %3440 = vmatpush1.bf16.xpose.msra.mxu0 0
    %3441 = vmatprep.subr.bf16.mxu0 0
    %3442 = vmatpush1.bf16.xpose.msra.mxu0 0
    %3443 = vmatprep.subr.bf16.mxu0 0
    %3444 = vmatpush1.bf16.xpose.msra.mxu0 %v3427
    %3445 = vmatprep.subr.bf16.mxu0 0
    %3446 = vmatpush2.bf16.xpose.msra.mxu0 0
    %3447 = vmatprep.subr.bf16.mxu0 0
    %3448 = vmatpush2.bf16.xpose.msra.mxu0 0
    %3449 = vmatprep.subr.bf16.mxu0 0
    %3450 = vmatpush2.bf16.xpose.msra.mxu0 0
    %3451 = vmatprep.subr.bf16.mxu0 0
    %3452 = vmatpush2.bf16.xpose.msra.mxu0 0
    %3453 = vmatprep.subr.bf16.mxu0 0
    %3454 = vmatpush2.bf16.xpose.msra.mxu0 0
    %3455 = vmatprep.subr.bf16.mxu0 0
    %3456 = vmatpush2.bf16.xpose.msra.mxu0 0
    %3457 = vmatprep.subr.bf16.mxu0 0
    %3458 = vmatpush2.bf16.xpose.msra.mxu0 0
    %3459 = vmatprep.subr.bf16.mxu0 0
    %3460 = vmatpush2.bf16.xpose.msra.mxu0 0
    %3461 = vmatprep.mubr.bf16.mxu0 0
    %3462 = vmatmul.mubr.bf16.gmra.mxu0 %v3424
    %v3463 = vpop.f32.mrf.mxu0
    %v3464 = vadd.f32 0.0, %v3463
    %v3465 = vpop.f32.mrf.mxu0
    %v3466 = vpop.f32.mrf.mxu0
    %v3467 = vpop.f32.mrf.mxu0
    %3468 = vdwg.mxu0
    %v3469 = vsel %vm283, %v3114, -inf
    %3470 = vmax.xlane.f32.xlu0 %v3469
    %v3471 = vpop.xlane.xlu0 %3470
    %v3472 = vsel %vm283, %v3164, -inf
    %3473 = vmax.xlane.f32.xlu0 %v3472
    %v3474 = vpop.xlane.xlu0 %3473
    %v3475 = vsel %vm283, %v3214, -inf
    %3476 = vmax.xlane.f32.xlu0 %v3475
    %v3477 = vpop.xlane.xlu0 %3476
    %v3478 = vsel %vm283, %v3264, -inf
    %3479 = vmax.xlane.f32.xlu0 %v3478
    %v3480 = vpop.xlane.xlu0 %3479
    %v3481 = vsel %vm283, %v3314, -inf
    %3482 = vmax.xlane.f32.xlu0 %v3481
    %v3483 = vpop.xlane.xlu0 %3482
    %v3484 = vsel %vm283, %v3364, -inf
    %3485 = vmax.xlane.f32.xlu0 %v3484
    %v3486 = vpop.xlane.xlu0 %3485
    %v3487 = vsel %vm283, %v3414, -inf
    %3488 = vmax.xlane.f32.xlu0 %v3487
    %v3489 = vpop.xlane.xlu0 %3488
    %v3490 = vsel %vm283, %v3464, -inf
    %3491 = vmax.xlane.f32.xlu0 %v3490
    %v3492 = vpop.xlane.xlu0 %3491
    %v3493 = vsub.f32 %v3114, %v3471
    %v3494 = vsub.f32 %v3164, %v3474
    %v3495 = vsub.f32 %v3214, %v3477
    %v3496 = vsub.f32 %v3264, %v3480
    %v3497 = vsub.f32 %v3314, %v3483
    %v3498 = vsub.f32 %v3364, %v3486
    %v3499 = vsub.f32 %v3414, %v3489
    %v3500 = vsub.f32 %v3464, %v3492
    %v3501 = vmul.f32 %v3493, 1.442695
    %v3502 = vpow.pop %v3501
    %v3503 = vmul.f32 %v3494, 1.442695
    %v3504 = vpow.pop %v3503
    %v3505 = vmul.f32 %v3495, 1.442695
    %v3506 = vpow.pop %v3505
    %v3507 = vmul.f32 %v3496, 1.442695
    %v3508 = vpow.pop %v3507
    %v3509 = vmul.f32 %v3497, 1.442695
    %v3510 = vpow.pop %v3509
    %v3511 = vmul.f32 %v3498, 1.442695
    %v3512 = vpow.pop %v3511
    %v3513 = vmul.f32 %v3499, 1.442695
    %v3514 = vpow.pop %v3513
    %v3515 = vmul.f32 %v3500, 1.442695
    %v3516 = vpow.pop %v3515
    %v3517 = vsel %vm283, %v3502, 0.0
    %3518 = vadd.xlane.f32.xlu0 %v3517
    %v3519 = vpop.xlane.xlu0 %3518
    %v3520 = vsel %vm283, %v3504, 0.0
    %3521 = vadd.xlane.f32.xlu0 %v3520
    %v3522 = vpop.xlane.xlu0 %3521
    %v3523 = vsel %vm283, %v3506, 0.0
    %3524 = vadd.xlane.f32.xlu0 %v3523
    %v3525 = vpop.xlane.xlu0 %3524
    %v3526 = vsel %vm283, %v3508, 0.0
    %3527 = vadd.xlane.f32.xlu0 %v3526
    %v3528 = vpop.xlane.xlu0 %3527
    %v3529 = vsel %vm283, %v3510, 0.0
    %3530 = vadd.xlane.f32.xlu0 %v3529
    %v3531 = vpop.xlane.xlu0 %3530
    %v3532 = vsel %vm283, %v3512, 0.0
    %3533 = vadd.xlane.f32.xlu0 %v3532
    %v3534 = vpop.xlane.xlu0 %3533
    %v3535 = vsel %vm283, %v3514, 0.0
    %3536 = vadd.xlane.f32.xlu0 %v3535
    %v3537 = vpop.xlane.xlu0 %3536
    %v3538 = vsel %vm283, %v3516, 0.0
    %3539 = vadd.xlane.f32.xlu0 %v3538
    %v3540 = vpop.xlane.xlu0 %3539
    %v3541 = vpack.c.bf16 %v3502, %v3502
    %v3542 = vpack.c.bf16 %v3504, %v3504
    %v3543 = vpack.c.bf16 %v3506, %v3506
    %v3544 = vpack.c.bf16 %v3508, %v3508
    %v3545 = vpack.c.bf16 %v3510, %v3510
    %v3546 = vpack.c.bf16 %v3512, %v3512
    %v3547 = vpack.c.bf16 %v3514, %v3514
    %v3548 = vpack.c.bf16 %v3516, %v3516
    %3549 = vrot.lane.b32.xlu0 %v272, 40
    %v3550 = vpop.permute.xlu0 %3549
    %v3552 = vsel %vm283, %v3541, 0
    %v3555 = vsel %vm758, %v3550, 0
    %3557 = vmatprep.subr.bf16.mxu0 0
    %3558 = vmatpush1.bf16.msra.mxu0 0
    %3559 = vmatprep.subr.bf16.mxu0 0
    %3560 = vmatpush1.bf16.msra.mxu0 0
    %3561 = vmatprep.subr.bf16.mxu0 0
    %3562 = vmatpush1.bf16.msra.mxu0 0
    %3563 = vmatprep.subr.bf16.mxu0 0
    %3564 = vmatpush1.bf16.msra.mxu0 0
    %3565 = vmatprep.subr.bf16.mxu0 0
    %3566 = vmatpush1.bf16.msra.mxu0 0
    %3567 = vmatprep.subr.bf16.mxu0 0
    %3568 = vmatpush1.bf16.msra.mxu0 0
    %3569 = vmatprep.subr.bf16.mxu0 0
    %3570 = vmatpush1.bf16.msra.mxu0 0
    %3571 = vmatprep.subr.bf16.mxu0 0
    %3572 = vmatpush1.bf16.msra.mxu0 %v3555
    %3573 = vmatprep.subr.bf16.mxu0 0
    %3574 = vmatpush2.bf16.msra.mxu0 0
    %3575 = vmatprep.subr.bf16.mxu0 0
    %3576 = vmatpush2.bf16.msra.mxu0 0
    %3577 = vmatprep.subr.bf16.mxu0 0
    %3578 = vmatpush2.bf16.msra.mxu0 0
    %3579 = vmatprep.subr.bf16.mxu0 0
    %3580 = vmatpush2.bf16.msra.mxu0 0
    %3581 = vmatprep.subr.bf16.mxu0 0
    %3582 = vmatpush2.bf16.msra.mxu0 0
    %3583 = vmatprep.subr.bf16.mxu0 0
    %3584 = vmatpush2.bf16.msra.mxu0 0
    %3585 = vmatprep.subr.bf16.mxu0 0
    %3586 = vmatpush2.bf16.msra.mxu0 0
    %3587 = vmatprep.subr.bf16.mxu0 0
    %3588 = vmatpush2.bf16.msra.mxu0 0
    %3589 = vmatprep.mubr.bf16.mxu0 0
    %3590 = vmatmul.mubr.bf16.gmra.mxu0 %v3552
    %v3591 = vpop.f32.mrf.mxu0
    %v3592 = vadd.f32 0.0, %v3591
    %v3593 = vpop.f32.mrf.mxu0
    %v3594 = vpop.f32.mrf.mxu0
    %v3595 = vpop.f32.mrf.mxu0
    %3596 = vdwg.mxu0
    %3597 = vrot.lane.b32.xlu0 %v273, 40
    %v3598 = vpop.permute.xlu0 %3597
    %v3600 = vsel %vm283, %v3542, 0
    %v3603 = vsel %vm758, %v3598, 0
    %3605 = vmatprep.subr.bf16.mxu0 0
    %3606 = vmatpush1.bf16.msra.mxu0 0
    %3607 = vmatprep.subr.bf16.mxu0 0
    %3608 = vmatpush1.bf16.msra.mxu0 0
    %3609 = vmatprep.subr.bf16.mxu0 0
    %3610 = vmatpush1.bf16.msra.mxu0 0
    %3611 = vmatprep.subr.bf16.mxu0 0
    %3612 = vmatpush1.bf16.msra.mxu0 0
    %3613 = vmatprep.subr.bf16.mxu0 0
    %3614 = vmatpush1.bf16.msra.mxu0 0
    %3615 = vmatprep.subr.bf16.mxu0 0
    %3616 = vmatpush1.bf16.msra.mxu0 0
    %3617 = vmatprep.subr.bf16.mxu0 0
    %3618 = vmatpush1.bf16.msra.mxu0 0
    %3619 = vmatprep.subr.bf16.mxu0 0
    %3620 = vmatpush1.bf16.msra.mxu0 %v3603
    %3621 = vmatprep.subr.bf16.mxu0 0
    %3622 = vmatpush2.bf16.msra.mxu0 0
    %3623 = vmatprep.subr.bf16.mxu0 0
    %3624 = vmatpush2.bf16.msra.mxu0 0
    %3625 = vmatprep.subr.bf16.mxu0 0
    %3626 = vmatpush2.bf16.msra.mxu0 0
    %3627 = vmatprep.subr.bf16.mxu0 0
    %3628 = vmatpush2.bf16.msra.mxu0 0
    %3629 = vmatprep.subr.bf16.mxu0 0
    %3630 = vmatpush2.bf16.msra.mxu0 0
    %3631 = vmatprep.subr.bf16.mxu0 0
    %3632 = vmatpush2.bf16.msra.mxu0 0
    %3633 = vmatprep.subr.bf16.mxu0 0
    %3634 = vmatpush2.bf16.msra.mxu0 0
    %3635 = vmatprep.subr.bf16.mxu0 0
    %3636 = vmatpush2.bf16.msra.mxu0 0
    %3637 = vmatprep.mubr.bf16.mxu0 0
    %3638 = vmatmul.mubr.bf16.gmra.mxu0 %v3600
    %v3639 = vpop.f32.mrf.mxu0
    %v3640 = vadd.f32 0.0, %v3639
    %v3641 = vpop.f32.mrf.mxu0
    %v3642 = vpop.f32.mrf.mxu0
    %v3643 = vpop.f32.mrf.mxu0
    %3644 = vdwg.mxu0
    %3645 = vrot.lane.b32.xlu0 %v274, 40
    %v3646 = vpop.permute.xlu0 %3645
    %v3648 = vsel %vm283, %v3543, 0
    %v3651 = vsel %vm758, %v3646, 0
    %3653 = vmatprep.subr.bf16.mxu0 0
    %3654 = vmatpush1.bf16.msra.mxu0 0
    %3655 = vmatprep.subr.bf16.mxu0 0
    %3656 = vmatpush1.bf16.msra.mxu0 0
    %3657 = vmatprep.subr.bf16.mxu0 0
    %3658 = vmatpush1.bf16.msra.mxu0 0
    %3659 = vmatprep.subr.bf16.mxu0 0
    %3660 = vmatpush1.bf16.msra.mxu0 0
    %3661 = vmatprep.subr.bf16.mxu0 0
    %3662 = vmatpush1.bf16.msra.mxu0 0
    %3663 = vmatprep.subr.bf16.mxu0 0
    %3664 = vmatpush1.bf16.msra.mxu0 0
    %3665 = vmatprep.subr.bf16.mxu0 0
    %3666 = vmatpush1.bf16.msra.mxu0 0
    %3667 = vmatprep.subr.bf16.mxu0 0
    %3668 = vmatpush1.bf16.msra.mxu0 %v3651
    %3669 = vmatprep.subr.bf16.mxu0 0
    %3670 = vmatpush2.bf16.msra.mxu0 0
    %3671 = vmatprep.subr.bf16.mxu0 0
    %3672 = vmatpush2.bf16.msra.mxu0 0
    %3673 = vmatprep.subr.bf16.mxu0 0
    %3674 = vmatpush2.bf16.msra.mxu0 0
    %3675 = vmatprep.subr.bf16.mxu0 0
    %3676 = vmatpush2.bf16.msra.mxu0 0
    %3677 = vmatprep.subr.bf16.mxu0 0
    %3678 = vmatpush2.bf16.msra.mxu0 0
    %3679 = vmatprep.subr.bf16.mxu0 0
    %3680 = vmatpush2.bf16.msra.mxu0 0
    %3681 = vmatprep.subr.bf16.mxu0 0
    %3682 = vmatpush2.bf16.msra.mxu0 0
    %3683 = vmatprep.subr.bf16.mxu0 0
    %3684 = vmatpush2.bf16.msra.mxu0 0
    %3685 = vmatprep.mubr.bf16.mxu0 0
    %3686 = vmatmul.mubr.bf16.gmra.mxu0 %v3648
    %v3687 = vpop.f32.mrf.mxu0
    %v3688 = vadd.f32 0.0, %v3687
    %v3689 = vpop.f32.mrf.mxu0
    %v3690 = vpop.f32.mrf.mxu0
    %v3691 = vpop.f32.mrf.mxu0
    %3692 = vdwg.mxu0
    %3693 = vrot.lane.b32.xlu0 %v275, 40
    %v3694 = vpop.permute.xlu0 %3693
    %v3696 = vsel %vm283, %v3544, 0
    %v3699 = vsel %vm758, %v3694, 0
    %3701 = vmatprep.subr.bf16.mxu0 0
    %3702 = vmatpush1.bf16.msra.mxu0 0
    %3703 = vmatprep.subr.bf16.mxu0 0
    %3704 = vmatpush1.bf16.msra.mxu0 0
    %3705 = vmatprep.subr.bf16.mxu0 0
    %3706 = vmatpush1.bf16.msra.mxu0 0
    %3707 = vmatprep.subr.bf16.mxu0 0
    %3708 = vmatpush1.bf16.msra.mxu0 0
    %3709 = vmatprep.subr.bf16.mxu0 0
    %3710 = vmatpush1.bf16.msra.mxu0 0
    %3711 = vmatprep.subr.bf16.mxu0 0
    %3712 = vmatpush1.bf16.msra.mxu0 0
    %3713 = vmatprep.subr.bf16.mxu0 0
    %3714 = vmatpush1.bf16.msra.mxu0 0
    %3715 = vmatprep.subr.bf16.mxu0 0
    %3716 = vmatpush1.bf16.msra.mxu0 %v3699
    %3717 = vmatprep.subr.bf16.mxu0 0
    %3718 = vmatpush2.bf16.msra.mxu0 0
    %3719 = vmatprep.subr.bf16.mxu0 0
    %3720 = vmatpush2.bf16.msra.mxu0 0
    %3721 = vmatprep.subr.bf16.mxu0 0
    %3722 = vmatpush2.bf16.msra.mxu0 0
    %3723 = vmatprep.subr.bf16.mxu0 0
    %3724 = vmatpush2.bf16.msra.mxu0 0
    %3725 = vmatprep.subr.bf16.mxu0 0
    %3726 = vmatpush2.bf16.msra.mxu0 0
    %3727 = vmatprep.subr.bf16.mxu0 0
    %3728 = vmatpush2.bf16.msra.mxu0 0
    %3729 = vmatprep.subr.bf16.mxu0 0
    %3730 = vmatpush2.bf16.msra.mxu0 0
    %3731 = vmatprep.subr.bf16.mxu0 0
    %3732 = vmatpush2.bf16.msra.mxu0 0
    %3733 = vmatprep.mubr.bf16.mxu0 0
    %3734 = vmatmul.mubr.bf16.gmra.mxu0 %v3696
    %v3735 = vpop.f32.mrf.mxu0
    %v3736 = vadd.f32 0.0, %v3735
    %v3737 = vpop.f32.mrf.mxu0
    %v3738 = vpop.f32.mrf.mxu0
    %v3739 = vpop.f32.mrf.mxu0
    %3740 = vdwg.mxu0
    %3741 = vrot.lane.b32.xlu0 %v276, 40
    %v3742 = vpop.permute.xlu0 %3741
    %v3744 = vsel %vm283, %v3545, 0
    %v3747 = vsel %vm758, %v3742, 0
    %3749 = vmatprep.subr.bf16.mxu0 0
    %3750 = vmatpush1.bf16.msra.mxu0 0
    %3751 = vmatprep.subr.bf16.mxu0 0
    %3752 = vmatpush1.bf16.msra.mxu0 0
    %3753 = vmatprep.subr.bf16.mxu0 0
    %3754 = vmatpush1.bf16.msra.mxu0 0
    %3755 = vmatprep.subr.bf16.mxu0 0
    %3756 = vmatpush1.bf16.msra.mxu0 0
    %3757 = vmatprep.subr.bf16.mxu0 0
    %3758 = vmatpush1.bf16.msra.mxu0 0
    %3759 = vmatprep.subr.bf16.mxu0 0
    %3760 = vmatpush1.bf16.msra.mxu0 0
    %3761 = vmatprep.subr.bf16.mxu0 0
    %3762 = vmatpush1.bf16.msra.mxu0 0
    %3763 = vmatprep.subr.bf16.mxu0 0
    %3764 = vmatpush1.bf16.msra.mxu0 %v3747
    %3765 = vmatprep.subr.bf16.mxu0 0
    %3766 = vmatpush2.bf16.msra.mxu0 0
    %3767 = vmatprep.subr.bf16.mxu0 0
    %3768 = vmatpush2.bf16.msra.mxu0 0
    %3769 = vmatprep.subr.bf16.mxu0 0
    %3770 = vmatpush2.bf16.msra.mxu0 0
    %3771 = vmatprep.subr.bf16.mxu0 0
    %3772 = vmatpush2.bf16.msra.mxu0 0
    %3773 = vmatprep.subr.bf16.mxu0 0
    %3774 = vmatpush2.bf16.msra.mxu0 0
    %3775 = vmatprep.subr.bf16.mxu0 0
    %3776 = vmatpush2.bf16.msra.mxu0 0
    %3777 = vmatprep.subr.bf16.mxu0 0
    %3778 = vmatpush2.bf16.msra.mxu0 0
    %3779 = vmatprep.subr.bf16.mxu0 0
    %3780 = vmatpush2.bf16.msra.mxu0 0
    %3781 = vmatprep.mubr.bf16.mxu0 0
    %3782 = vmatmul.mubr.bf16.gmra.mxu0 %v3744
    %v3783 = vpop.f32.mrf.mxu0
    %v3784 = vadd.f32 0.0, %v3783
    %v3785 = vpop.f32.mrf.mxu0
    %v3786 = vpop.f32.mrf.mxu0
    %v3787 = vpop.f32.mrf.mxu0
    %3788 = vdwg.mxu0
    %3789 = vrot.lane.b32.xlu0 %v277, 40
    %v3790 = vpop.permute.xlu0 %3789
    %v3792 = vsel %vm283, %v3546, 0
    %v3795 = vsel %vm758, %v3790, 0
    %3797 = vmatprep.subr.bf16.mxu0 0
    %3798 = vmatpush1.bf16.msra.mxu0 0
    %3799 = vmatprep.subr.bf16.mxu0 0
    %3800 = vmatpush1.bf16.msra.mxu0 0
    %3801 = vmatprep.subr.bf16.mxu0 0
    %3802 = vmatpush1.bf16.msra.mxu0 0
    %3803 = vmatprep.subr.bf16.mxu0 0
    %3804 = vmatpush1.bf16.msra.mxu0 0
    %3805 = vmatprep.subr.bf16.mxu0 0
    %3806 = vmatpush1.bf16.msra.mxu0 0
    %3807 = vmatprep.subr.bf16.mxu0 0
    %3808 = vmatpush1.bf16.msra.mxu0 0
    %3809 = vmatprep.subr.bf16.mxu0 0
    %3810 = vmatpush1.bf16.msra.mxu0 0
    %3811 = vmatprep.subr.bf16.mxu0 0
    %3812 = vmatpush1.bf16.msra.mxu0 %v3795
    %3813 = vmatprep.subr.bf16.mxu0 0
    %3814 = vmatpush2.bf16.msra.mxu0 0
    %3815 = vmatprep.subr.bf16.mxu0 0
    %3816 = vmatpush2.bf16.msra.mxu0 0
    %3817 = vmatprep.subr.bf16.mxu0 0
    %3818 = vmatpush2.bf16.msra.mxu0 0
    %3819 = vmatprep.subr.bf16.mxu0 0
    %3820 = vmatpush2.bf16.msra.mxu0 0
    %3821 = vmatprep.subr.bf16.mxu0 0
    %3822 = vmatpush2.bf16.msra.mxu0 0
    %3823 = vmatprep.subr.bf16.mxu0 0
    %3824 = vmatpush2.bf16.msra.mxu0 0
    %3825 = vmatprep.subr.bf16.mxu0 0
    %3826 = vmatpush2.bf16.msra.mxu0 0
    %3827 = vmatprep.subr.bf16.mxu0 0
    %3828 = vmatpush2.bf16.msra.mxu0 0
    %3829 = vmatprep.mubr.bf16.mxu0 0
    %3830 = vmatmul.mubr.bf16.gmra.mxu0 %v3792
    %v3831 = vpop.f32.mrf.mxu0
    %v3832 = vadd.f32 0.0, %v3831
    %v3833 = vpop.f32.mrf.mxu0
    %v3834 = vpop.f32.mrf.mxu0
    %v3835 = vpop.f32.mrf.mxu0
    %3836 = vdwg.mxu0
    %3837 = vrot.lane.b32.xlu0 %v278, 40
    %v3838 = vpop.permute.xlu0 %3837
    %v3840 = vsel %vm283, %v3547, 0
    %v3843 = vsel %vm758, %v3838, 0
    %3845 = vmatprep.subr.bf16.mxu0 0
    %3846 = vmatpush1.bf16.msra.mxu0 0
    %3847 = vmatprep.subr.bf16.mxu0 0
    %3848 = vmatpush1.bf16.msra.mxu0 0
    %3849 = vmatprep.subr.bf16.mxu0 0
    %3850 = vmatpush1.bf16.msra.mxu0 0
    %3851 = vmatprep.subr.bf16.mxu0 0
    %3852 = vmatpush1.bf16.msra.mxu0 0
    %3853 = vmatprep.subr.bf16.mxu0 0
    %3854 = vmatpush1.bf16.msra.mxu0 0
    %3855 = vmatprep.subr.bf16.mxu0 0
    %3856 = vmatpush1.bf16.msra.mxu0 0
    %3857 = vmatprep.subr.bf16.mxu0 0
    %3858 = vmatpush1.bf16.msra.mxu0 0
    %3859 = vmatprep.subr.bf16.mxu0 0
    %3860 = vmatpush1.bf16.msra.mxu0 %v3843
    %3861 = vmatprep.subr.bf16.mxu0 0
    %3862 = vmatpush2.bf16.msra.mxu0 0
    %3863 = vmatprep.subr.bf16.mxu0 0
    %3864 = vmatpush2.bf16.msra.mxu0 0
    %3865 = vmatprep.subr.bf16.mxu0 0
    %3866 = vmatpush2.bf16.msra.mxu0 0
    %3867 = vmatprep.subr.bf16.mxu0 0
    %3868 = vmatpush2.bf16.msra.mxu0 0
    %3869 = vmatprep.subr.bf16.mxu0 0
    %3870 = vmatpush2.bf16.msra.mxu0 0
    %3871 = vmatprep.subr.bf16.mxu0 0
    %3872 = vmatpush2.bf16.msra.mxu0 0
    %3873 = vmatprep.subr.bf16.mxu0 0
    %3874 = vmatpush2.bf16.msra.mxu0 0
    %3875 = vmatprep.subr.bf16.mxu0 0
    %3876 = vmatpush2.bf16.msra.mxu0 0
    %3877 = vmatprep.mubr.bf16.mxu0 0
    %3878 = vmatmul.mubr.bf16.gmra.mxu0 %v3840
    %v3879 = vpop.f32.mrf.mxu0
    %v3880 = vadd.f32 0.0, %v3879
    %v3881 = vpop.f32.mrf.mxu0
    %v3882 = vpop.f32.mrf.mxu0
    %v3883 = vpop.f32.mrf.mxu0
    %3884 = vdwg.mxu0
    %3885 = vrot.lane.b32.xlu0 %v279, 40
    %v3886 = vpop.permute.xlu0 %3885
    %v3888 = vsel %vm283, %v3548, 0
    %v3891 = vsel %vm758, %v3886, 0
    %3893 = vmatprep.subr.bf16.mxu0 0
    %3894 = vmatpush1.bf16.msra.mxu0 0
    %3895 = vmatprep.subr.bf16.mxu0 0
    %3896 = vmatpush1.bf16.msra.mxu0 0
    %3897 = vmatprep.subr.bf16.mxu0 0
    %3898 = vmatpush1.bf16.msra.mxu0 0
    %3899 = vmatprep.subr.bf16.mxu0 0
    %3900 = vmatpush1.bf16.msra.mxu0 0
    %3901 = vmatprep.subr.bf16.mxu0 0
    %3902 = vmatpush1.bf16.msra.mxu0 0
    %3903 = vmatprep.subr.bf16.mxu0 0
    %3904 = vmatpush1.bf16.msra.mxu0 0
    %3905 = vmatprep.subr.bf16.mxu0 0
    %3906 = vmatpush1.bf16.msra.mxu0 0
    %3907 = vmatprep.subr.bf16.mxu0 0
    %3908 = vmatpush1.bf16.msra.mxu0 %v3891
    %3909 = vmatprep.subr.bf16.mxu0 0
    %3910 = vmatpush2.bf16.msra.mxu0 0
    %3911 = vmatprep.subr.bf16.mxu0 0
    %3912 = vmatpush2.bf16.msra.mxu0 0
    %3913 = vmatprep.subr.bf16.mxu0 0
    %3914 = vmatpush2.bf16.msra.mxu0 0
    %3915 = vmatprep.subr.bf16.mxu0 0
    %3916 = vmatpush2.bf16.msra.mxu0 0
    %3917 = vmatprep.subr.bf16.mxu0 0
    %3918 = vmatpush2.bf16.msra.mxu0 0
    %3919 = vmatprep.subr.bf16.mxu0 0
    %3920 = vmatpush2.bf16.msra.mxu0 0
    %3921 = vmatprep.subr.bf16.mxu0 0
    %3922 = vmatpush2.bf16.msra.mxu0 0
    %3923 = vmatprep.subr.bf16.mxu0 0
    %3924 = vmatpush2.bf16.msra.mxu0 0
    %3925 = vmatprep.mubr.bf16.mxu0 0
    %3926 = vmatmul.mubr.bf16.gmra.mxu0 %v3888
    %v3927 = vpop.f32.mrf.mxu0
    %v3928 = vadd.f32 0.0, %v3927
    %v3929 = vpop.f32.mrf.mxu0
    %v3930 = vpop.f32.mrf.mxu0
    %v3931 = vpop.f32.mrf.mxu0
    %3932 = vdwg.mxu0
    %v3933 = vrcp.pop %v3519
    %v3934 = vrcp.pop %v3522
    %v3935 = vrcp.pop %v3525
    %v3936 = vrcp.pop %v3528
    %v3937 = vrcp.pop %v3531
    %v3938 = vrcp.pop %v3534
    %v3939 = vrcp.pop %v3537
    %v3940 = vrcp.pop %v3540
    %v3941 = vmul.f32 %v3592, %v3933
    %v3942 = vmul.f32 %v3640, %v3934
    %v3943 = vmul.f32 %v3688, %v3935
    %v3944 = vmul.f32 %v3736, %v3936
    %v3945 = vmul.f32 %v3784, %v3937
    %v3946 = vmul.f32 %v3832, %v3938
    %v3947 = vmul.f32 %v3880, %v3939
    %v3948 = vmul.f32 %v3928, %v3940
    %v3949 = vpack.c.bf16 %v3942, %v3941
    %v3950 = vpack.c.bf16 %v3944, %v3943
    %v3951 = vpack.c.bf16 %v3946, %v3945
    %v3952 = vpack.c.bf16 %v3948, %v3947
    %v3957 = vunpack.c.l.b16 %v3949
    %v3958 = vunpack.c.h.b16 %v3949
    %v3959 = vunpack.c.l.b16 %v3950
    %v3960 = vunpack.c.h.b16 %v3950
    %v3961 = vunpack.c.l.b16 %v3951
    %v3962 = vunpack.c.h.b16 %v3951
    %v3963 = vunpack.c.l.b16 %v3952
    %v3964 = vunpack.c.h.b16 %v3952
    %v3965 = vpack.c.b16 %v3957, %v3957
    %v3966 = vpack.c.b16 %v3958, %v3958
    %v3967 = vpack.c.b16 %v3959, %v3959
    %v3968 = vpack.c.b16 %v3960, %v3960
    %v3969 = vpack.c.b16 %v3961, %v3961
    %v3970 = vpack.c.b16 %v3962, %v3962
    %v3971 = vpack.c.b16 %v3963, %v3963
    %v3972 = vpack.c.b16 %v3964, %v3964
    %3973 = vrot.lane.b32.xlu0 %v3965, 24
    %v3974 = vpop.permute.xlu0 %3973
    %3975 = vrot.lane.b32.xlu0 %v3966, 24
    %v3976 = vpop.permute.xlu0 %3975
    %3977 = vrot.lane.b32.xlu0 %v3967, 24
    %v3978 = vpop.permute.xlu0 %3977
    %3979 = vrot.lane.b32.xlu0 %v3968, 24
    %v3980 = vpop.permute.xlu0 %3979
    %3981 = vrot.lane.b32.xlu0 %v3969, 24
    %v3982 = vpop.permute.xlu0 %3981
    %3983 = vrot.lane.b32.xlu0 %v3970, 24
    %v3984 = vpop.permute.xlu0 %3983
    %3985 = vrot.lane.b32.xlu0 %v3971, 24
    %v3986 = vpop.permute.xlu0 %3985
    %3987 = vrot.lane.b32.xlu0 %v3972, 24
    %v3988 = vpop.permute.xlu0 %3987
    %vm3997 = vcmask 257216
    %3998 = vst.msk [vmem:[#allocation2] sm:$0xf] %vm3997, %v3974
    %3999 = vst.msk [vmem:[#allocation2 + $0x4] sm:$0xf] %vm3997, %v3976
    %4000 = vst.msk [vmem:[#allocation2 + $0x8] sm:$0xf] %vm3997, %v3978
    %4001 = vst.msk [vmem:[#allocation2 + $0xc] sm:$0xf] %vm3997, %v3980
    %4002 = vst.msk [vmem:[#allocation2 + $0x10] sm:$0xf] %vm3997, %v3982
    %4003 = vst.msk [vmem:[#allocation2 + $0x14] sm:$0xf] %vm3997, %v3984
    %4004 = vst.msk [vmem:[#allocation2 + $0x18] sm:$0xf] %vm3997, %v3986
    %4005 = vst.msk [vmem:[#allocation2 + $0x1c] sm:$0xf] %vm3997, %v3988
    %v4006 = vld [vmem:[#allocation2] sm:$0xf]
    %v4007 = vld [vmem:[#allocation2 + $0x4] sm:$0xf]
    %v4008 = vld [vmem:[#allocation2 + $0x8] sm:$0xf]
    %v4009 = vld [vmem:[#allocation2 + $0xc] sm:$0xf]
    %v4010 = vld [vmem:[#allocation2 + $0x10] sm:$0xf]
    %v4011 = vld [vmem:[#allocation2 + $0x14] sm:$0xf]
    %v4012 = vld [vmem:[#allocation2 + $0x18] sm:$0xf]
    %v4013 = vld [vmem:[#allocation2 + $0x1c] sm:$0xf]
    %v4014 = vld [vmem:[#allocation3] sm:$0xf]
    %v4015 = vld [vmem:[#allocation3 + $0x4] sm:$0xf]
    %v4016 = vld [vmem:[#allocation3 + $0x8] sm:$0xf]
    %v4017 = vld [vmem:[#allocation3 + $0xc] sm:$0xf]
    %v4018 = vld [vmem:[%s4] sm:$0x1]
    %v4020 = vlaneseq
    %v4021 = vshrl.u32 %v4020, 7
    %v4022 = vsub.s32 0, %v4021
    %v4023 = vrot.slane %v4018, %v4022
    %v4033 = vunpack.c.l.b16 %v4006
    %v4034 = vunpack.c.l.b16 %v4007
    %v4035 = vunpack.c.l.b16 %v4008
    %v4036 = vunpack.c.l.b16 %v4009
    %v4037 = vunpack.c.l.b16 %v4010
    %v4038 = vunpack.c.l.b16 %v4011
    %v4039 = vunpack.c.l.b16 %v4012
    %v4040 = vunpack.c.l.b16 %v4013
    %v4041 = vpack.c.b16 %v4034, %v4033
    %v4042 = vpack.c.b16 %v4036, %v4035
    %v4043 = vpack.c.b16 %v4038, %v4037
    %v4044 = vpack.c.b16 %v4040, %v4039
    %v4049 = vunpack.c.l.b16 %v4014
    %v4050 = vunpack.c.l.b16 %v4015
    %v4051 = vunpack.c.l.b16 %v4016
    %v4052 = vunpack.c.l.b16 %v4017
    %v4053 = vpack.c.b16 %v4050, %v4049
    %v4054 = vpack.c.b16 %v4052, %v4051
    %v4058 = vsel %vm194, %v4041, 0
    %v4061 = vsel %vm194, %v4042, 0
    %v4064 = vsel %vm194, %v4043, 0
    %v4067 = vsel %vm194, %v4044, 0
    %4069 = vmatprep.subr.bf16.mxu0 0
    %4070 = vmatpush1.bf16.msra.mxu0 0
    %4071 = vmatprep.subr.bf16.mxu0 0
    %4072 = vmatpush1.bf16.msra.mxu0 0
    %4073 = vmatprep.subr.bf16.mxu0 0
    %4074 = vmatpush1.bf16.msra.mxu0 0
    %4075 = vmatprep.subr.bf16.mxu0 0
    %4076 = vmatpush1.bf16.msra.mxu0 0
    %4077 = vmatprep.subr.bf16.mxu0 0
    %4078 = vmatpush1.bf16.msra.mxu0 0
    %4079 = vmatprep.subr.bf16.mxu0 0
    %4080 = vmatpush1.bf16.msra.mxu0 0
    %4081 = vmatprep.subr.bf16.mxu0 0
    %4082 = vmatpush1.bf16.msra.mxu0 %v4054
    %4083 = vmatprep.subr.bf16.mxu0 0
    %4084 = vmatpush1.bf16.msra.mxu0 %v4053
    %4085 = vmatprep.subr.bf16.mxu0 0
    %4086 = vmatpush2.bf16.msra.mxu0 0
    %4087 = vmatprep.subr.bf16.mxu0 0
    %4088 = vmatpush2.bf16.msra.mxu0 0
    %4089 = vmatprep.subr.bf16.mxu0 0
    %4090 = vmatpush2.bf16.msra.mxu0 0
    %4091 = vmatprep.subr.bf16.mxu0 0
    %4092 = vmatpush2.bf16.msra.mxu0 0
    %4093 = vmatprep.subr.bf16.mxu0 0
    %4094 = vmatpush2.bf16.msra.mxu0 0
    %4095 = vmatprep.subr.bf16.mxu0 0
    %4096 = vmatpush2.bf16.msra.mxu0 0
    %4097 = vmatprep.subr.bf16.mxu0 0
    %4098 = vmatpush2.bf16.msra.mxu0 0
    %4099 = vmatprep.subr.bf16.mxu0 0
    %4100 = vmatpush2.bf16.msra.mxu0 0
    %4101 = vmatprep.mubr.bf16.mxu0 0
    %4102 = vmatmul.mubr.bf16.gmra.mxu0 %v4058
    %v4103 = vpop.f32.mrf.mxu0
    %v4104 = vadd.f32 %v4023, %v4103
    %v4105 = vpop.f32.mrf.mxu0
    %v4106 = vpop.f32.mrf.mxu0
    %v4107 = vadd.f32 %v4023, %v4106
    %v4108 = vpop.f32.mrf.mxu0
    %4109 = vmatprep.mubr.bf16.mxu0 0
    %4110 = vmatmul.mubr.bf16.gmra.mxu0 %v4061
    %v4111 = vpop.f32.mrf.mxu0
    %v4112 = vadd.f32 %v4023, %v4111
    %v4113 = vpop.f32.mrf.mxu0
    %v4114 = vpop.f32.mrf.mxu0
    %v4115 = vadd.f32 %v4023, %v4114
    %v4116 = vpop.f32.mrf.mxu0
    %4117 = vmatprep.mubr.bf16.mxu0 0
    %4118 = vmatmul.mubr.bf16.gmra.mxu0 %v4064
    %v4119 = vpop.f32.mrf.mxu0
    %v4120 = vadd.f32 %v4023, %v4119
    %v4121 = vpop.f32.mrf.mxu0
    %v4122 = vpop.f32.mrf.mxu0
    %v4123 = vadd.f32 %v4023, %v4122
    %v4124 = vpop.f32.mrf.mxu0
    %4125 = vmatprep.mubr.bf16.mxu0 0
    %4126 = vmatmul.mubr.bf16.gmra.mxu0 %v4067
    %v4127 = vpop.f32.mrf.mxu0
    %v4128 = vadd.f32 %v4023, %v4127
    %v4129 = vpop.f32.mrf.mxu0
    %v4130 = vpop.f32.mrf.mxu0
    %v4131 = vadd.f32 %v4023, %v4130
    %v4132 = vpop.f32.mrf.mxu0
    %4133 = vdwg.mxu0
    %4134 = vst.msk [vmem:[#allocation6] sm:$0xff] %vm100, %v4104
    %4135 = vst.msk [vmem:[#allocation6 + $0x8] sm:$0xff] %vm100, %v4107
    %4136 = vst.msk [vmem:[#allocation6 + $0x10] sm:$0xff] %vm100, %v4112
    %4137 = vst.msk [vmem:[#allocation6 + $0x18] sm:$0xff] %vm100, %v4115
    %4138 = vst.msk [vmem:[#allocation6 + $0x20] sm:$0xff] %vm100, %v4120
    %4139 = vst.msk [vmem:[#allocation6 + $0x28] sm:$0xff] %vm100, %v4123
    %4140 = vst.msk [vmem:[#allocation6 + $0x30] sm:$0xff] %vm100, %v4128
    %4141 = vst.msk [vmem:[#allocation6 + $0x38] sm:$0xff] %vm100, %v4131
    // Predicated region
    $region26: #{tpu_custom_call.1} parent=1 // pred_check
      _
    $region27: #{tpu_custom_call.1} parent=1 // pred_check_branch
      %4143 = sbr.rel (0) target = $region29
    $region28: #{tpu_custom_call.1} parent=1 // pred_region
      %s4145 = ssub.s32 1024, 1024
      %4146 = vsyncadd [#allocation5], %s4145
      %s4147 = sshll.u32 [#allocation6], 4
      %s4148 = int_to_ptr.vmem [resolvable:$true] %s4147
      %4153 = dma.vmem_to_hbm [thread:$0]  %s4148, 1024, %s5, [#allocation5], 128, 128, 8
    $region29: #{tpu_custom_call.1} parent=1 // pred_fallthru
      _
    // Predicated region
    $region30: #{tpu_custom_call.1} parent=1 // pred_check
      _
    $region31: #{tpu_custom_call.1} parent=1 // pred_check_branch
      %4155 = sbr.rel (0) target = $region33
    $region32: #{tpu_custom_call.1} parent=1 // pred_region
      %4156 = dma.done [#allocation5], 1024
    $region33: #{tpu_custom_call.1} parent=1 // pred_fallthru
      _
    %4157 = vsyncpa [#allocation4], 1
    %4158 = vsyncpa [#allocation5], 1

</llo_original>
